<compile_context>
chip_gen: v6e
topology: v6e:2x2x1
jax: 0.10.0
libtpu: 0.0.40
codegen_flags: <defaults>
</compile_context>

<pallas_src>
import functools

import jax
import jax.numpy as jnp
from jax.experimental import pallas as pl
from jax.experimental.pallas import tpu as pltpu

LANES = 128


def _round_up(v, m):
    return (v + m - 1) // m * m


# --------------------------------------------------------------------- Pallas kernel
def _fused_conv_bn_kernel(x_ref, w_ref, g_ref, b_ref, *rest,
                          act, m_valid, tm, has_residual, eps):
    """One conv layer, 2-phase grid (j: channel tile, p: phase, i: row tile).

    phase 0: y = X_tile @ W_tile (bf16 in, f32 acc) -> VMEM scratch; per-channel sum / sum-sq.
    phase 1: z = y * scale + bias (+ residual) (+ ReLU), streamed out as bf16 (tm, tn) tiles.
    """
    if has_residual:
        r_ref, o_ref, y_ref, sum_ref, ssq_ref, sc_ref, bi_ref = rest
    else:
        o_ref, y_ref, sum_ref, ssq_ref, sc_ref, bi_ref = rest

    p = pl.program_id(1)
    i = pl.program_id(2)
    chunk = tm if tm <= 128 else 128     # tm is either <=128 (mult of 8) or a mult of 128

    @pl.when(p == 0)
    def _matmul_and_stats():
        @pl.when(i == 0)
        def _():
            sum_ref[...] = jnp.zeros_like(sum_ref)
            ssq_ref[...] = jnp.zeros_like(ssq_ref)

        off = pl.multiple_of(i * tm, tm)
        y = jnp.dot(x_ref[...], w_ref[...], preferred_element_type=jnp.float32)
        y_ref[pl.ds(off, tm), :] = y      # raw conv output stays in VMEM (never hits HBM)

        # Per-channel stats read back from the scratch in <=128-row chunks (bounds live vregs).
        s = jnp.zeros_like(sum_ref)
        q = jnp.zeros_like(ssq_ref)
        for c in range(tm // chunk):
            blk = y_ref[pl.ds(off + c * chunk, chunk), :]
            s = s + jnp.sum(blk, axis=0, keepdims=True)
            q = q + jnp.sum(blk * blk, axis=0, keepdims=True)
        sum_ref[...] += s
        ssq_ref[...] += q

    @pl.when(p == 1)
    def _finalize():
        @pl.when(i == 0)
        def _():
            inv_m = 1.0 / float(m_valid)  # zero-padded rows contribute 0 to both sums
            mean = sum_ref[...] * inv_m
            # NOTE: single-pass E[x^2]-E[x]^2 in f32 (clamped); fine at these magnitudes.
            var = jnp.maximum(ssq_ref[...] * inv_m - mean * mean, 0.0)
            scale = g_ref[...] * jax.lax.rsqrt(var + eps)
            sc_ref[...] = scale
            bi_ref[...] = b_ref[...] - mean * scale

        off = pl.multiple_of(i * tm, tm)
        z = y_ref[pl.ds(off, tm), :] * sc_ref[...] + bi_ref[...]
        if has_residual:
            z = z + r_ref[...].astype(jnp.float32)
        if act == "relu":
            z = jnp.maximum(z, 0.0)
        o_ref[...] = z.astype(o_ref.dtype)


def fused_conv_bn_act(x, w, gamma, beta, *, act="relu", residual=None, eps=1e-5):
    """act( BN(x @ w) [+ residual] ) with training-mode batch statistics.

    x: (M, K) activations, w: (K, N) weights, gamma/beta: (N,), residual: (M, N) or None.
    K and N must be 128-aligned (lane-dense).  Inputs are consumed as bf16, output is bf16."""
    M, K = x.shape
    N = w.shape[1]

    # Row-tile choice: prefer a multiple of 128 that divides M (no padding / no masked stores).
    if M % 256 == 0:
        tm = 256
    elif M % 128 == 0:
        tm = 128
    elif M < 128:
        tm = _round_up(M, 8)
    else:
        tm = 128
    Mp = _round_up(M, tm)
    n_mt = Mp // tm

    # Channel-tile choice: 256 feeds the 256x256 MXUs (v6e/v7x) when the width allows.
    tn = 256 if N % 256 == 0 else 128
    n_nt = N // tn

    xb = x.astype(jnp.bfloat16)
    if Mp != M:
        xb = jnp.pad(xb, ((0, Mp - M), (0, 0)))
    wb = w.astype(jnp.bfloat16)
    g2 = gamma.reshape(1, N).astype(jnp.float32)
    b2 = beta.reshape(1, N).astype(jnp.float32)

    inputs = [xb, wb, g2, b2]
    in_specs = [
        # X tiles streamed during phase 0; pinned to block 0 during phase 1 (no redundant DMA).
        pl.BlockSpec((tm, K), lambda j, p, i: (i * (1 - p), 0)),
        pl.BlockSpec((K, tn), lambda j, p, i: (0, j)),     # weight channel-tile, VMEM-resident
        pl.BlockSpec((1, tn), lambda j, p, i: (0, j)),
        pl.BlockSpec((1, tn), lambda j, p, i: (0, j)),
    ]
    has_res = residual is not None
    if has_res:
        rb = residual.astype(jnp.bfloat16)
        if rb.shape[0] != Mp:
            rb = jnp.pad(rb, ((0, Mp - rb.shape[0]), (0, 0)))
        inputs.append(rb)
        # Residual streamed as (tm, tn) tiles during phase 1 only.
        in_specs.append(pl.BlockSpec((tm, tn), lambda j, p, i: (i * p, j)))

    # Output streamed as (tm, tn) bf16 tiles in phase 1; held (unwritten) at block 0 in phase 0.
    out_spec = pl.BlockSpec((tm, tn), lambda j, p, i: (i * p, j))

    # Actual resident footprint (+ headroom): Y scratch + double-buffered weight / X / out / res.
    vmem_bytes = (Mp * tn * 4
                  + 2 * K * tn * 2
                  + 2 * tm * K * 2
                  + 2 * tm * tn * 2 * (2 if has_res else 1)
                  + 8 * tn * 4)
    vmem_limit = int(min(max(2 * vmem_bytes, 16 << 20), 100 << 20))

    kernel = functools.partial(_fused_conv_bn_kernel, act=act, m_valid=M, tm=tm,
                               has_residual=has_res, eps=eps)
    # TODO(synk): add a K-tiling grid axis (and a streamed-stats 2-pass variant) for very wide
    # in_planes / very large M, where (tm, K) inputs or the (Mp, tn) scratch outgrow VMEM.
    out = pl.pallas_call(
        kernel,
        out_shape=jax.ShapeDtypeStruct((Mp, N), jnp.bfloat16),
        grid_spec=pltpu.PrefetchScalarGridSpec(
            num_scalar_prefetch=0,
            grid=(n_nt, 2, n_mt),
            in_specs=in_specs,
            out_specs=out_spec,
            scratch_shapes=[
                pltpu.VMEM((Mp, tn), jnp.float32),   # raw conv output (needed for BN stats)
                pltpu.VMEM((1, tn), jnp.float32),    # per-channel sum
                pltpu.VMEM((1, tn), jnp.float32),    # per-channel sum of squares
                pltpu.VMEM((1, tn), jnp.float32),    # BN scale
                pltpu.VMEM((1, tn), jnp.float32),    # BN bias
            ],
        ),
        compiler_params=pltpu.CompilerParams(
            dimension_semantics=("parallel", "arbitrary", "arbitrary"),
            vmem_limit_bytes=vmem_limit),
    )(*inputs)
    return out[:M] if Mp != M else out


# ------------------------------------------------------------------------- conv glue
def _im2col_3x3(x_nhwc, stride):
    """3x3 conv, padding=1, on bf16.  Returns X of shape (B*Ho*Wo, 9*C); column index
    = (di*3 + dj)*C + ci — the small weight is reordered instead of the activations."""
    # TODO(synk): fold the 3x3 taps into the kernel as a K grid axis over shifted windows to
    # avoid materializing this 9x slab in HBM (dominant avoidable traffic at real sizes).
    B, H, W, C = x_nhwc.shape
    xp = jnp.pad(x_nhwc, ((0, 0), (1, 1), (1, 1), (0, 0)))
    Ho = (H + 2 - 3) // stride + 1
    Wo = (W + 2 - 3) // stride + 1
    cols = []
    for di in range(3):
        for dj in range(3):
            hi = di + stride * (Ho - 1) + 1
            wi = dj + stride * (Wo - 1) + 1
            cols.append(xp[:, di:hi:stride, dj:wi:stride, :])
    P = jnp.stack(cols, axis=3)                     # (B, Ho, Wo, 9, C)
    return P.reshape(B * Ho * Wo, 9 * C), Ho, Wo


def _pad1(v, n):
    return jnp.pad(v.astype(jnp.float32), (0, n - v.shape[0]))


def _w1x1_mat(w, k_pad, n_pad):
    """(Cout, Cin, 1, 1) -> zero-padded (k_pad, n_pad)."""
    cout, cin = w.shape[0], w.shape[1]
    m = w.reshape(cout, cin).T
    return jnp.pad(m.astype(jnp.float32), ((0, k_pad - cin), (0, n_pad - cout)))


def _w3x3_mat(w, cin_pad, n_pad):
    """(Cout, Cin, 3, 3) -> (9*cin_pad, n_pad); row order (di*3+dj)*cin_pad + ci."""
    cout, cin = w.shape[0], w.shape[1]
    m = jnp.transpose(w.astype(jnp.float32), (2, 3, 1, 0))       # (3, 3, Cin, Cout)
    m = jnp.pad(m, ((0, 0), (0, 0), (0, cin_pad - cin), (0, n_pad - cout)))
    return m.reshape(9 * cin_pad, n_pad)


# ---------------------------------------------------------------------- full forward
def bottleneck_forward(x_nchw, params, *, stride):
    expansion = 4
    w1, w2, w3 = params["w1"], params["w2"], params["w3"]
    planes, in_planes = w1.shape[0], w1.shape[1]
    cout = expansion * planes

    cin_p = _round_up(in_planes, LANES)
    mid_p = _round_up(planes, LANES)
    out_p = _round_up(cout, LANES)

    x = jnp.transpose(x_nchw, (0, 2, 3, 1))                           # NHWC
    B, H, W, _ = x.shape
    # channel dim padded once to a 128-lane-dense bf16 slab; stays padded + bf16 between layers
    xpad = jnp.pad(x.astype(jnp.bfloat16), ((0, 0), (0, 0), (0, 0), (0, cin_p - in_planes)))

    # conv1 (1x1) + bn1 + relu  -- one fused pallas_call
    X1 = xpad.reshape(B * H * W, cin_p)
    out1 = fused_conv_bn_act(X1, _w1x1_mat(w1, cin_p, mid_p),
                             _pad1(params["g1"], mid_p), _pad1(params["b1"], mid_p),
                             act="relu")
    out1 = out1.reshape(B, H, W, mid_p)                               # bf16, channel-padded

    # conv2 (3x3, stride, pad=1) + bn2 + relu  -- fused (bf16 im2col slab)
    X2, Ho, Wo = _im2col_3x3(out1, stride)
    out2 = fused_conv_bn_act(X2, _w3x3_mat(w2, mid_p, mid_p),
                             _pad1(params["g2"], mid_p), _pad1(params["b2"], mid_p),
                             act="relu")

    # shortcut branch
    # TODO(synk): fuse the projection 1x1-conv + BN into the conv3 launch (shared M tiles) to
    # save one serial launch and the HBM round trip of `sc`.
    has_proj = (stride != 1) or (in_planes != cout)
    if has_proj:
        xs = xpad[:, ::stride, ::stride, :].reshape(B * Ho * Wo, cin_p)
        sc = fused_conv_bn_act(xs, _w1x1_mat(params["ws"], cin_p, out_p),
                               _pad1(params["gs"], out_p), _pad1(params["bs"], out_p),
                               act="none")
    else:
        sc = xpad.reshape(B * H * W, cin_p)          # identity (cin_p == out_p here)

    # conv3 (1x1) + bn3 + residual add + final relu  -- all fused in one pallas_call
    out = fused_conv_bn_act(out2, _w1x1_mat(w3, mid_p, out_p),
                            _pad1(params["g3"], out_p), _pad1(params["b3"], out_p),
                            act="relu", residual=sc)

    out = out[:, :cout].reshape(B, Ho, Wo, cout).astype(jnp.float32)
    return jnp.transpose(out, (0, 3, 1, 2))          # back to NCHW


def init_params(key, in_planes, planes, stride, expansion=4):
    cout = expansion * planes
    keys = jax.random.split(key, 4)
    params = {
        "w1": 0.1 * jax.random.normal(keys[0], (planes, in_planes, 1, 1), jnp.float32),
        "w2": 0.1 * jax.random.normal(keys[1], (planes, planes, 3, 3), jnp.float32),
        "w3": 0.1 * jax.random.normal(keys[2], (cout, planes, 1, 1), jnp.float32),
        "g1": jnp.ones((planes,), jnp.float32), "b1": jnp.zeros((planes,), jnp.float32),
        "g2": jnp.ones((planes,), jnp.float32), "b2": jnp.zeros((planes,), jnp.float32),
        "g3": jnp.ones((cout,), jnp.float32),   "b3": jnp.zeros((cout,), jnp.float32),
    }
    if stride != 1 or in_planes != cout:
        params["ws"] = 0.1 * jax.random.normal(keys[3], (cout, in_planes, 1, 1), jnp.float32)
        params["gs"] = jnp.ones((cout,), jnp.float32)
        params["bs"] = jnp.zeros((cout,), jnp.float32)
    return params


if __name__ == "__main__":
    key = jax.random.PRNGKey(0)
    k_x, k_p = jax.random.split(key)

    B, in_planes, H, W = 2, 32, 16, 16
    planes, stride = 16, 2          # projection shortcut (stride != 1, in_planes != 4*planes)

    x = jax.random.normal(k_x, (B, in_planes, H, W), dtype=jnp.float32)   # NCHW like PyTorch
    params = init_params(k_p, in_planes, planes, stride)

    fwd = jax.jit(functools.partial(bottleneck_forward, stride=stride))
    out = jax.block_until_ready(fwd(x, params))

    Ho = (H + 2 - 3) // stride + 1
    assert out.shape == (B, 4 * planes, Ho, Ho), out.shape
    assert bool(jnp.all(jnp.isfinite(out)))
    assert bool(jnp.all(out >= 0.0))    # final ReLU
    print("KERNEL_OK")
</pallas_src>

<mosaic_0001>
module attributes {stable_mosaic.version = 11 : i64} {
  func.func @_fused_conv_bn_kernel(%arg0: i32, %arg1: i32, %arg2: i32, %arg3: memref<256x128xbf16, #tpu.memory_space<vmem>>, %arg4: memref<128x128xbf16, #tpu.memory_space<vmem>>, %arg5: memref<1x128xf32, #tpu.memory_space<vmem>>, %arg6: memref<1x128xf32, #tpu.memory_space<vmem>>, %arg7: memref<256x128xbf16, #tpu.memory_space<vmem>>, %arg8: memref<512x128xf32, #tpu.memory_space<vmem>>, %arg9: memref<1x128xf32, #tpu.memory_space<vmem>>, %arg10: memref<1x128xf32, #tpu.memory_space<vmem>>, %arg11: memref<1x128xf32, #tpu.memory_space<vmem>>, %arg12: memref<1x128xf32, #tpu.memory_space<vmem>>) attributes {dimension_semantics = [#tpu.dimension_semantics<parallel>, #tpu.dimension_semantics<arbitrary>, #tpu.dimension_semantics<arbitrary>], iteration_bounds = array<i64: 1, 2, 2>, scalar_prefetch = 0 : i64, scratch_operands = 5 : i64, tpu.core_type = #tpu.core_type<tc>, window_params = [{transform_indices = @transform_0, window_bounds = array<i64: 256, 128>}, {transform_indices = @transform_1, window_bounds = array<i64: 128, 128>}, {transform_indices = @transform_2, window_bounds = array<i64: 1, 128>}, {transform_indices = @transform_3, window_bounds = array<i64: 1, 128>}, {transform_indices = @transform_4, window_bounds = array<i64: 256, 128>}]} {
    %c0_i32 = arith.constant 0 : i32
    %0 = arith.cmpi eq, %arg1, %c0_i32 : i32
    %1 = arith.extui %0 : i1 to i32
    %c0_i32_0 = arith.constant 0 : i32
    %2 = arith.cmpi ne, %1, %c0_i32_0 : i32
    scf.if %2 {
      %c0_i32_2 = arith.constant 0 : i32
      %6 = arith.cmpi eq, %arg2, %c0_i32_2 : i32
      %7 = arith.extui %6 : i1 to i32
      %c0_i32_3 = arith.constant 0 : i32
      %8 = arith.cmpi ne, %7, %c0_i32_3 : i32
      scf.if %8 {
        %cst_25 = arith.constant 0.000000e+00 : f32
        %44 = vector.broadcast %cst_25 : f32 to vector<1x128xf32>
        %c0_26 = arith.constant 0 : index
        %c0_27 = arith.constant 0 : index
        %45 = vector.load %arg9[%c0_26, %c0_27] : memref<1x128xf32, #tpu.memory_space<vmem>>, vector<1x128xf32>
        tpu.vector_store %arg9[%c0_26, %c0_27], %44 {strides = array<i32>} : memref<1x128xf32, #tpu.memory_space<vmem>>, vector<1x128xf32>,
        %cst_28 = arith.constant 0.000000e+00 : f32
        %46 = vector.broadcast %cst_28 : f32 to vector<1x128xf32>
        %c0_29 = arith.constant 0 : index
        %c0_30 = arith.constant 0 : index
        %47 = vector.load %arg10[%c0_29, %c0_30] : memref<1x128xf32, #tpu.memory_space<vmem>>, vector<1x128xf32>
        tpu.vector_store %arg10[%c0_29, %c0_30], %46 {strides = array<i32>} : memref<1x128xf32, #tpu.memory_space<vmem>>, vector<1x128xf32>,
      } else {
      }
      %c256_i32 = arith.constant 256 : i32
      %9 = arith.muli %arg2, %c256_i32 : i32
      %10 = tpu.assume_multiple %9, 256 : i32
      %c0 = arith.constant 0 : index
      %c0_4 = arith.constant 0 : index
      %11 = vector.load %arg3[%c0, %c0_4] : memref<256x128xbf16, #tpu.memory_space<vmem>>, vector<256x128xbf16>
      %c0_5 = arith.constant 0 : index
      %c0_6 = arith.constant 0 : index
      %12 = vector.load %arg4[%c0_5, %c0_6] : memref<128x128xbf16, #tpu.memory_space<vmem>>, vector<128x128xbf16>
      %cst = arith.constant dense<0.000000e+00> : vector<256x128xf32>
      %13 = tpu.matmul %11, %12, %cst {dimension_numbers = #tpu.dot_dimension_numbers<[1], [0], [0], [1], [0, 0, 1, 1], [], []>} : vector<256x128xbf16>, vector<128x128xbf16>, vector<256x128xf32> -> vector<256x128xf32>
      %14 = arith.index_cast %10 : i32 to index
      %c0_7 = arith.constant 0 : index
      %15 = vector.load %arg8[%14, %c0_7] : memref<512x128xf32, #tpu.memory_space<vmem>>, vector<256x128xf32>
      tpu.vector_store %arg8[%14, %c0_7], %13 {strides = array<i32>} : memref<512x128xf32, #tpu.memory_space<vmem>>, vector<256x128xf32>,
      %cst_8 = arith.constant 0.000000e+00 : f32
      %16 = vector.broadcast %cst_8 : f32 to vector<1x128xf32>
      %cst_9 = arith.constant 0.000000e+00 : f32
      %17 = vector.broadcast %cst_9 : f32 to vector<1x128xf32>
      %c0_i32_10 = arith.constant 0 : i32
      %18 = arith.addi %10, %c0_i32_10 : i32
      %19 = arith.index_cast %18 : i32 to index
      %c0_11 = arith.constant 0 : index
      %20 = vector.load %arg8[%19, %c0_11] : memref<512x128xf32, #tpu.memory_space<vmem>>, vector<128x128xf32>
      %cst_12 = arith.constant dense<0.000000e+00> : vector<128xf32>
      %21 = vector.multi_reduction <add>, %20, %cst_12 [0] : vector<128x128xf32> to vector<128xf32>
      %22 = vector.shape_cast %21 : vector<128xf32> to vector<1x128xf32>
      %23 = arith.addf %16, %22 : vector<1x128xf32>
      %24 = arith.mulf %20, %20 : vector<128x128xf32>
      %cst_13 = arith.constant dense<0.000000e+00> : vector<128xf32>
      %25 = vector.multi_reduction <add>, %24, %cst_13 [0] : vector<128x128xf32> to vector<128xf32>
      %26 = vector.shape_cast %25 : vector<128xf32> to vector<1x128xf32>
      %27 = arith.addf %17, %26 : vector<1x128xf32>
      %c128_i32 = arith.constant 128 : i32
      %28 = arith.addi %10, %c128_i32 : i32
      %29 = arith.index_cast %28 : i32 to index
      %c0_14 = arith.constant 0 : index
      %30 = vector.load %arg8[%29, %c0_14] : memref<512x128xf32, #tpu.memory_space<vmem>>, vector<128x128xf32>
      %cst_15 = arith.constant dense<0.000000e+00> : vector<128xf32>
      %31 = vector.multi_reduction <add>, %30, %cst_15 [0] : vector<128x128xf32> to vector<128xf32>
      %32 = vector.shape_cast %31 : vector<128xf32> to vector<1x128xf32>
      %33 = arith.addf %23, %32 : vector<1x128xf32>
      %34 = arith.mulf %30, %30 : vector<128x128xf32>
      %cst_16 = arith.constant dense<0.000000e+00> : vector<128xf32>
      %35 = vector.multi_reduction <add>, %34, %cst_16 [0] : vector<128x128xf32> to vector<128xf32>
      %36 = vector.shape_cast %35 : vector<128xf32> to vector<1x128xf32>
      %37 = arith.addf %27, %36 : vector<1x128xf32>
      %c0_17 = arith.constant 0 : index
      %c0_18 = arith.constant 0 : index
      %38 = vector.load %arg9[%c0_17, %c0_18] : memref<1x128xf32, #tpu.memory_space<vmem>>, vector<1x128xf32>
      %39 = arith.addf %38, %33 : vector<1x128xf32>
      %c0_19 = arith.constant 0 : index
      %c0_20 = arith.constant 0 : index
      %40 = vector.load %arg9[%c0_19, %c0_20] : memref<1x128xf32, #tpu.memory_space<vmem>>, vector<1x128xf32>
      tpu.vector_store %arg9[%c0_19, %c0_20], %39 {strides = array<i32>} : memref<1x128xf32, #tpu.memory_space<vmem>>, vector<1x128xf32>,
      %c0_21 = arith.constant 0 : index
      %c0_22 = arith.constant 0 : index
      %41 = vector.load %arg10[%c0_21, %c0_22] : memref<1x128xf32, #tpu.memory_space<vmem>>, vector<1x128xf32>
      %42 = arith.addf %41, %37 : vector<1x128xf32>
      %c0_23 = arith.constant 0 : index
      %c0_24 = arith.constant 0 : index
      %43 = vector.load %arg10[%c0_23, %c0_24] : memref<1x128xf32, #tpu.memory_space<vmem>>, vector<1x128xf32>
      tpu.vector_store %arg10[%c0_23, %c0_24], %42 {strides = array<i32>} : memref<1x128xf32, #tpu.memory_space<vmem>>, vector<1x128xf32>,
    } else {
    }
    %c1_i32 = arith.constant 1 : i32
    %3 = arith.cmpi eq, %arg1, %c1_i32 : i32
    %4 = arith.extui %3 : i1 to i32
    %c0_i32_1 = arith.constant 0 : i32
    %5 = arith.cmpi ne, %4, %c0_i32_1 : i32
    scf.if %5 {
      %c0_i32_2 = arith.constant 0 : i32
      %6 = arith.cmpi eq, %arg2, %c0_i32_2 : i32
      %7 = arith.extui %6 : i1 to i32
      %c0_i32_3 = arith.constant 0 : i32
      %8 = arith.cmpi ne, %7, %c0_i32_3 : i32
      scf.if %8 {
        %c0_10 = arith.constant 0 : index
        %c0_11 = arith.constant 0 : index
        %23 = vector.load %arg9[%c0_10, %c0_11] : memref<1x128xf32, #tpu.memory_space<vmem>>, vector<1x128xf32>
        %cst_12 = arith.constant 0.001953125 : f32
        %24 = vector.broadcast %cst_12 : f32 to vector<1x128xf32>
        %25 = arith.mulf %23, %24 : vector<1x128xf32>
        %c0_13 = arith.constant 0 : index
        %c0_14 = arith.constant 0 : index
        %26 = vector.load %arg10[%c0_13, %c0_14] : memref<1x128xf32, #tpu.memory_space<vmem>>, vector<1x128xf32>
        %cst_15 = arith.constant 0.001953125 : f32
        %27 = vector.broadcast %cst_15 : f32 to vector<1x128xf32>
        %28 = arith.mulf %26, %27 : vector<1x128xf32>
        %29 = arith.mulf %25, %25 : vector<1x128xf32>
        %30 = arith.subf %28, %29 : vector<1x128xf32>
        %cst_16 = arith.constant 0.000000e+00 : f32
        %31 = vector.broadcast %cst_16 : f32 to vector<1x128xf32>
        %32 = arith.maximumf %30, %31 : vector<1x128xf32>
        %c0_17 = arith.constant 0 : index
        %c0_18 = arith.constant 0 : index
        %33 = vector.load %arg5[%c0_17, %c0_18] : memref<1x128xf32, #tpu.memory_space<vmem>>, vector<1x128xf32>
        %cst_19 = arith.constant 9.99999974E-6 : f32
        %34 = vector.broadcast %cst_19 : f32 to vector<1x128xf32>
        %35 = arith.addf %32, %34 : vector<1x128xf32>
        %36 = math.rsqrt %35 : vector<1x128xf32>
        %37 = arith.mulf %33, %36 : vector<1x128xf32>
        %c0_20 = arith.constant 0 : index
        %c0_21 = arith.constant 0 : index
        %38 = vector.load %arg11[%c0_20, %c0_21] : memref<1x128xf32, #tpu.memory_space<vmem>>, vector<1x128xf32>
        tpu.vector_store %arg11[%c0_20, %c0_21], %37 {strides = array<i32>} : memref<1x128xf32, #tpu.memory_space<vmem>>, vector<1x128xf32>,
        %c0_22 = arith.constant 0 : index
        %c0_23 = arith.constant 0 : index
        %39 = vector.load %arg6[%c0_22, %c0_23] : memref<1x128xf32, #tpu.memory_space<vmem>>, vector<1x128xf32>
        %40 = arith.mulf %25, %37 : vector<1x128xf32>
        %41 = arith.subf %39, %40 : vector<1x128xf32>
        %c0_24 = arith.constant 0 : index
        %c0_25 = arith.constant 0 : index
        %42 = vector.load %arg12[%c0_24, %c0_25] : memref<1x128xf32, #tpu.memory_space<vmem>>, vector<1x128xf32>
        tpu.vector_store %arg12[%c0_24, %c0_25], %41 {strides = array<i32>} : memref<1x128xf32, #tpu.memory_space<vmem>>, vector<1x128xf32>,
      } else {
      }
      %c256_i32 = arith.constant 256 : i32
      %9 = arith.muli %arg2, %c256_i32 : i32
      %10 = tpu.assume_multiple %9, 256 : i32
      %11 = arith.index_cast %10 : i32 to index
      %c0 = arith.constant 0 : index
      %12 = vector.load %arg8[%11, %c0] : memref<512x128xf32, #tpu.memory_space<vmem>>, vector<256x128xf32>
      %c0_4 = arith.constant 0 : index
      %c0_5 = arith.constant 0 : index
      %13 = vector.load %arg11[%c0_4, %c0_5] : memref<1x128xf32, #tpu.memory_space<vmem>>, vector<1x128xf32>
      %14 = vector.broadcast %13 : vector<1x128xf32> to vector<256x128xf32>
      %15 = arith.mulf %12, %14 : vector<256x128xf32>
      %c0_6 = arith.constant 0 : index
      %c0_7 = arith.constant 0 : index
      %16 = vector.load %arg12[%c0_6, %c0_7] : memref<1x128xf32, #tpu.memory_space<vmem>>, vector<1x128xf32>
      %17 = vector.broadcast %16 : vector<1x128xf32> to vector<256x128xf32>
      %18 = arith.addf %15, %17 : vector<256x128xf32>
      %cst = arith.constant 0.000000e+00 : f32
      %19 = vector.broadcast %cst : f32 to vector<256x128xf32>
      %20 = arith.maximumf %18, %19 : vector<256x128xf32>
      %21 = arith.truncf %20 : vector<256x128xf32> to vector<256x128xbf16>
      %c0_8 = arith.constant 0 : index
      %c0_9 = arith.constant 0 : index
      %22 = vector.load %arg7[%c0_8, %c0_9] : memref<256x128xbf16, #tpu.memory_space<vmem>>, vector<256x128xbf16>
      tpu.vector_store %arg7[%c0_8, %c0_9], %21 {strides = array<i32>} : memref<256x128xbf16, #tpu.memory_space<vmem>>, vector<256x128xbf16>,
    } else {
    }
    return
  }
  func.func @transform_0(%arg0: i32, %arg1: i32, %arg2: i32) -> (i32, i32) {
    %c1_i32 = arith.constant 1 : i32
    %0 = arith.subi %c1_i32, %arg1 : i32
    %1 = arith.muli %arg2, %0 : i32
    %c0_i32 = arith.constant 0 : i32
    %c0_i32_0 = arith.constant 0 : i32
    return %1, %c0_i32 : i32, i32
  }
  func.func @transform_1(%arg0: i32, %arg1: i32, %arg2: i32) -> (i32, i32) {
    %c0_i32 = arith.constant 0 : i32
    %c0_i32_0 = arith.constant 0 : i32
    return %c0_i32, %arg0 : i32, i32
  }
  func.func @transform_2(%arg0: i32, %arg1: i32, %arg2: i32) -> (i32, i32) {
    %c0_i32 = arith.constant 0 : i32
    %c0_i32_0 = arith.constant 0 : i32
    return %c0_i32, %arg0 : i32, i32
  }
  func.func @transform_3(%arg0: i32, %arg1: i32, %arg2: i32) -> (i32, i32) {
    %c0_i32 = arith.constant 0 : i32
    %c0_i32_0 = arith.constant 0 : i32
    return %c0_i32, %arg0 : i32, i32
  }
  func.func @transform_4(%arg0: i32, %arg1: i32, %arg2: i32) -> (i32, i32) {
    %0 = arith.muli %arg2, %arg1 : i32
    %c0_i32 = arith.constant 0 : i32
    return %0, %arg0 : i32, i32
  }
}

module attributes {stable_mosaic.version = 11 : i64} {
  func.func @_fused_conv_bn_kernel(%arg0: i32, %arg1: i32, %arg2: i32, %arg3: memref<128x1152xbf16, #tpu.memory_space<vmem>>, %arg4: memref<1152x128xbf16, #tpu.memory_space<vmem>>, %arg5: memref<1x128xf32, #tpu.memory_space<vmem>>, %arg6: memref<1x128xf32, #tpu.memory_space<vmem>>, %arg7: memref<128x128xbf16, #tpu.memory_space<vmem>>, %arg8: memref<128x128xf32, #tpu.memory_space<vmem>>, %arg9: memref<1x128xf32, #tpu.memory_space<vmem>>, %arg10: memref<1x128xf32, #tpu.memory_space<vmem>>, %arg11: memref<1x128xf32, #tpu.memory_space<vmem>>, %arg12: memref<1x128xf32, #tpu.memory_space<vmem>>) attributes {dimension_semantics = [#tpu.dimension_semantics<parallel>, #tpu.dimension_semantics<arbitrary>, #tpu.dimension_semantics<arbitrary>], iteration_bounds = array<i64: 1, 2, 1>, scalar_prefetch = 0 : i64, scratch_operands = 5 : i64, tpu.core_type = #tpu.core_type<tc>, window_params = [{transform_indices = @transform_0, window_bounds = array<i64: 128, 1152>}, {transform_indices = @transform_1, window_bounds = array<i64: 1152, 128>}, {transform_indices = @transform_2, window_bounds = array<i64: 1, 128>}, {transform_indices = @transform_3, window_bounds = array<i64: 1, 128>}, {transform_indices = @transform_4, window_bounds = array<i64: 128, 128>}]} {
    %c0_i32 = arith.constant 0 : i32
    %0 = arith.cmpi eq, %arg1, %c0_i32 : i32
    %1 = arith.extui %0 : i1 to i32
    %c0_i32_0 = arith.constant 0 : i32
    %2 = arith.cmpi ne, %1, %c0_i32_0 : i32
    scf.if %2 {
      %c0_i32_2 = arith.constant 0 : i32
      %6 = arith.cmpi eq, %arg2, %c0_i32_2 : i32
      %7 = arith.extui %6 : i1 to i32
      %c0_i32_3 = arith.constant 0 : i32
      %8 = arith.cmpi ne, %7, %c0_i32_3 : i32
      scf.if %8 {
        %cst_22 = arith.constant 0.000000e+00 : f32
        %34 = vector.broadcast %cst_22 : f32 to vector<1x128xf32>
        %c0_23 = arith.constant 0 : index
        %c0_24 = arith.constant 0 : index
        %35 = vector.load %arg9[%c0_23, %c0_24] : memref<1x128xf32, #tpu.memory_space<vmem>>, vector<1x128xf32>
        tpu.vector_store %arg9[%c0_23, %c0_24], %34 {strides = array<i32>} : memref<1x128xf32, #tpu.memory_space<vmem>>, vector<1x128xf32>,
        %cst_25 = arith.constant 0.000000e+00 : f32
        %36 = vector.broadcast %cst_25 : f32 to vector<1x128xf32>
        %c0_26 = arith.constant 0 : index
        %c0_27 = arith.constant 0 : index
        %37 = vector.load %arg10[%c0_26, %c0_27] : memref<1x128xf32, #tpu.memory_space<vmem>>, vector<1x128xf32>
        tpu.vector_store %arg10[%c0_26, %c0_27], %36 {strides = array<i32>} : memref<1x128xf32, #tpu.memory_space<vmem>>, vector<1x128xf32>,
      } else {
      }
      %c128_i32 = arith.constant 128 : i32
      %9 = arith.muli %arg2, %c128_i32 : i32
      %10 = tpu.assume_multiple %9, 128 : i32
      %c0 = arith.constant 0 : index
      %c0_4 = arith.constant 0 : index
      %11 = vector.load %arg3[%c0, %c0_4] : memref<128x1152xbf16, #tpu.memory_space<vmem>>, vector<128x1152xbf16>
      %c0_5 = arith.constant 0 : index
      %c0_6 = arith.constant 0 : index
      %12 = vector.load %arg4[%c0_5, %c0_6] : memref<1152x128xbf16, #tpu.memory_space<vmem>>, vector<1152x128xbf16>
      %cst = arith.constant dense<0.000000e+00> : vector<128x128xf32>
      %13 = tpu.matmul %11, %12, %cst {dimension_numbers = #tpu.dot_dimension_numbers<[1], [0], [0], [1], [0, 0, 1, 1], [], []>} : vector<128x1152xbf16>, vector<1152x128xbf16>, vector<128x128xf32> -> vector<128x128xf32>
      %14 = arith.index_cast %10 : i32 to index
      %c0_7 = arith.constant 0 : index
      %15 = vector.load %arg8[%14, %c0_7] : memref<128x128xf32, #tpu.memory_space<vmem>>, vector<128x128xf32>
      tpu.vector_store %arg8[%14, %c0_7], %13 {strides = array<i32>} : memref<128x128xf32, #tpu.memory_space<vmem>>, vector<128x128xf32>,
      %cst_8 = arith.constant 0.000000e+00 : f32
      %16 = vector.broadcast %cst_8 : f32 to vector<1x128xf32>
      %cst_9 = arith.constant 0.000000e+00 : f32
      %17 = vector.broadcast %cst_9 : f32 to vector<1x128xf32>
      %c0_i32_10 = arith.constant 0 : i32
      %18 = arith.addi %10, %c0_i32_10 : i32
      %19 = arith.index_cast %18 : i32 to index
      %c0_11 = arith.constant 0 : index
      %20 = vector.load %arg8[%19, %c0_11] : memref<128x128xf32, #tpu.memory_space<vmem>>, vector<128x128xf32>
      %cst_12 = arith.constant dense<0.000000e+00> : vector<128xf32>
      %21 = vector.multi_reduction <add>, %20, %cst_12 [0] : vector<128x128xf32> to vector<128xf32>
      %22 = vector.shape_cast %21 : vector<128xf32> to vector<1x128xf32>
      %23 = arith.addf %16, %22 : vector<1x128xf32>
      %24 = arith.mulf %20, %20 : vector<128x128xf32>
      %cst_13 = arith.constant dense<0.000000e+00> : vector<128xf32>
      %25 = vector.multi_reduction <add>, %24, %cst_13 [0] : vector<128x128xf32> to vector<128xf32>
      %26 = vector.shape_cast %25 : vector<128xf32> to vector<1x128xf32>
      %27 = arith.addf %17, %26 : vector<1x128xf32>
      %c0_14 = arith.constant 0 : index
      %c0_15 = arith.constant 0 : index
      %28 = vector.load %arg9[%c0_14, %c0_15] : memref<1x128xf32, #tpu.memory_space<vmem>>, vector<1x128xf32>
      %29 = arith.addf %28, %23 : vector<1x128xf32>
      %c0_16 = arith.constant 0 : index
      %c0_17 = arith.constant 0 : index
      %30 = vector.load %arg9[%c0_16, %c0_17] : memref<1x128xf32, #tpu.memory_space<vmem>>, vector<1x128xf32>
      tpu.vector_store %arg9[%c0_16, %c0_17], %29 {strides = array<i32>} : memref<1x128xf32, #tpu.memory_space<vmem>>, vector<1x128xf32>,
      %c0_18 = arith.constant 0 : index
      %c0_19 = arith.constant 0 : index
      %31 = vector.load %arg10[%c0_18, %c0_19] : memref<1x128xf32, #tpu.memory_space<vmem>>, vector<1x128xf32>
      %32 = arith.addf %31, %27 : vector<1x128xf32>
      %c0_20 = arith.constant 0 : index
      %c0_21 = arith.constant 0 : index
      %33 = vector.load %arg10[%c0_20, %c0_21] : memref<1x128xf32, #tpu.memory_space<vmem>>, vector<1x128xf32>
      tpu.vector_store %arg10[%c0_20, %c0_21], %32 {strides = array<i32>} : memref<1x128xf32, #tpu.memory_space<vmem>>, vector<1x128xf32>,
    } else {
    }
    %c1_i32 = arith.constant 1 : i32
    %3 = arith.cmpi eq, %arg1, %c1_i32 : i32
    %4 = arith.extui %3 : i1 to i32
    %c0_i32_1 = arith.constant 0 : i32
    %5 = arith.cmpi ne, %4, %c0_i32_1 : i32
    scf.if %5 {
      %c0_i32_2 = arith.constant 0 : i32
      %6 = arith.cmpi eq, %arg2, %c0_i32_2 : i32
      %7 = arith.extui %6 : i1 to i32
      %c0_i32_3 = arith.constant 0 : i32
      %8 = arith.cmpi ne, %7, %c0_i32_3 : i32
      scf.if %8 {
        %c0_10 = arith.constant 0 : index
        %c0_11 = arith.constant 0 : index
        %23 = vector.load %arg9[%c0_10, %c0_11] : memref<1x128xf32, #tpu.memory_space<vmem>>, vector<1x128xf32>
        %cst_12 = arith.constant 7.812500e-03 : f32
        %24 = vector.broadcast %cst_12 : f32 to vector<1x128xf32>
        %25 = arith.mulf %23, %24 : vector<1x128xf32>
        %c0_13 = arith.constant 0 : index
        %c0_14 = arith.constant 0 : index
        %26 = vector.load %arg10[%c0_13, %c0_14] : memref<1x128xf32, #tpu.memory_space<vmem>>, vector<1x128xf32>
        %cst_15 = arith.constant 7.812500e-03 : f32
        %27 = vector.broadcast %cst_15 : f32 to vector<1x128xf32>
        %28 = arith.mulf %26, %27 : vector<1x128xf32>
        %29 = arith.mulf %25, %25 : vector<1x128xf32>
        %30 = arith.subf %28, %29 : vector<1x128xf32>
        %cst_16 = arith.constant 0.000000e+00 : f32
        %31 = vector.broadcast %cst_16 : f32 to vector<1x128xf32>
        %32 = arith.maximumf %30, %31 : vector<1x128xf32>
        %c0_17 = arith.constant 0 : index
        %c0_18 = arith.constant 0 : index
        %33 = vector.load %arg5[%c0_17, %c0_18] : memref<1x128xf32, #tpu.memory_space<vmem>>, vector<1x128xf32>
        %cst_19 = arith.constant 9.99999974E-6 : f32
        %34 = vector.broadcast %cst_19 : f32 to vector<1x128xf32>
        %35 = arith.addf %32, %34 : vector<1x128xf32>
        %36 = math.rsqrt %35 : vector<1x128xf32>
        %37 = arith.mulf %33, %36 : vector<1x128xf32>
        %c0_20 = arith.constant 0 : index
        %c0_21 = arith.constant 0 : index
        %38 = vector.load %arg11[%c0_20, %c0_21] : memref<1x128xf32, #tpu.memory_space<vmem>>, vector<1x128xf32>
        tpu.vector_store %arg11[%c0_20, %c0_21], %37 {strides = array<i32>} : memref<1x128xf32, #tpu.memory_space<vmem>>, vector<1x128xf32>,
        %c0_22 = arith.constant 0 : index
        %c0_23 = arith.constant 0 : index
        %39 = vector.load %arg6[%c0_22, %c0_23] : memref<1x128xf32, #tpu.memory_space<vmem>>, vector<1x128xf32>
        %40 = arith.mulf %25, %37 : vector<1x128xf32>
        %41 = arith.subf %39, %40 : vector<1x128xf32>
        %c0_24 = arith.constant 0 : index
        %c0_25 = arith.constant 0 : index
        %42 = vector.load %arg12[%c0_24, %c0_25] : memref<1x128xf32, #tpu.memory_space<vmem>>, vector<1x128xf32>
        tpu.vector_store %arg12[%c0_24, %c0_25], %41 {strides = array<i32>} : memref<1x128xf32, #tpu.memory_space<vmem>>, vector<1x128xf32>,
      } else {
      }
      %c128_i32 = arith.constant 128 : i32
      %9 = arith.muli %arg2, %c128_i32 : i32
      %10 = tpu.assume_multiple %9, 128 : i32
      %11 = arith.index_cast %10 : i32 to index
      %c0 = arith.constant 0 : index
      %12 = vector.load %arg8[%11, %c0] : memref<128x128xf32, #tpu.memory_space<vmem>>, vector<128x128xf32>
      %c0_4 = arith.constant 0 : index
      %c0_5 = arith.constant 0 : index
      %13 = vector.load %arg11[%c0_4, %c0_5] : memref<1x128xf32, #tpu.memory_space<vmem>>, vector<1x128xf32>
      %14 = vector.broadcast %13 : vector<1x128xf32> to vector<128x128xf32>
      %15 = arith.mulf %12, %14 : vector<128x128xf32>
      %c0_6 = arith.constant 0 : index
      %c0_7 = arith.constant 0 : index
      %16 = vector.load %arg12[%c0_6, %c0_7] : memref<1x128xf32, #tpu.memory_space<vmem>>, vector<1x128xf32>
      %17 = vector.broadcast %16 : vector<1x128xf32> to vector<128x128xf32>
      %18 = arith.addf %15, %17 : vector<128x128xf32>
      %cst = arith.constant 0.000000e+00 : f32
      %19 = vector.broadcast %cst : f32 to vector<128x128xf32>
      %20 = arith.maximumf %18, %19 : vector<128x128xf32>
      %21 = arith.truncf %20 : vector<128x128xf32> to vector<128x128xbf16>
      %c0_8 = arith.constant 0 : index
      %c0_9 = arith.constant 0 : index
      %22 = vector.load %arg7[%c0_8, %c0_9] : memref<128x128xbf16, #tpu.memory_space<vmem>>, vector<128x128xbf16>
      tpu.vector_store %arg7[%c0_8, %c0_9], %21 {strides = array<i32>} : memref<128x128xbf16, #tpu.memory_space<vmem>>, vector<128x128xbf16>,
    } else {
    }
    return
  }
  func.func @transform_0(%arg0: i32, %arg1: i32, %arg2: i32) -> (i32, i32) {
    %c1_i32 = arith.constant 1 : i32
    %0 = arith.subi %c1_i32, %arg1 : i32
    %1 = arith.muli %arg2, %0 : i32
    %c0_i32 = arith.constant 0 : i32
    %c0_i32_0 = arith.constant 0 : i32
    return %1, %c0_i32 : i32, i32
  }
  func.func @transform_1(%arg0: i32, %arg1: i32, %arg2: i32) -> (i32, i32) {
    %c0_i32 = arith.constant 0 : i32
    %c0_i32_0 = arith.constant 0 : i32
    return %c0_i32, %arg0 : i32, i32
  }
  func.func @transform_2(%arg0: i32, %arg1: i32, %arg2: i32) -> (i32, i32) {
    %c0_i32 = arith.constant 0 : i32
    %c0_i32_0 = arith.constant 0 : i32
    return %c0_i32, %arg0 : i32, i32
  }
  func.func @transform_3(%arg0: i32, %arg1: i32, %arg2: i32) -> (i32, i32) {
    %c0_i32 = arith.constant 0 : i32
    %c0_i32_0 = arith.constant 0 : i32
    return %c0_i32, %arg0 : i32, i32
  }
  func.func @transform_4(%arg0: i32, %arg1: i32, %arg2: i32) -> (i32, i32) {
    %0 = arith.muli %arg2, %arg1 : i32
    %c0_i32 = arith.constant 0 : i32
    return %0, %arg0 : i32, i32
  }
}

module attributes {stable_mosaic.version = 11 : i64} {
  func.func @_fused_conv_bn_kernel(%arg0: i32, %arg1: i32, %arg2: i32, %arg3: memref<128x128xbf16, #tpu.memory_space<vmem>>, %arg4: memref<128x128xbf16, #tpu.memory_space<vmem>>, %arg5: memref<1x128xf32, #tpu.memory_space<vmem>>, %arg6: memref<1x128xf32, #tpu.memory_space<vmem>>, %arg7: memref<128x128xbf16, #tpu.memory_space<vmem>>, %arg8: memref<128x128xf32, #tpu.memory_space<vmem>>, %arg9: memref<1x128xf32, #tpu.memory_space<vmem>>, %arg10: memref<1x128xf32, #tpu.memory_space<vmem>>, %arg11: memref<1x128xf32, #tpu.memory_space<vmem>>, %arg12: memref<1x128xf32, #tpu.memory_space<vmem>>) attributes {dimension_semantics = [#tpu.dimension_semantics<parallel>, #tpu.dimension_semantics<arbitrary>, #tpu.dimension_semantics<arbitrary>], iteration_bounds = array<i64: 1, 2, 1>, scalar_prefetch = 0 : i64, scratch_operands = 5 : i64, tpu.core_type = #tpu.core_type<tc>, window_params = [{transform_indices = @transform_0, window_bounds = array<i64: 128, 128>}, {transform_indices = @transform_1, window_bounds = array<i64: 128, 128>}, {transform_indices = @transform_2, window_bounds = array<i64: 1, 128>}, {transform_indices = @transform_3, window_bounds = array<i64: 1, 128>}, {transform_indices = @transform_4, window_bounds = array<i64: 128, 128>}]} {
    %c0_i32 = arith.constant 0 : i32
    %0 = arith.cmpi eq, %arg1, %c0_i32 : i32
    %1 = arith.extui %0 : i1 to i32
    %c0_i32_0 = arith.constant 0 : i32
    %2 = arith.cmpi ne, %1, %c0_i32_0 : i32
    scf.if %2 {
      %c0_i32_2 = arith.constant 0 : i32
      %6 = arith.cmpi eq, %arg2, %c0_i32_2 : i32
      %7 = arith.extui %6 : i1 to i32
      %c0_i32_3 = arith.constant 0 : i32
      %8 = arith.cmpi ne, %7, %c0_i32_3 : i32
      scf.if %8 {
        %cst_22 = arith.constant 0.000000e+00 : f32
        %34 = vector.broadcast %cst_22 : f32 to vector<1x128xf32>
        %c0_23 = arith.constant 0 : index
        %c0_24 = arith.constant 0 : index
        %35 = vector.load %arg9[%c0_23, %c0_24] : memref<1x128xf32, #tpu.memory_space<vmem>>, vector<1x128xf32>
        tpu.vector_store %arg9[%c0_23, %c0_24], %34 {strides = array<i32>} : memref<1x128xf32, #tpu.memory_space<vmem>>, vector<1x128xf32>,
        %cst_25 = arith.constant 0.000000e+00 : f32
        %36 = vector.broadcast %cst_25 : f32 to vector<1x128xf32>
        %c0_26 = arith.constant 0 : index
        %c0_27 = arith.constant 0 : index
        %37 = vector.load %arg10[%c0_26, %c0_27] : memref<1x128xf32, #tpu.memory_space<vmem>>, vector<1x128xf32>
        tpu.vector_store %arg10[%c0_26, %c0_27], %36 {strides = array<i32>} : memref<1x128xf32, #tpu.memory_space<vmem>>, vector<1x128xf32>,
      } else {
      }
      %c128_i32 = arith.constant 128 : i32
      %9 = arith.muli %arg2, %c128_i32 : i32
      %10 = tpu.assume_multiple %9, 128 : i32
      %c0 = arith.constant 0 : index
      %c0_4 = arith.constant 0 : index
      %11 = vector.load %arg3[%c0, %c0_4] : memref<128x128xbf16, #tpu.memory_space<vmem>>, vector<128x128xbf16>
      %c0_5 = arith.constant 0 : index
      %c0_6 = arith.constant 0 : index
      %12 = vector.load %arg4[%c0_5, %c0_6] : memref<128x128xbf16, #tpu.memory_space<vmem>>, vector<128x128xbf16>
      %cst = arith.constant dense<0.000000e+00> : vector<128x128xf32>
      %13 = tpu.matmul %11, %12, %cst {dimension_numbers = #tpu.dot_dimension_numbers<[1], [0], [0], [1], [0, 0, 1, 1], [], []>} : vector<128x128xbf16>, vector<128x128xbf16>, vector<128x128xf32> -> vector<128x128xf32>
      %14 = arith.index_cast %10 : i32 to index
      %c0_7 = arith.constant 0 : index
      %15 = vector.load %arg8[%14, %c0_7] : memref<128x128xf32, #tpu.memory_space<vmem>>, vector<128x128xf32>
      tpu.vector_store %arg8[%14, %c0_7], %13 {strides = array<i32>} : memref<128x128xf32, #tpu.memory_space<vmem>>, vector<128x128xf32>,
      %cst_8 = arith.constant 0.000000e+00 : f32
      %16 = vector.broadcast %cst_8 : f32 to vector<1x128xf32>
      %cst_9 = arith.constant 0.000000e+00 : f32
      %17 = vector.broadcast %cst_9 : f32 to vector<1x128xf32>
      %c0_i32_10 = arith.constant 0 : i32
      %18 = arith.addi %10, %c0_i32_10 : i32
      %19 = arith.index_cast %18 : i32 to index
      %c0_11 = arith.constant 0 : index
      %20 = vector.load %arg8[%19, %c0_11] : memref<128x128xf32, #tpu.memory_space<vmem>>, vector<128x128xf32>
      %cst_12 = arith.constant dense<0.000000e+00> : vector<128xf32>
      %21 = vector.multi_reduction <add>, %20, %cst_12 [0] : vector<128x128xf32> to vector<128xf32>
      %22 = vector.shape_cast %21 : vector<128xf32> to vector<1x128xf32>
      %23 = arith.addf %16, %22 : vector<1x128xf32>
      %24 = arith.mulf %20, %20 : vector<128x128xf32>
      %cst_13 = arith.constant dense<0.000000e+00> : vector<128xf32>
      %25 = vector.multi_reduction <add>, %24, %cst_13 [0] : vector<128x128xf32> to vector<128xf32>
      %26 = vector.shape_cast %25 : vector<128xf32> to vector<1x128xf32>
      %27 = arith.addf %17, %26 : vector<1x128xf32>
      %c0_14 = arith.constant 0 : index
      %c0_15 = arith.constant 0 : index
      %28 = vector.load %arg9[%c0_14, %c0_15] : memref<1x128xf32, #tpu.memory_space<vmem>>, vector<1x128xf32>
      %29 = arith.addf %28, %23 : vector<1x128xf32>
      %c0_16 = arith.constant 0 : index
      %c0_17 = arith.constant 0 : index
      %30 = vector.load %arg9[%c0_16, %c0_17] : memref<1x128xf32, #tpu.memory_space<vmem>>, vector<1x128xf32>
      tpu.vector_store %arg9[%c0_16, %c0_17], %29 {strides = array<i32>} : memref<1x128xf32, #tpu.memory_space<vmem>>, vector<1x128xf32>,
      %c0_18 = arith.constant 0 : index
      %c0_19 = arith.constant 0 : index
      %31 = vector.load %arg10[%c0_18, %c0_19] : memref<1x128xf32, #tpu.memory_space<vmem>>, vector<1x128xf32>
      %32 = arith.addf %31, %27 : vector<1x128xf32>
      %c0_20 = arith.constant 0 : index
      %c0_21 = arith.constant 0 : index
      %33 = vector.load %arg10[%c0_20, %c0_21] : memref<1x128xf32, #tpu.memory_space<vmem>>, vector<1x128xf32>
      tpu.vector_store %arg10[%c0_20, %c0_21], %32 {strides = array<i32>} : memref<1x128xf32, #tpu.memory_space<vmem>>, vector<1x128xf32>,
    } else {
    }
    %c1_i32 = arith.constant 1 : i32
    %3 = arith.cmpi eq, %arg1, %c1_i32 : i32
    %4 = arith.extui %3 : i1 to i32
    %c0_i32_1 = arith.constant 0 : i32
    %5 = arith.cmpi ne, %4, %c0_i32_1 : i32
    scf.if %5 {
      %c0_i32_2 = arith.constant 0 : i32
      %6 = arith.cmpi eq, %arg2, %c0_i32_2 : i32
      %7 = arith.extui %6 : i1 to i32
      %c0_i32_3 = arith.constant 0 : i32
      %8 = arith.cmpi ne, %7, %c0_i32_3 : i32
      scf.if %8 {
        %c0_10 = arith.constant 0 : index
        %c0_11 = arith.constant 0 : index
        %21 = vector.load %arg9[%c0_10, %c0_11] : memref<1x128xf32, #tpu.memory_space<vmem>>, vector<1x128xf32>
        %cst = arith.constant 7.812500e-03 : f32
        %22 = vector.broadcast %cst : f32 to vector<1x128xf32>
        %23 = arith.mulf %21, %22 : vector<1x128xf32>
        %c0_12 = arith.constant 0 : index
        %c0_13 = arith.constant 0 : index
        %24 = vector.load %arg10[%c0_12, %c0_13] : memref<1x128xf32, #tpu.memory_space<vmem>>, vector<1x128xf32>
        %cst_14 = arith.constant 7.812500e-03 : f32
        %25 = vector.broadcast %cst_14 : f32 to vector<1x128xf32>
        %26 = arith.mulf %24, %25 : vector<1x128xf32>
        %27 = arith.mulf %23, %23 : vector<1x128xf32>
        %28 = arith.subf %26, %27 : vector<1x128xf32>
        %cst_15 = arith.constant 0.000000e+00 : f32
        %29 = vector.broadcast %cst_15 : f32 to vector<1x128xf32>
        %30 = arith.maximumf %28, %29 : vector<1x128xf32>
        %c0_16 = arith.constant 0 : index
        %c0_17 = arith.constant 0 : index
        %31 = vector.load %arg5[%c0_16, %c0_17] : memref<1x128xf32, #tpu.memory_space<vmem>>, vector<1x128xf32>
        %cst_18 = arith.constant 9.99999974E-6 : f32
        %32 = vector.broadcast %cst_18 : f32 to vector<1x128xf32>
        %33 = arith.addf %30, %32 : vector<1x128xf32>
        %34 = math.rsqrt %33 : vector<1x128xf32>
        %35 = arith.mulf %31, %34 : vector<1x128xf32>
        %c0_19 = arith.constant 0 : index
        %c0_20 = arith.constant 0 : index
        %36 = vector.load %arg11[%c0_19, %c0_20] : memref<1x128xf32, #tpu.memory_space<vmem>>, vector<1x128xf32>
        tpu.vector_store %arg11[%c0_19, %c0_20], %35 {strides = array<i32>} : memref<1x128xf32, #tpu.memory_space<vmem>>, vector<1x128xf32>,
        %c0_21 = arith.constant 0 : index
        %c0_22 = arith.constant 0 : index
        %37 = vector.load %arg6[%c0_21, %c0_22] : memref<1x128xf32, #tpu.memory_space<vmem>>, vector<1x128xf32>
        %38 = arith.mulf %23, %35 : vector<1x128xf32>
        %39 = arith.subf %37, %38 : vector<1x128xf32>
        %c0_23 = arith.constant 0 : index
        %c0_24 = arith.constant 0 : index
        %40 = vector.load %arg12[%c0_23, %c0_24] : memref<1x128xf32, #tpu.memory_space<vmem>>, vector<1x128xf32>
        tpu.vector_store %arg12[%c0_23, %c0_24], %39 {strides = array<i32>} : memref<1x128xf32, #tpu.memory_space<vmem>>, vector<1x128xf32>,
      } else {
      }
      %c128_i32 = arith.constant 128 : i32
      %9 = arith.muli %arg2, %c128_i32 : i32
      %10 = tpu.assume_multiple %9, 128 : i32
      %11 = arith.index_cast %10 : i32 to index
      %c0 = arith.constant 0 : index
      %12 = vector.load %arg8[%11, %c0] : memref<128x128xf32, #tpu.memory_space<vmem>>, vector<128x128xf32>
      %c0_4 = arith.constant 0 : index
      %c0_5 = arith.constant 0 : index
      %13 = vector.load %arg11[%c0_4, %c0_5] : memref<1x128xf32, #tpu.memory_space<vmem>>, vector<1x128xf32>
      %14 = vector.broadcast %13 : vector<1x128xf32> to vector<128x128xf32>
      %15 = arith.mulf %12, %14 : vector<128x128xf32>
      %c0_6 = arith.constant 0 : index
      %c0_7 = arith.constant 0 : index
      %16 = vector.load %arg12[%c0_6, %c0_7] : memref<1x128xf32, #tpu.memory_space<vmem>>, vector<1x128xf32>
      %17 = vector.broadcast %16 : vector<1x128xf32> to vector<128x128xf32>
      %18 = arith.addf %15, %17 : vector<128x128xf32>
      %19 = arith.truncf %18 : vector<128x128xf32> to vector<128x128xbf16>
      %c0_8 = arith.constant 0 : index
      %c0_9 = arith.constant 0 : index
      %20 = vector.load %arg7[%c0_8, %c0_9] : memref<128x128xbf16, #tpu.memory_space<vmem>>, vector<128x128xbf16>
      tpu.vector_store %arg7[%c0_8, %c0_9], %19 {strides = array<i32>} : memref<128x128xbf16, #tpu.memory_space<vmem>>, vector<128x128xbf16>,
    } else {
    }
    return
  }
  func.func @transform_0(%arg0: i32, %arg1: i32, %arg2: i32) -> (i32, i32) {
    %c1_i32 = arith.constant 1 : i32
    %0 = arith.subi %c1_i32, %arg1 : i32
    %1 = arith.muli %arg2, %0 : i32
    %c0_i32 = arith.constant 0 : i32
    %c0_i32_0 = arith.constant 0 : i32
    return %1, %c0_i32 : i32, i32
  }
  func.func @transform_1(%arg0: i32, %arg1: i32, %arg2: i32) -> (i32, i32) {
    %c0_i32 = arith.constant 0 : i32
    %c0_i32_0 = arith.constant 0 : i32
    return %c0_i32, %arg0 : i32, i32
  }
  func.func @transform_2(%arg0: i32, %arg1: i32, %arg2: i32) -> (i32, i32) {
    %c0_i32 = arith.constant 0 : i32
    %c0_i32_0 = arith.constant 0 : i32
    return %c0_i32, %arg0 : i32, i32
  }
  func.func @transform_3(%arg0: i32, %arg1: i32, %arg2: i32) -> (i32, i32) {
    %c0_i32 = arith.constant 0 : i32
    %c0_i32_0 = arith.constant 0 : i32
    return %c0_i32, %arg0 : i32, i32
  }
  func.func @transform_4(%arg0: i32, %arg1: i32, %arg2: i32) -> (i32, i32) {
    %0 = arith.muli %arg2, %arg1 : i32
    %c0_i32 = arith.constant 0 : i32
    return %0, %arg0 : i32, i32
  }
}

module attributes {stable_mosaic.version = 11 : i64} {
  func.func @_fused_conv_bn_kernel(%arg0: i32, %arg1: i32, %arg2: i32, %arg3: memref<128x128xbf16, #tpu.memory_space<vmem>>, %arg4: memref<128x128xbf16, #tpu.memory_space<vmem>>, %arg5: memref<1x128xf32, #tpu.memory_space<vmem>>, %arg6: memref<1x128xf32, #tpu.memory_space<vmem>>, %arg7: memref<128x128xbf16, #tpu.memory_space<vmem>>, %arg8: memref<128x128xbf16, #tpu.memory_space<vmem>>, %arg9: memref<128x128xf32, #tpu.memory_space<vmem>>, %arg10: memref<1x128xf32, #tpu.memory_space<vmem>>, %arg11: memref<1x128xf32, #tpu.memory_space<vmem>>, %arg12: memref<1x128xf32, #tpu.memory_space<vmem>>, %arg13: memref<1x128xf32, #tpu.memory_space<vmem>>) attributes {dimension_semantics = [#tpu.dimension_semantics<parallel>, #tpu.dimension_semantics<arbitrary>, #tpu.dimension_semantics<arbitrary>], iteration_bounds = array<i64: 1, 2, 1>, scalar_prefetch = 0 : i64, scratch_operands = 5 : i64, tpu.core_type = #tpu.core_type<tc>, window_params = [{transform_indices = @transform_0, window_bounds = array<i64: 128, 128>}, {transform_indices = @transform_1, window_bounds = array<i64: 128, 128>}, {transform_indices = @transform_2, window_bounds = array<i64: 1, 128>}, {transform_indices = @transform_3, window_bounds = array<i64: 1, 128>}, {transform_indices = @transform_4, window_bounds = array<i64: 128, 128>}, {transform_indices = @transform_5, window_bounds = array<i64: 128, 128>}]} {
    %c0_i32 = arith.constant 0 : i32
    %0 = arith.cmpi eq, %arg1, %c0_i32 : i32
    %1 = arith.extui %0 : i1 to i32
    %c0_i32_0 = arith.constant 0 : i32
    %2 = arith.cmpi ne, %1, %c0_i32_0 : i32
    scf.if %2 {
      %c0_i32_2 = arith.constant 0 : i32
      %6 = arith.cmpi eq, %arg2, %c0_i32_2 : i32
      %7 = arith.extui %6 : i1 to i32
      %c0_i32_3 = arith.constant 0 : i32
      %8 = arith.cmpi ne, %7, %c0_i32_3 : i32
      scf.if %8 {
        %cst_22 = arith.constant 0.000000e+00 : f32
        %34 = vector.broadcast %cst_22 : f32 to vector<1x128xf32>
        %c0_23 = arith.constant 0 : index
        %c0_24 = arith.constant 0 : index
        %35 = vector.load %arg10[%c0_23, %c0_24] : memref<1x128xf32, #tpu.memory_space<vmem>>, vector<1x128xf32>
        tpu.vector_store %arg10[%c0_23, %c0_24], %34 {strides = array<i32>} : memref<1x128xf32, #tpu.memory_space<vmem>>, vector<1x128xf32>,
        %cst_25 = arith.constant 0.000000e+00 : f32
        %36 = vector.broadcast %cst_25 : f32 to vector<1x128xf32>
        %c0_26 = arith.constant 0 : index
        %c0_27 = arith.constant 0 : index
        %37 = vector.load %arg11[%c0_26, %c0_27] : memref<1x128xf32, #tpu.memory_space<vmem>>, vector<1x128xf32>
        tpu.vector_store %arg11[%c0_26, %c0_27], %36 {strides = array<i32>} : memref<1x128xf32, #tpu.memory_space<vmem>>, vector<1x128xf32>,
      } else {
      }
      %c128_i32 = arith.constant 128 : i32
      %9 = arith.muli %arg2, %c128_i32 : i32
      %10 = tpu.assume_multiple %9, 128 : i32
      %c0 = arith.constant 0 : index
      %c0_4 = arith.constant 0 : index
      %11 = vector.load %arg3[%c0, %c0_4] : memref<128x128xbf16, #tpu.memory_space<vmem>>, vector<128x128xbf16>
      %c0_5 = arith.constant 0 : index
      %c0_6 = arith.constant 0 : index
      %12 = vector.load %arg4[%c0_5, %c0_6] : memref<128x128xbf16, #tpu.memory_space<vmem>>, vector<128x128xbf16>
      %cst = arith.constant dense<0.000000e+00> : vector<128x128xf32>
      %13 = tpu.matmul %11, %12, %cst {dimension_numbers = #tpu.dot_dimension_numbers<[1], [0], [0], [1], [0, 0, 1, 1], [], []>} : vector<128x128xbf16>, vector<128x128xbf16>, vector<128x128xf32> -> vector<128x128xf32>
      %14 = arith.index_cast %10 : i32 to index
      %c0_7 = arith.constant 0 : index
      %15 = vector.load %arg9[%14, %c0_7] : memref<128x128xf32, #tpu.memory_space<vmem>>, vector<128x128xf32>
      tpu.vector_store %arg9[%14, %c0_7], %13 {strides = array<i32>} : memref<128x128xf32, #tpu.memory_space<vmem>>, vector<128x128xf32>,
      %cst_8 = arith.constant 0.000000e+00 : f32
      %16 = vector.broadcast %cst_8 : f32 to vector<1x128xf32>
      %cst_9 = arith.constant 0.000000e+00 : f32
      %17 = vector.broadcast %cst_9 : f32 to vector<1x128xf32>
      %c0_i32_10 = arith.constant 0 : i32
      %18 = arith.addi %10, %c0_i32_10 : i32
      %19 = arith.index_cast %18 : i32 to index
      %c0_11 = arith.constant 0 : index
      %20 = vector.load %arg9[%19, %c0_11] : memref<128x128xf32, #tpu.memory_space<vmem>>, vector<128x128xf32>
      %cst_12 = arith.constant dense<0.000000e+00> : vector<128xf32>
      %21 = vector.multi_reduction <add>, %20, %cst_12 [0] : vector<128x128xf32> to vector<128xf32>
      %22 = vector.shape_cast %21 : vector<128xf32> to vector<1x128xf32>
      %23 = arith.addf %16, %22 : vector<1x128xf32>
      %24 = arith.mulf %20, %20 : vector<128x128xf32>
      %cst_13 = arith.constant dense<0.000000e+00> : vector<128xf32>
      %25 = vector.multi_reduction <add>, %24, %cst_13 [0] : vector<128x128xf32> to vector<128xf32>
      %26 = vector.shape_cast %25 : vector<128xf32> to vector<1x128xf32>
      %27 = arith.addf %17, %26 : vector<1x128xf32>
      %c0_14 = arith.constant 0 : index
      %c0_15 = arith.constant 0 : index
      %28 = vector.load %arg10[%c0_14, %c0_15] : memref<1x128xf32, #tpu.memory_space<vmem>>, vector<1x128xf32>
      %29 = arith.addf %28, %23 : vector<1x128xf32>
      %c0_16 = arith.constant 0 : index
      %c0_17 = arith.constant 0 : index
      %30 = vector.load %arg10[%c0_16, %c0_17] : memref<1x128xf32, #tpu.memory_space<vmem>>, vector<1x128xf32>
      tpu.vector_store %arg10[%c0_16, %c0_17], %29 {strides = array<i32>} : memref<1x128xf32, #tpu.memory_space<vmem>>, vector<1x128xf32>,
      %c0_18 = arith.constant 0 : index
      %c0_19 = arith.constant 0 : index
      %31 = vector.load %arg11[%c0_18, %c0_19] : memref<1x128xf32, #tpu.memory_space<vmem>>, vector<1x128xf32>
      %32 = arith.addf %31, %27 : vector<1x128xf32>
      %c0_20 = arith.constant 0 : index
      %c0_21 = arith.constant 0 : index
      %33 = vector.load %arg11[%c0_20, %c0_21] : memref<1x128xf32, #tpu.memory_space<vmem>>, vector<1x128xf32>
      tpu.vector_store %arg11[%c0_20, %c0_21], %32 {strides = array<i32>} : memref<1x128xf32, #tpu.memory_space<vmem>>, vector<1x128xf32>,
    } else {
    }
    %c1_i32 = arith.constant 1 : i32
    %3 = arith.cmpi eq, %arg1, %c1_i32 : i32
    %4 = arith.extui %3 : i1 to i32
    %c0_i32_1 = arith.constant 0 : i32
    %5 = arith.cmpi ne, %4, %c0_i32_1 : i32
    scf.if %5 {
      %c0_i32_2 = arith.constant 0 : i32
      %6 = arith.cmpi eq, %arg2, %c0_i32_2 : i32
      %7 = arith.extui %6 : i1 to i32
      %c0_i32_3 = arith.constant 0 : i32
      %8 = arith.cmpi ne, %7, %c0_i32_3 : i32
      scf.if %8 {
        %c0_12 = arith.constant 0 : index
        %c0_13 = arith.constant 0 : index
        %26 = vector.load %arg10[%c0_12, %c0_13] : memref<1x128xf32, #tpu.memory_space<vmem>>, vector<1x128xf32>
        %cst_14 = arith.constant 7.812500e-03 : f32
        %27 = vector.broadcast %cst_14 : f32 to vector<1x128xf32>
        %28 = arith.mulf %26, %27 : vector<1x128xf32>
        %c0_15 = arith.constant 0 : index
        %c0_16 = arith.constant 0 : index
        %29 = vector.load %arg11[%c0_15, %c0_16] : memref<1x128xf32, #tpu.memory_space<vmem>>, vector<1x128xf32>
        %cst_17 = arith.constant 7.812500e-03 : f32
        %30 = vector.broadcast %cst_17 : f32 to vector<1x128xf32>
        %31 = arith.mulf %29, %30 : vector<1x128xf32>
        %32 = arith.mulf %28, %28 : vector<1x128xf32>
        %33 = arith.subf %31, %32 : vector<1x128xf32>
        %cst_18 = arith.constant 0.000000e+00 : f32
        %34 = vector.broadcast %cst_18 : f32 to vector<1x128xf32>
        %35 = arith.maximumf %33, %34 : vector<1x128xf32>
        %c0_19 = arith.constant 0 : index
        %c0_20 = arith.constant 0 : index
        %36 = vector.load %arg5[%c0_19, %c0_20] : memref<1x128xf32, #tpu.memory_space<vmem>>, vector<1x128xf32>
        %cst_21 = arith.constant 9.99999974E-6 : f32
        %37 = vector.broadcast %cst_21 : f32 to vector<1x128xf32>
        %38 = arith.addf %35, %37 : vector<1x128xf32>
        %39 = math.rsqrt %38 : vector<1x128xf32>
        %40 = arith.mulf %36, %39 : vector<1x128xf32>
        %c0_22 = arith.constant 0 : index
        %c0_23 = arith.constant 0 : index
        %41 = vector.load %arg12[%c0_22, %c0_23] : memref<1x128xf32, #tpu.memory_space<vmem>>, vector<1x128xf32>
        tpu.vector_store %arg12[%c0_22, %c0_23], %40 {strides = array<i32>} : memref<1x128xf32, #tpu.memory_space<vmem>>, vector<1x128xf32>,
        %c0_24 = arith.constant 0 : index
        %c0_25 = arith.constant 0 : index
        %42 = vector.load %arg6[%c0_24, %c0_25] : memref<1x128xf32, #tpu.memory_space<vmem>>, vector<1x128xf32>
        %43 = arith.mulf %28, %40 : vector<1x128xf32>
        %44 = arith.subf %42, %43 : vector<1x128xf32>
        %c0_26 = arith.constant 0 : index
        %c0_27 = arith.constant 0 : index
        %45 = vector.load %arg13[%c0_26, %c0_27] : memref<1x128xf32, #tpu.memory_space<vmem>>, vector<1x128xf32>
        tpu.vector_store %arg13[%c0_26, %c0_27], %44 {strides = array<i32>} : memref<1x128xf32, #tpu.memory_space<vmem>>, vector<1x128xf32>,
      } else {
      }
      %c128_i32 = arith.constant 128 : i32
      %9 = arith.muli %arg2, %c128_i32 : i32
      %10 = tpu.assume_multiple %9, 128 : i32
      %11 = arith.index_cast %10 : i32 to index
      %c0 = arith.constant 0 : index
      %12 = vector.load %arg9[%11, %c0] : memref<128x128xf32, #tpu.memory_space<vmem>>, vector<128x128xf32>
      %c0_4 = arith.constant 0 : index
      %c0_5 = arith.constant 0 : index
      %13 = vector.load %arg12[%c0_4, %c0_5] : memref<1x128xf32, #tpu.memory_space<vmem>>, vector<1x128xf32>
      %14 = vector.broadcast %13 : vector<1x128xf32> to vector<128x128xf32>
      %15 = arith.mulf %12, %14 : vector<128x128xf32>
      %c0_6 = arith.constant 0 : index
      %c0_7 = arith.constant 0 : index
      %16 = vector.load %arg13[%c0_6, %c0_7] : memref<1x128xf32, #tpu.memory_space<vmem>>, vector<1x128xf32>
      %17 = vector.broadcast %16 : vector<1x128xf32> to vector<128x128xf32>
      %18 = arith.addf %15, %17 : vector<128x128xf32>
      %c0_8 = arith.constant 0 : index
      %c0_9 = arith.constant 0 : index
      %19 = vector.load %arg7[%c0_8, %c0_9] : memref<128x128xbf16, #tpu.memory_space<vmem>>, vector<128x128xbf16>
      %20 = arith.extf %19 : vector<128x128xbf16> to vector<128x128xf32>
      %21 = arith.addf %18, %20 : vector<128x128xf32>
      %cst = arith.constant 0.000000e+00 : f32
      %22 = vector.broadcast %cst : f32 to vector<128x128xf32>
      %23 = arith.maximumf %21, %22 : vector<128x128xf32>
      %24 = arith.truncf %23 : vector<128x128xf32> to vector<128x128xbf16>
      %c0_10 = arith.constant 0 : index
      %c0_11 = arith.constant 0 : index
      %25 = vector.load %arg8[%c0_10, %c0_11] : memref<128x128xbf16, #tpu.memory_space<vmem>>, vector<128x128xbf16>
      tpu.vector_store %arg8[%c0_10, %c0_11], %24 {strides = array<i32>} : memref<128x128xbf16, #tpu.memory_space<vmem>>, vector<128x128xbf16>,
    } else {
    }
    return
  }
  func.func @transform_0(%arg0: i32, %arg1: i32, %arg2: i32) -> (i32, i32) {
    %c1_i32 = arith.constant 1 : i32
    %0 = arith.subi %c1_i32, %arg1 : i32
    %1 = arith.muli %arg2, %0 : i32
    %c0_i32 = arith.constant 0 : i32
    %c0_i32_0 = arith.constant 0 : i32
    return %1, %c0_i32 : i32, i32
  }
  func.func @transform_1(%arg0: i32, %arg1: i32, %arg2: i32) -> (i32, i32) {
    %c0_i32 = arith.constant 0 : i32
    %c0_i32_0 = arith.constant 0 : i32
    return %c0_i32, %arg0 : i32, i32
  }
  func.func @transform_2(%arg0: i32, %arg1: i32, %arg2: i32) -> (i32, i32) {
    %c0_i32 = arith.constant 0 : i32
    %c0_i32_0 = arith.constant 0 : i32
    return %c0_i32, %arg0 : i32, i32
  }
  func.func @transform_3(%arg0: i32, %arg1: i32, %arg2: i32) -> (i32, i32) {
    %c0_i32 = arith.constant 0 : i32
    %c0_i32_0 = arith.constant 0 : i32
    return %c0_i32, %arg0 : i32, i32
  }
  func.func @transform_4(%arg0: i32, %arg1: i32, %arg2: i32) -> (i32, i32) {
    %0 = arith.muli %arg2, %arg1 : i32
    %c0_i32 = arith.constant 0 : i32
    return %0, %arg0 : i32, i32
  }
  func.func @transform_5(%arg0: i32, %arg1: i32, %arg2: i32) -> (i32, i32) {
    %0 = arith.muli %arg2, %arg1 : i32
    %c0_i32 = arith.constant 0 : i32
    return %0, %arg0 : i32, i32
  }
}

</mosaic_0001>

<llo_original>
// kernel: bottleneck_forward.4
$region0: #{bottleneck_forward.4}
  #allocation0 [shape = 'u32[]', space=smem, size = 0x4, offset = 0x4, fixed_abs, tag = 'smem constant byte address 0x4 - core index']
  #allocation1 [shape = 'u32[144,128]{1,0:T(1,128)}', space=vmem, size = 0x12000, scoped, tag = 'internal scratch']
  #allocation2 [shape = 'f32[512,128]{1,0:T(8,128)}', space=vmem, size = 0x40000, scoped, tag = 'scratch operand']
  #allocation3 [shape = 'f32[1,128]{1,0:T(1,128)}', space=vmem, size = 0x200, scoped, tag = 'scratch operand']
  #allocation4 [shape = 'f32[1,128]{1,0:T(1,128)}', space=vmem, size = 0x200, scoped, tag = 'scratch operand']
  #allocation5 [shape = 'f32[1,128]{1,0:T(1,128)}', space=vmem, size = 0x200, scoped, tag = 'scratch operand']
  #allocation6 [shape = 'f32[1,128]{1,0:T(1,128)}', space=vmem, size = 0x200, scoped, tag = 'scratch operand']
  %s0 = inlined_call_operand.vmem [shape: bf16[512,128], index: 0, kind: input, shape index: {}]
  %s1 = inlined_call_operand.vmem [shape: bf16[128,128], index: 1, kind: input, shape index: {}]
  %s2 = inlined_call_operand.vmem [shape: f32[1,128], index: 2, kind: input, shape index: {}]
  %s3 = inlined_call_operand.vmem [shape: f32[1,128], index: 3, kind: input, shape index: {}]
  %s4 = inlined_call_operand.vmem [shape: bf16[512,128], index: 4, kind: output, shape index: {}]
  %s5 = sld [smem:[#allocation0]]
  $region65: #{bottleneck_forward.4} parent=0
    _
  %s7 = ssub.s32 1, %s5
  %s8 = scalar_select 0, %s7, %s5
  loop: start=0, step=1, limit=6
  $region2: #{bottleneck_forward.4} parent=0 // loop_pre_header
    _
  $region3: #{bottleneck_forward.4} parent=0 // loop_header
    %s10 = sphi 0, %s14
    %p11 = scmp.ge.s32.totalorder %s10, 6
    %s17 = sphi 0, %s36
    %s18 = sphi 0, %s32
    %s19 = sphi 0, %s28
    %s20 = sphi 0, %s17
    %s21 = sphi 0, %s18
    %s22 = sphi 0, %s19
    %s23 = sphi 0, %s20
    %s24 = sphi 0, %s21
    %s25 = sphi 0, %s22
    %s43 = sphi 0, %s45
    %s46 = sphi 0, %s43
    %s47 = sphi 0, %s46
    %s63 = sphi 0, %s47
    %s69 = sphi 0, %s71
    %s72 = sphi 0, %s69
    %s73 = sphi 0, %s72
    %s89 = sphi 0, %s73
    %s95 = sphi 0, %s97
    %s98 = sphi 0, %s95
    %s99 = sphi 0, %s98
    %s115 = sphi 0, %s99
    %s121 = sphi 0, %s123
    %s124 = sphi 0, %s121
    %s125 = sphi 0, %s124
    %s141 = sphi 0, %s125
    %s151 = sphi 0, %s153
    %s154 = sphi 0, %s151
    %s155 = sphi 0, %s154
    %s171 = sphi 0, %s155
  $region4: #{bottleneck_forward.4} parent=0 // loop_header_branch
    %13 = sbr.rel (%p11) target = $region8
  $region5: #{bottleneck_forward.4} parent=0 // loop_body
    %s15 = ssub.s32 %s10, 1
    %s16 = ssub.s32 %s10, 2
    %s26 = sadd.s32 1, %s19
    %p27 = scmp.ge.s32.totalorder %s26, 2
    %s28 = scalar_select %p27, 0, %s26
    %s29 = sadd.s32 1, %s18
    %s30 = scalar_select %p27, %s29, %s18
    %p31 = scmp.ge.s32.totalorder %s30, 2
    %s32 = scalar_select %p31, 0, %s30
    %s33 = sadd.s32 1, %s17
    %s34 = scalar_select %p31, %s33, %s17
    %p35 = scmp.ge.s32.totalorder %s34, 1
    %s36 = scalar_select %p35, 0, %s34
    %s37 = ssub.s32 1, %s18
    %s38 = smul.u32 %s19, %s37
    %s39 = ssub.s32 1, %s32
    %s40 = smul.u32 %s28, %s39
    %s41 = ssub.s32 %s38, %s40
    %p42 = scmp.eq.s32.totalorder %s41, 0
    %s44 = sadd.s32 %s43, 1
    %s45 = scalar_select %p42, %s43, %s44
    %p48 = pneg %p42
    %p49 = scmp.eq.s32.totalorder %s10, 3
    %p50 = por %p48, %p49
    %p51 = scmp.ne.s32.totalorder %s43, %s46
    %p52 = scmp.eq.s32.totalorder %s10, 0
    %p53 = por %p51, %p52
    %p54 = scmp.ne.s32.totalorder %s43, %s46
    %p55 = scmp.eq.s32.totalorder %s15, 3
    %p56 = por %p54, %p55
    %p57 = scmp.ne.s32.totalorder %s46, %s47
    %p58 = scmp.eq.s32.totalorder %s15, 0
    %p59 = por %p57, %p58
    %p60 = scmp.ne.s32.totalorder %s46, %s47
    %p61 = scmp.eq.s32.totalorder %s16, 3
    %p62 = por %p60, %p61
    %p64 = scmp.ne.s32.totalorder %s47, %s63
    %p65 = scmp.eq.s32.totalorder %s16, 0
    %p66 = por %p64, %p65
    %s67 = ssub.s32 %s17, %s36
    %p68 = scmp.eq.s32.totalorder %s67, 0
    %s70 = sadd.s32 %s69, 1
    %s71 = scalar_select %p68, %s69, %s70
    %p74 = pneg %p68
    %p75 = scmp.eq.s32.totalorder %s10, 3
    %p76 = por %p74, %p75
    %p77 = scmp.ne.s32.totalorder %s69, %s72
    %p78 = scmp.eq.s32.totalorder %s10, 0
    %p79 = por %p77, %p78
    %p80 = scmp.ne.s32.totalorder %s69, %s72
    %p81 = scmp.eq.s32.totalorder %s15, 3
    %p82 = por %p80, %p81
    %p83 = scmp.ne.s32.totalorder %s72, %s73
    %p84 = scmp.eq.s32.totalorder %s15, 0
    %p85 = por %p83, %p84
    %p86 = scmp.ne.s32.totalorder %s72, %s73
    %p87 = scmp.eq.s32.totalorder %s16, 3
    %p88 = por %p86, %p87
    %p90 = scmp.ne.s32.totalorder %s73, %s89
    %p91 = scmp.eq.s32.totalorder %s16, 0
    %p92 = por %p90, %p91
    %s93 = ssub.s32 %s17, %s36
    %p94 = scmp.eq.s32.totalorder %s93, 0
    %s96 = sadd.s32 %s95, 1
    %s97 = scalar_select %p94, %s95, %s96
    %p100 = pneg %p94
    %p101 = scmp.eq.s32.totalorder %s10, 3
    %p102 = por %p100, %p101
    %p103 = scmp.ne.s32.totalorder %s95, %s98
    %p104 = scmp.eq.s32.totalorder %s10, 0
    %p105 = por %p103, %p104
    %p106 = scmp.ne.s32.totalorder %s95, %s98
    %p107 = scmp.eq.s32.totalorder %s15, 3
    %p108 = por %p106, %p107
    %p109 = scmp.ne.s32.totalorder %s98, %s99
    %p110 = scmp.eq.s32.totalorder %s15, 0
    %p111 = por %p109, %p110
    %p112 = scmp.ne.s32.totalorder %s98, %s99
    %p113 = scmp.eq.s32.totalorder %s16, 3
    %p114 = por %p112, %p113
    %p116 = scmp.ne.s32.totalorder %s99, %s115
    %p117 = scmp.eq.s32.totalorder %s16, 0
    %p118 = por %p116, %p117
    %s119 = ssub.s32 %s17, %s36
    %p120 = scmp.eq.s32.totalorder %s119, 0
    %s122 = sadd.s32 %s121, 1
    %s123 = scalar_select %p120, %s121, %s122
    %p126 = pneg %p120
    %p127 = scmp.eq.s32.totalorder %s10, 3
    %p128 = por %p126, %p127
    %p129 = scmp.ne.s32.totalorder %s121, %s124
    %p130 = scmp.eq.s32.totalorder %s10, 0
    %p131 = por %p129, %p130
    %p132 = scmp.ne.s32.totalorder %s121, %s124
    %p133 = scmp.eq.s32.totalorder %s15, 3
    %p134 = por %p132, %p133
    %p135 = scmp.ne.s32.totalorder %s124, %s125
    %p136 = scmp.eq.s32.totalorder %s15, 0
    %p137 = por %p135, %p136
    %p138 = scmp.ne.s32.totalorder %s124, %s125
    %p139 = scmp.eq.s32.totalorder %s16, 3
    %p140 = por %p138, %p139
    %p142 = scmp.ne.s32.totalorder %s125, %s141
    %p143 = scmp.eq.s32.totalorder %s16, 0
    %p144 = por %p142, %p143
    %s145 = smul.u32 %s19, %s18
    %s146 = smul.u32 %s28, %s32
    %s147 = ssub.s32 %s145, %s146
    %s148 = ssub.s32 %s17, %s36
    %s149 = sor.u32 %s147, %s148
    %p150 = scmp.eq.s32.totalorder %s149, 0
    %s152 = sadd.s32 %s151, 1
    %s153 = scalar_select %p150, %s151, %s152
    %p156 = pneg %p150
    %p157 = scmp.eq.s32.totalorder %s10, 3
    %p158 = por %p156, %p157
    %p159 = scmp.ne.s32.totalorder %s151, %s154
    %p160 = scmp.eq.s32.totalorder %s10, 0
    %p161 = por %p159, %p160
    %p162 = scmp.ne.s32.totalorder %s151, %s154
    %p163 = scmp.eq.s32.totalorder %s15, 3
    %p164 = por %p162, %p163
    %p165 = scmp.ne.s32.totalorder %s154, %s155
    %p166 = scmp.eq.s32.totalorder %s15, 0
    %p167 = por %p165, %p166
    %p168 = scmp.ne.s32.totalorder %s154, %s155
    %p169 = scmp.eq.s32.totalorder %s16, 3
    %p170 = por %p168, %p169
    %p172 = scmp.ne.s32.totalorder %s155, %s171
    %p173 = scmp.eq.s32.totalorder %s16, 0
    %p174 = por %p172, %p173
    %p175 = scmp.le.s32.totalorder 1, %s10
    %p176 = scmp.lt.s32.totalorder %s10, 5
    %p177 = pnand %p175, %p176
    %p178 = pneg %p177
    // Predicated region
    $region9: #{bottleneck_forward.4} parent=5 // pred_check
      _
    $region10: #{bottleneck_forward.4} parent=5 // pred_check_branch
      %180 = sbr.rel (%p177) target = $region12
    $region11: #{bottleneck_forward.4} parent=5 // pred_region
      %s181 = ssub.s32 %s10, 1
      // Predicated region
      $region13: #{bottleneck_forward.4} parent=11 // pred_check
        %p182 = pneg %p85
      $region14: #{bottleneck_forward.4} parent=11 // pred_check_branch
        %184 = sbr.rel (%p182) target = $region16
      $region15: #{bottleneck_forward.4} parent=11 // pred_region
        %p185 = scmp.lt.s32.totalorder %s20, 0
        %s186 = scalar_select %p185, %s20, 0
        %s187 = smul.addr %s186, 4
        %s188 = scalar_lea.vmem %s1, %s187
      $region16: #{bottleneck_forward.4} parent=11 // pred_fallthru
        _
      // Predicated region
      $region17: #{bottleneck_forward.4} parent=11 // pred_check
        %p189 = pneg %p111
      $region18: #{bottleneck_forward.4} parent=11 // pred_check_branch
        %191 = sbr.rel (%p189) target = $region20
      $region19: #{bottleneck_forward.4} parent=11 // pred_region
        %p192 = scmp.lt.s32.totalorder %s20, 0
        %s193 = scalar_select %p192, %s20, 0
        %s194 = scalar_lea.vmem %s2, %s193
      $region20: #{bottleneck_forward.4} parent=11 // pred_fallthru
        _
      // Predicated region
      $region21: #{bottleneck_forward.4} parent=11 // pred_check
        %p195 = pneg %p137
      $region22: #{bottleneck_forward.4} parent=11 // pred_check_branch
        %197 = sbr.rel (%p195) target = $region24
      $region23: #{bottleneck_forward.4} parent=11 // pred_region
        %p198 = scmp.lt.s32.totalorder %s20, 0
        %s199 = scalar_select %p198, %s20, 0
        %s200 = scalar_lea.vmem %s3, %s199
      $region24: #{bottleneck_forward.4} parent=11 // pred_fallthru
        _
    $region12: #{bottleneck_forward.4} parent=5 // pred_fallthru
      _
    %p201 = scmp.lt.s32.totalorder %s10, 4
    // Predicated region
    $region25: #{bottleneck_forward.4} parent=5 // pred_check
      %p202 = pneg %p201
    $region26: #{bottleneck_forward.4} parent=5 // pred_check_branch
      %204 = sbr.rel (%p202) target = $region28
    $region27: #{bottleneck_forward.4} parent=5 // pred_region
      // Predicated region
      $region29: #{bottleneck_forward.4} parent=27 // pred_check
        %p205 = pneg %p53
      $region30: #{bottleneck_forward.4} parent=27 // pred_check_branch
        %207 = sbr.rel (%p205) target = $region32
      $region31: #{bottleneck_forward.4} parent=27 // pred_region
        %s208 = ssub.s32 1, %s18
        %s209 = smul.u32 %s19, %s208
        %s210 = smul.u32 32, %s209
        %p211 = scmp.lt.s32.totalorder %s210, 63
        %s212 = scalar_select %p211, %s210, 63
        %s213 = smul.addr %s212, 4
        %s214 = scalar_lea.vmem %s0, %s213
        %s215 = ssub.s32 1, %s18
        %s216 = smul.u32 %s19, %s215
        %s217 = smul.u32 32, %s216
      $region32: #{bottleneck_forward.4} parent=27 // pred_fallthru
        _
    $region28: #{bottleneck_forward.4} parent=5 // pred_fallthru
      _
    %p218 = scmp.le.s32.totalorder 1, %s10
    %p219 = scmp.lt.s32.totalorder %s10, 5
    %p220 = pnand %p218, %p219
    %p221 = pneg %p220
    // Predicated region
    $region33: #{bottleneck_forward.4} parent=5 // pred_check
      _
    $region34: #{bottleneck_forward.4} parent=5 // pred_check_branch
      %223 = sbr.rel (%p220) target = $region36
    $region35: #{bottleneck_forward.4} parent=5 // pred_region
      %s224 = ssub.s32 %s10, 1
      %s225 = ssub.s32 1, %s21
      %s226 = smul.u32 %s22, %s225
      %s227 = smul.u32 32, %s226
      %p228 = scmp.lt.s32.totalorder %s227, 63
      %s229 = scalar_select %p228, %s227, 63
      %s230 = smul.addr %s229, 4
      %s231 = scalar_lea.vmem %s0, %s230
      %p232 = pneg %p59
      %p233 = pneg %p56
      %p234 = scmp.lt.s32.totalorder %s20, 0
      %s235 = scalar_select %p234, %s20, 0
      %s236 = smul.addr %s235, 4
      %s237 = scalar_lea.vmem %s1, %s236
      %p238 = pneg %p85
      %p239 = pneg %p82
      %p240 = scmp.lt.s32.totalorder %s20, 0
      %s241 = scalar_select %p240, %s20, 0
      %s242 = scalar_lea.vmem %s2, %s241
      %p243 = pneg %p111
      %p244 = pneg %p108
      %p245 = scmp.lt.s32.totalorder %s20, 0
      %s246 = scalar_select %p245, %s20, 0
      %s247 = scalar_lea.vmem %s3, %s246
      %p248 = pneg %p137
      %p249 = pneg %p134
      %p250 = pneg %p167
      %p251 = pneg %p164
      %s252 = smul.u32 %s22, %s21
      %s253 = smul.u32 32, %s252
      %p254 = scmp.lt.s32.totalorder %s253, 63
      %s255 = scalar_select %p254, %s253, 63
      %p256 = scmp.lt.s32.totalorder %s20, 0
      %s257 = scalar_select %p256, %s20, 0
      %s258 = sadd.s32 %s257, %s255
      %s259 = smul.addr %s258, 4
      %s260 = scalar_lea.vmem %s4, %s259
      %s261 = ssub.s32 1, %s21
      %s262 = smul.u32 %s22, %s261
      %s263 = smul.u32 32, %s262
      %p264 = scmp.lt.s32.totalorder %s263, 63
      %s265 = scalar_select %p264, %s263, 63
      %s266 = smul.addr %s265, 4
      %s267 = scalar_lea.vmem %s0, %s266
      %s268 = ssub.s32 1, %s21
      %s269 = smul.u32 %s22, %s268
      %s270 = smul.u32 32, %s269
      %p271 = scmp.lt.s32.totalorder %s20, 0
      %s272 = scalar_select %p271, %s20, 0
      %s273 = smul.addr %s272, 4
      %s274 = scalar_lea.vmem %s1, %s273
      %p275 = scmp.lt.s32.totalorder %s20, 0
      %s276 = scalar_select %p275, %s20, 0
      %s277 = scalar_lea.vmem %s2, %s276
      %p278 = scmp.lt.s32.totalorder %s20, 0
      %s279 = scalar_select %p278, %s20, 0
      %s280 = scalar_lea.vmem %s3, %s279
      %s281 = smul.u32 %s22, %s21
      %s282 = smul.u32 32, %s281
      %p283 = scmp.lt.s32.totalorder %s282, 63
      %s284 = scalar_select %p283, %s282, 63
      %p285 = scmp.lt.s32.totalorder %s20, 0
      %s286 = scalar_select %p285, %s20, 0
      %s287 = sadd.s32 %s286, %s284
      %s288 = smul.addr %s287, 4
      %s289 = scalar_lea.vmem %s4, %s288
      %s290 = smul.u32 %s22, %s21
      %s291 = smul.u32 32, %s290
      %p293 = scmp.eq.s32.totalorder %s21, 0
      // Predicated region
      $region37: #{bottleneck_forward.4} parent=35 // pred_check
        %p294 = pneg %p293
      $region38: #{bottleneck_forward.4} parent=35 // pred_check_branch
        %296 = sbr.rel (%p294) target = $region40
      $region39: #{bottleneck_forward.4} parent=35 // pred_region
        %p297 = scmp.eq.s32.totalorder %s22, 0
        // Predicated region
        $region41: #{bottleneck_forward.4} parent=39 // pred_check
          %p298 = pneg %p297
        $region42: #{bottleneck_forward.4} parent=39 // pred_check_branch
          %300 = sbr.rel (%p298) target = $region44
        $region43: #{bottleneck_forward.4} parent=39 // pred_region
          %301 = vst [vmem:[#allocation3] sm:$0x1] 0.0
          %302 = vst [vmem:[#allocation4] sm:$0x1] 0.0
        $region44: #{bottleneck_forward.4} parent=39 // pred_fallthru
          _
        %s303 = smul.u32 %s22, 256
        %v304 = vld [vmem:[%s267] sm:$0xf]
        %v305 = vld [vmem:[%s267 + $0x4] sm:$0xf]
        %v306 = vld [vmem:[%s267 + $0x8] sm:$0xf]
        %v307 = vld [vmem:[%s267 + $0xc] sm:$0xf]
        %v308 = vld [vmem:[%s267 + $0x10] sm:$0xf]
        %v309 = vld [vmem:[%s267 + $0x14] sm:$0xf]
        %v310 = vld [vmem:[%s267 + $0x18] sm:$0xf]
        %v311 = vld [vmem:[%s267 + $0x1c] sm:$0xf]
        %v312 = vld [vmem:[%s267 + $0x20] sm:$0xf]
        %v313 = vld [vmem:[%s267 + $0x24] sm:$0xf]
        %v314 = vld [vmem:[%s267 + $0x28] sm:$0xf]
        %v315 = vld [vmem:[%s267 + $0x2c] sm:$0xf]
        %v316 = vld [vmem:[%s267 + $0x30] sm:$0xf]
        %v317 = vld [vmem:[%s267 + $0x34] sm:$0xf]
        %v318 = vld [vmem:[%s267 + $0x38] sm:$0xf]
        %v319 = vld [vmem:[%s267 + $0x3c] sm:$0xf]
        %v320 = vld [vmem:[%s267 + $0x40] sm:$0xf]
        %v321 = vld [vmem:[%s267 + $0x44] sm:$0xf]
        %v322 = vld [vmem:[%s267 + $0x48] sm:$0xf]
        %v323 = vld [vmem:[%s267 + $0x4c] sm:$0xf]
        %v324 = vld [vmem:[%s267 + $0x50] sm:$0xf]
        %v325 = vld [vmem:[%s267 + $0x54] sm:$0xf]
        %v326 = vld [vmem:[%s267 + $0x58] sm:$0xf]
        %v327 = vld [vmem:[%s267 + $0x5c] sm:$0xf]
        %v328 = vld [vmem:[%s267 + $0x60] sm:$0xf]
        %v329 = vld [vmem:[%s267 + $0x64] sm:$0xf]
        %v330 = vld [vmem:[%s267 + $0x68] sm:$0xf]
        %v331 = vld [vmem:[%s267 + $0x6c] sm:$0xf]
        %v332 = vld [vmem:[%s267 + $0x70] sm:$0xf]
        %v333 = vld [vmem:[%s267 + $0x74] sm:$0xf]
        %v334 = vld [vmem:[%s267 + $0x78] sm:$0xf]
        %v335 = vld [vmem:[%s267 + $0x7c] sm:$0xf]
        %v336 = vld [vmem:[%s274] sm:$0xf]
        %v337 = vld [vmem:[%s274 + $0x4] sm:$0xf]
        %v338 = vld [vmem:[%s274 + $0x8] sm:$0xf]
        %v339 = vld [vmem:[%s274 + $0xc] sm:$0xf]
        %v340 = vld [vmem:[%s274 + $0x10] sm:$0xf]
        %v341 = vld [vmem:[%s274 + $0x14] sm:$0xf]
        %v342 = vld [vmem:[%s274 + $0x18] sm:$0xf]
        %v343 = vld [vmem:[%s274 + $0x1c] sm:$0xf]
        %v344 = vld [vmem:[%s274 + $0x20] sm:$0xf]
        %v345 = vld [vmem:[%s274 + $0x24] sm:$0xf]
        %v346 = vld [vmem:[%s274 + $0x28] sm:$0xf]
        %v347 = vld [vmem:[%s274 + $0x2c] sm:$0xf]
        %v348 = vld [vmem:[%s274 + $0x30] sm:$0xf]
        %v349 = vld [vmem:[%s274 + $0x34] sm:$0xf]
        %v350 = vld [vmem:[%s274 + $0x38] sm:$0xf]
        %v351 = vld [vmem:[%s274 + $0x3c] sm:$0xf]
        %v384 = vunpack.c.l.b16 %v304
        %v385 = vunpack.c.l.b16 %v305
        %v386 = vunpack.c.l.b16 %v306
        %v387 = vunpack.c.l.b16 %v307
        %v388 = vunpack.c.l.b16 %v308
        %v389 = vunpack.c.l.b16 %v309
        %v390 = vunpack.c.l.b16 %v310
        %v391 = vunpack.c.l.b16 %v311
        %v392 = vunpack.c.l.b16 %v312
        %v393 = vunpack.c.l.b16 %v313
        %v394 = vunpack.c.l.b16 %v314
        %v395 = vunpack.c.l.b16 %v315
        %v396 = vunpack.c.l.b16 %v316
        %v397 = vunpack.c.l.b16 %v317
        %v398 = vunpack.c.l.b16 %v318
        %v399 = vunpack.c.l.b16 %v319
        %v400 = vunpack.c.l.b16 %v320
        %v401 = vunpack.c.l.b16 %v321
        %v402 = vunpack.c.l.b16 %v322
        %v403 = vunpack.c.l.b16 %v323
        %v404 = vunpack.c.l.b16 %v324
        %v405 = vunpack.c.l.b16 %v325
        %v406 = vunpack.c.l.b16 %v326
        %v407 = vunpack.c.l.b16 %v327
        %v408 = vunpack.c.l.b16 %v328
        %v409 = vunpack.c.l.b16 %v329
        %v410 = vunpack.c.l.b16 %v330
        %v411 = vunpack.c.l.b16 %v331
        %v412 = vunpack.c.l.b16 %v332
        %v413 = vunpack.c.l.b16 %v333
        %v414 = vunpack.c.l.b16 %v334
        %v415 = vunpack.c.l.b16 %v335
        %v416 = vpack.c.b16 %v385, %v384
        %v417 = vpack.c.b16 %v387, %v386
        %v418 = vpack.c.b16 %v389, %v388
        %v419 = vpack.c.b16 %v391, %v390
        %v420 = vpack.c.b16 %v393, %v392
        %v421 = vpack.c.b16 %v395, %v394
        %v422 = vpack.c.b16 %v397, %v396
        %v423 = vpack.c.b16 %v399, %v398
        %v424 = vpack.c.b16 %v401, %v400
        %v425 = vpack.c.b16 %v403, %v402
        %v426 = vpack.c.b16 %v405, %v404
        %v427 = vpack.c.b16 %v407, %v406
        %v428 = vpack.c.b16 %v409, %v408
        %v429 = vpack.c.b16 %v411, %v410
        %v430 = vpack.c.b16 %v413, %v412
        %v431 = vpack.c.b16 %v415, %v414
        %v464 = vunpack.c.l.b16 %v336
        %v465 = vunpack.c.l.b16 %v337
        %v466 = vunpack.c.l.b16 %v338
        %v467 = vunpack.c.l.b16 %v339
        %v468 = vunpack.c.l.b16 %v340
        %v469 = vunpack.c.l.b16 %v341
        %v470 = vunpack.c.l.b16 %v342
        %v471 = vunpack.c.l.b16 %v343
        %v472 = vunpack.c.l.b16 %v344
        %v473 = vunpack.c.l.b16 %v345
        %v474 = vunpack.c.l.b16 %v346
        %v475 = vunpack.c.l.b16 %v347
        %v476 = vunpack.c.l.b16 %v348
        %v477 = vunpack.c.l.b16 %v349
        %v478 = vunpack.c.l.b16 %v350
        %v479 = vunpack.c.l.b16 %v351
        %v480 = vpack.c.b16 %v465, %v464
        %v481 = vpack.c.b16 %v467, %v466
        %v482 = vpack.c.b16 %v469, %v468
        %v483 = vpack.c.b16 %v471, %v470
        %v484 = vpack.c.b16 %v473, %v472
        %v485 = vpack.c.b16 %v475, %v474
        %v486 = vpack.c.b16 %v477, %v476
        %v487 = vpack.c.b16 %v479, %v478
        %496 = vmatprep.subr.bf16.mxu0 0
        %497 = vmatpush1.bf16.msra.mxu0 %v487
        %498 = vmatprep.subr.bf16.mxu0 0
        %499 = vmatpush1.bf16.msra.mxu0 %v486
        %500 = vmatprep.subr.bf16.mxu0 0
        %501 = vmatpush1.bf16.msra.mxu0 %v485
        %502 = vmatprep.subr.bf16.mxu0 0
        %503 = vmatpush1.bf16.msra.mxu0 %v484
        %504 = vmatprep.subr.bf16.mxu0 0
        %505 = vmatpush1.bf16.msra.mxu0 %v483
        %506 = vmatprep.subr.bf16.mxu0 0
        %507 = vmatpush1.bf16.msra.mxu0 %v482
        %508 = vmatprep.subr.bf16.mxu0 0
        %509 = vmatpush1.bf16.msra.mxu0 %v481
        %510 = vmatprep.subr.bf16.mxu0 0
        %511 = vmatpush1.bf16.msra.mxu0 %v480
        %512 = vmatprep.subr.bf16.mxu0 0
        %513 = vmatpush2.bf16.msra.mxu0 0
        %514 = vmatprep.subr.bf16.mxu0 0
        %515 = vmatpush2.bf16.msra.mxu0 0
        %516 = vmatprep.subr.bf16.mxu0 0
        %517 = vmatpush2.bf16.msra.mxu0 0
        %518 = vmatprep.subr.bf16.mxu0 0
        %519 = vmatpush2.bf16.msra.mxu0 0
        %520 = vmatprep.subr.bf16.mxu0 0
        %521 = vmatpush2.bf16.msra.mxu0 0
        %522 = vmatprep.subr.bf16.mxu0 0
        %523 = vmatpush2.bf16.msra.mxu0 0
        %524 = vmatprep.subr.bf16.mxu0 0
        %525 = vmatpush2.bf16.msra.mxu0 0
        %526 = vmatprep.subr.bf16.mxu0 0
        %527 = vmatpush2.bf16.msra.mxu0 0
        %528 = vmatprep.mubr.bf16.mxu0 0
        %529 = vmatmul.mubr.bf16.gmra.mxu0 %v416
        %v530 = vpop.f32.mrf.mxu0
        %v531 = vadd.f32 0.0, %v530
        %v532 = vpop.f32.mrf.mxu0
        %v533 = vpop.f32.mrf.mxu0
        %v534 = vadd.f32 0.0, %v533
        %v535 = vpop.f32.mrf.mxu0
        %536 = vmatprep.mubr.bf16.mxu0 0
        %537 = vmatmul.mubr.bf16.gmra.mxu0 %v417
        %v538 = vpop.f32.mrf.mxu0
        %v539 = vadd.f32 0.0, %v538
        %v540 = vpop.f32.mrf.mxu0
        %v541 = vpop.f32.mrf.mxu0
        %v542 = vadd.f32 0.0, %v541
        %v543 = vpop.f32.mrf.mxu0
        %544 = vmatprep.mubr.bf16.mxu0 0
        %545 = vmatmul.mubr.bf16.gmra.mxu0 %v418
        %v546 = vpop.f32.mrf.mxu0
        %v547 = vadd.f32 0.0, %v546
        %v548 = vpop.f32.mrf.mxu0
        %v549 = vpop.f32.mrf.mxu0
        %v550 = vadd.f32 0.0, %v549
        %v551 = vpop.f32.mrf.mxu0
        %552 = vmatprep.mubr.bf16.mxu0 0
        %553 = vmatmul.mubr.bf16.gmra.mxu0 %v419
        %v554 = vpop.f32.mrf.mxu0
        %v555 = vadd.f32 0.0, %v554
        %v556 = vpop.f32.mrf.mxu0
        %v557 = vpop.f32.mrf.mxu0
        %v558 = vadd.f32 0.0, %v557
        %v559 = vpop.f32.mrf.mxu0
        %560 = vmatprep.mubr.bf16.mxu0 0
        %561 = vmatmul.mubr.bf16.gmra.mxu0 %v420
        %v562 = vpop.f32.mrf.mxu0
        %v563 = vadd.f32 0.0, %v562
        %v564 = vpop.f32.mrf.mxu0
        %v565 = vpop.f32.mrf.mxu0
        %v566 = vadd.f32 0.0, %v565
        %v567 = vpop.f32.mrf.mxu0
        %568 = vmatprep.mubr.bf16.mxu0 0
        %569 = vmatmul.mubr.bf16.gmra.mxu0 %v421
        %v570 = vpop.f32.mrf.mxu0
        %v571 = vadd.f32 0.0, %v570
        %v572 = vpop.f32.mrf.mxu0
        %v573 = vpop.f32.mrf.mxu0
        %v574 = vadd.f32 0.0, %v573
        %v575 = vpop.f32.mrf.mxu0
        %576 = vmatprep.mubr.bf16.mxu0 0
        %577 = vmatmul.mubr.bf16.gmra.mxu0 %v422
        %v578 = vpop.f32.mrf.mxu0
        %v579 = vadd.f32 0.0, %v578
        %v580 = vpop.f32.mrf.mxu0
        %v581 = vpop.f32.mrf.mxu0
        %v582 = vadd.f32 0.0, %v581
        %v583 = vpop.f32.mrf.mxu0
        %584 = vmatprep.mubr.bf16.mxu0 0
        %585 = vmatmul.mubr.bf16.gmra.mxu0 %v423
        %v586 = vpop.f32.mrf.mxu0
        %v587 = vadd.f32 0.0, %v586
        %v588 = vpop.f32.mrf.mxu0
        %v589 = vpop.f32.mrf.mxu0
        %v590 = vadd.f32 0.0, %v589
        %v591 = vpop.f32.mrf.mxu0
        %592 = vmatprep.mubr.bf16.mxu0 0
        %593 = vmatmul.mubr.bf16.gmra.mxu0 %v424
        %v594 = vpop.f32.mrf.mxu0
        %v595 = vadd.f32 0.0, %v594
        %v596 = vpop.f32.mrf.mxu0
        %v597 = vpop.f32.mrf.mxu0
        %v598 = vadd.f32 0.0, %v597
        %v599 = vpop.f32.mrf.mxu0
        %600 = vmatprep.mubr.bf16.mxu0 0
        %601 = vmatmul.mubr.bf16.gmra.mxu0 %v425
        %v602 = vpop.f32.mrf.mxu0
        %v603 = vadd.f32 0.0, %v602
        %v604 = vpop.f32.mrf.mxu0
        %v605 = vpop.f32.mrf.mxu0
        %v606 = vadd.f32 0.0, %v605
        %v607 = vpop.f32.mrf.mxu0
        %608 = vmatprep.mubr.bf16.mxu0 0
        %609 = vmatmul.mubr.bf16.gmra.mxu0 %v426
        %v610 = vpop.f32.mrf.mxu0
        %v611 = vadd.f32 0.0, %v610
        %v612 = vpop.f32.mrf.mxu0
        %v613 = vpop.f32.mrf.mxu0
        %v614 = vadd.f32 0.0, %v613
        %v615 = vpop.f32.mrf.mxu0
        %616 = vmatprep.mubr.bf16.mxu0 0
        %617 = vmatmul.mubr.bf16.gmra.mxu0 %v427
        %v618 = vpop.f32.mrf.mxu0
        %v619 = vadd.f32 0.0, %v618
        %v620 = vpop.f32.mrf.mxu0
        %v621 = vpop.f32.mrf.mxu0
        %v622 = vadd.f32 0.0, %v621
        %v623 = vpop.f32.mrf.mxu0
        %624 = vmatprep.mubr.bf16.mxu0 0
        %625 = vmatmul.mubr.bf16.gmra.mxu0 %v428
        %v626 = vpop.f32.mrf.mxu0
        %v627 = vadd.f32 0.0, %v626
        %v628 = vpop.f32.mrf.mxu0
        %v629 = vpop.f32.mrf.mxu0
        %v630 = vadd.f32 0.0, %v629
        %v631 = vpop.f32.mrf.mxu0
        %632 = vmatprep.mubr.bf16.mxu0 0
        %633 = vmatmul.mubr.bf16.gmra.mxu0 %v429
        %v634 = vpop.f32.mrf.mxu0
        %v635 = vadd.f32 0.0, %v634
        %v636 = vpop.f32.mrf.mxu0
        %v637 = vpop.f32.mrf.mxu0
        %v638 = vadd.f32 0.0, %v637
        %v639 = vpop.f32.mrf.mxu0
        %640 = vmatprep.mubr.bf16.mxu0 0
        %641 = vmatmul.mubr.bf16.gmra.mxu0 %v430
        %v642 = vpop.f32.mrf.mxu0
        %v643 = vadd.f32 0.0, %v642
        %v644 = vpop.f32.mrf.mxu0
        %v645 = vpop.f32.mrf.mxu0
        %v646 = vadd.f32 0.0, %v645
        %v647 = vpop.f32.mrf.mxu0
        %648 = vmatprep.mubr.bf16.mxu0 0
        %649 = vmatmul.mubr.bf16.gmra.mxu0 %v431
        %v650 = vpop.f32.mrf.mxu0
        %v651 = vadd.f32 0.0, %v650
        %v652 = vpop.f32.mrf.mxu0
        %v653 = vpop.f32.mrf.mxu0
        %v654 = vadd.f32 0.0, %v653
        %v655 = vpop.f32.mrf.mxu0
        %656 = vdwg.mxu0
        %s657 = scalar_lea.vmem [#allocation2], %s303
        %658 = vst [vmem:[%s657] sm:$0xff] %v531
        %659 = vst [vmem:[%s657 + $0x8] sm:$0xff] %v534
        %660 = vst [vmem:[%s657 + $0x10] sm:$0xff] %v539
        %661 = vst [vmem:[%s657 + $0x18] sm:$0xff] %v542
        %662 = vst [vmem:[%s657 + $0x20] sm:$0xff] %v547
        %663 = vst [vmem:[%s657 + $0x28] sm:$0xff] %v550
        %664 = vst [vmem:[%s657 + $0x30] sm:$0xff] %v555
        %665 = vst [vmem:[%s657 + $0x38] sm:$0xff] %v558
        %666 = vst [vmem:[%s657 + $0x40] sm:$0xff] %v563
        %667 = vst [vmem:[%s657 + $0x48] sm:$0xff] %v566
        %668 = vst [vmem:[%s657 + $0x50] sm:$0xff] %v571
        %669 = vst [vmem:[%s657 + $0x58] sm:$0xff] %v574
        %670 = vst [vmem:[%s657 + $0x60] sm:$0xff] %v579
        %671 = vst [vmem:[%s657 + $0x68] sm:$0xff] %v582
        %672 = vst [vmem:[%s657 + $0x70] sm:$0xff] %v587
        %673 = vst [vmem:[%s657 + $0x78] sm:$0xff] %v590
        %674 = vst [vmem:[%s657 + $0x80] sm:$0xff] %v595
        %675 = vst [vmem:[%s657 + $0x88] sm:$0xff] %v598
        %676 = vst [vmem:[%s657 + $0x90] sm:$0xff] %v603
        %677 = vst [vmem:[%s657 + $0x98] sm:$0xff] %v606
        %678 = vst [vmem:[%s657 + $0xa0] sm:$0xff] %v611
        %679 = vst [vmem:[%s657 + $0xa8] sm:$0xff] %v614
        %680 = vst [vmem:[%s657 + $0xb0] sm:$0xff] %v619
        %681 = vst [vmem:[%s657 + $0xb8] sm:$0xff] %v622
        %682 = vst [vmem:[%s657 + $0xc0] sm:$0xff] %v627
        %683 = vst [vmem:[%s657 + $0xc8] sm:$0xff] %v630
        %684 = vst [vmem:[%s657 + $0xd0] sm:$0xff] %v635
        %685 = vst [vmem:[%s657 + $0xd8] sm:$0xff] %v638
        %686 = vst [vmem:[%s657 + $0xe0] sm:$0xff] %v643
        %687 = vst [vmem:[%s657 + $0xe8] sm:$0xff] %v646
        %688 = vst [vmem:[%s657 + $0xf0] sm:$0xff] %v651
        %689 = vst [vmem:[%s657 + $0xf8] sm:$0xff] %v654
        %v690 = vld [vmem:[%s657] sm:$0xff]
        %v691 = vld [vmem:[%s657 + $0x8] sm:$0xff]
        %v692 = vld [vmem:[%s657 + $0x10] sm:$0xff]
        %v693 = vld [vmem:[%s657 + $0x18] sm:$0xff]
        %v694 = vld [vmem:[%s657 + $0x20] sm:$0xff]
        %v695 = vld [vmem:[%s657 + $0x28] sm:$0xff]
        %v696 = vld [vmem:[%s657 + $0x30] sm:$0xff]
        %v697 = vld [vmem:[%s657 + $0x38] sm:$0xff]
        %v698 = vld [vmem:[%s657 + $0x40] sm:$0xff]
        %v699 = vld [vmem:[%s657 + $0x48] sm:$0xff]
        %v700 = vld [vmem:[%s657 + $0x50] sm:$0xff]
        %v701 = vld [vmem:[%s657 + $0x58] sm:$0xff]
        %v702 = vld [vmem:[%s657 + $0x60] sm:$0xff]
        %v703 = vld [vmem:[%s657 + $0x68] sm:$0xff]
        %v704 = vld [vmem:[%s657 + $0x70] sm:$0xff]
        %v705 = vld [vmem:[%s657 + $0x78] sm:$0xff]
        %v706 = vadd.f32 %v690, %v691
        %v707 = vadd.f32 %v706, %v692
        %v708 = vadd.f32 %v707, %v693
        %v709 = vadd.f32 %v708, %v694
        %v710 = vadd.f32 %v709, %v695
        %v711 = vadd.f32 %v710, %v696
        %v712 = vadd.f32 %v711, %v697
        %v713 = vadd.f32 %v712, %v698
        %v714 = vadd.f32 %v713, %v699
        %v715 = vadd.f32 %v714, %v700
        %v716 = vadd.f32 %v715, %v701
        %v717 = vadd.f32 %v716, %v702
        %v718 = vadd.f32 %v717, %v703
        %v719 = vadd.f32 %v718, %v704
        %v720 = vadd.f32 %v719, %v705
        %v721 = vrot.slane %v720, 4
        %v722 = vadd.f32 %v720, %v721
        %v723 = vrot.slane %v722, 2
        %v724 = vadd.f32 %v722, %v723
        %v725 = vrot.slane %v724, 1
        %v726 = vadd.f32 %v724, %v725
        %v727 = vadd.f32 %v726, 0.0
        %v728 = vmul.f32 %v690, %v690
        %v729 = vmul.f32 %v691, %v691
        %v730 = vmul.f32 %v692, %v692
        %v731 = vmul.f32 %v693, %v693
        %v732 = vmul.f32 %v694, %v694
        %v733 = vmul.f32 %v695, %v695
        %v734 = vmul.f32 %v696, %v696
        %v735 = vmul.f32 %v697, %v697
        %v736 = vmul.f32 %v698, %v698
        %v737 = vmul.f32 %v699, %v699
        %v738 = vmul.f32 %v700, %v700
        %v739 = vmul.f32 %v701, %v701
        %v740 = vmul.f32 %v702, %v702
        %v741 = vmul.f32 %v703, %v703
        %v742 = vmul.f32 %v704, %v704
        %v743 = vmul.f32 %v705, %v705
        %v744 = vadd.f32 %v728, %v729
        %v745 = vadd.f32 %v744, %v730
        %v746 = vadd.f32 %v745, %v731
        %v747 = vadd.f32 %v746, %v732
        %v748 = vadd.f32 %v747, %v733
        %v749 = vadd.f32 %v748, %v734
        %v750 = vadd.f32 %v749, %v735
        %v751 = vadd.f32 %v750, %v736
        %v752 = vadd.f32 %v751, %v737
        %v753 = vadd.f32 %v752, %v738
        %v754 = vadd.f32 %v753, %v739
        %v755 = vadd.f32 %v754, %v740
        %v756 = vadd.f32 %v755, %v741
        %v757 = vadd.f32 %v756, %v742
        %v758 = vadd.f32 %v757, %v743
        %v759 = vrot.slane %v758, 4
        %v760 = vadd.f32 %v758, %v759
        %v761 = vrot.slane %v760, 2
        %v762 = vadd.f32 %v760, %v761
        %v763 = vrot.slane %v762, 1
        %v764 = vadd.f32 %v762, %v763
        %v765 = vadd.f32 %v764, 0.0
        %s766 = sadd.s32 %s303, 128
        %s767 = scalar_lea.vmem [#allocation2], %s766
        %v768 = vld [vmem:[%s767] sm:$0xff]
        %v769 = vld [vmem:[%s767 + $0x8] sm:$0xff]
        %v770 = vld [vmem:[%s767 + $0x10] sm:$0xff]
        %v771 = vld [vmem:[%s767 + $0x18] sm:$0xff]
        %v772 = vld [vmem:[%s767 + $0x20] sm:$0xff]
        %v773 = vld [vmem:[%s767 + $0x28] sm:$0xff]
        %v774 = vld [vmem:[%s767 + $0x30] sm:$0xff]
        %v775 = vld [vmem:[%s767 + $0x38] sm:$0xff]
        %v776 = vld [vmem:[%s767 + $0x40] sm:$0xff]
        %v777 = vld [vmem:[%s767 + $0x48] sm:$0xff]
        %v778 = vld [vmem:[%s767 + $0x50] sm:$0xff]
        %v779 = vld [vmem:[%s767 + $0x58] sm:$0xff]
        %v780 = vld [vmem:[%s767 + $0x60] sm:$0xff]
        %v781 = vld [vmem:[%s767 + $0x68] sm:$0xff]
        %v782 = vld [vmem:[%s767 + $0x70] sm:$0xff]
        %v783 = vld [vmem:[%s767 + $0x78] sm:$0xff]
        %v784 = vadd.f32 %v768, %v769
        %v785 = vadd.f32 %v784, %v770
        %v786 = vadd.f32 %v785, %v771
        %v787 = vadd.f32 %v786, %v772
        %v788 = vadd.f32 %v787, %v773
        %v789 = vadd.f32 %v788, %v774
        %v790 = vadd.f32 %v789, %v775
        %v791 = vadd.f32 %v790, %v776
        %v792 = vadd.f32 %v791, %v777
        %v793 = vadd.f32 %v792, %v778
        %v794 = vadd.f32 %v793, %v779
        %v795 = vadd.f32 %v794, %v780
        %v796 = vadd.f32 %v795, %v781
        %v797 = vadd.f32 %v796, %v782
        %v798 = vadd.f32 %v797, %v783
        %v799 = vrot.slane %v798, 4
        %v800 = vadd.f32 %v798, %v799
        %v801 = vrot.slane %v800, 2
        %v802 = vadd.f32 %v800, %v801
        %v803 = vrot.slane %v802, 1
        %v804 = vadd.f32 %v802, %v803
        %v805 = vadd.f32 %v727, %v804
        %v806 = vmul.f32 %v768, %v768
        %v807 = vmul.f32 %v769, %v769
        %v808 = vmul.f32 %v770, %v770
        %v809 = vmul.f32 %v771, %v771
        %v810 = vmul.f32 %v772, %v772
        %v811 = vmul.f32 %v773, %v773
        %v812 = vmul.f32 %v774, %v774
        %v813 = vmul.f32 %v775, %v775
        %v814 = vmul.f32 %v776, %v776
        %v815 = vmul.f32 %v777, %v777
        %v816 = vmul.f32 %v778, %v778
        %v817 = vmul.f32 %v779, %v779
        %v818 = vmul.f32 %v780, %v780
        %v819 = vmul.f32 %v781, %v781
        %v820 = vmul.f32 %v782, %v782
        %v821 = vmul.f32 %v783, %v783
        %v822 = vadd.f32 %v806, %v807
        %v823 = vadd.f32 %v822, %v808
        %v824 = vadd.f32 %v823, %v809
        %v825 = vadd.f32 %v824, %v810
        %v826 = vadd.f32 %v825, %v811
        %v827 = vadd.f32 %v826, %v812
        %v828 = vadd.f32 %v827, %v813
        %v829 = vadd.f32 %v828, %v814
        %v830 = vadd.f32 %v829, %v815
        %v831 = vadd.f32 %v830, %v816
        %v832 = vadd.f32 %v831, %v817
        %v833 = vadd.f32 %v832, %v818
        %v834 = vadd.f32 %v833, %v819
        %v835 = vadd.f32 %v834, %v820
        %v836 = vadd.f32 %v835, %v821
        %v837 = vrot.slane %v836, 4
        %v838 = vadd.f32 %v836, %v837
        %v839 = vrot.slane %v838, 2
        %v840 = vadd.f32 %v838, %v839
        %v841 = vrot.slane %v840, 1
        %v842 = vadd.f32 %v840, %v841
        %v843 = vadd.f32 %v765, %v842
        %v844 = vld [vmem:[#allocation3] sm:$0x1]
        %v845 = vadd.f32 %v844, %v805
        %846 = vst [vmem:[#allocation3] sm:$0x1] %v845
        %v847 = vld [vmem:[#allocation4] sm:$0x1]
        %v848 = vadd.f32 %v847, %v843
        %849 = vst [vmem:[#allocation4] sm:$0x1] %v848
      $region40: #{bottleneck_forward.4} parent=35 // pred_fallthru
        _
      %p850 = scmp.eq.s32.totalorder %s21, 1
      // Predicated region
      $region45: #{bottleneck_forward.4} parent=35 // pred_check
        %p851 = pneg %p850
      $region46: #{bottleneck_forward.4} parent=35 // pred_check_branch
        %853 = sbr.rel (%p851) target = $region48
      $region47: #{bottleneck_forward.4} parent=35 // pred_region
        %p854 = scmp.eq.s32.totalorder %s22, 0
        // Predicated region
        $region49: #{bottleneck_forward.4} parent=47 // pred_check
          %p855 = pneg %p854
        $region50: #{bottleneck_forward.4} parent=47 // pred_check_branch
          %857 = sbr.rel (%p855) target = $region52
        $region51: #{bottleneck_forward.4} parent=47 // pred_region
          %v858 = vld [vmem:[#allocation3] sm:$0x1]
          %v859 = vmul.f32 %v858, 0.001953125
          %v860 = vld [vmem:[#allocation4] sm:$0x1]
          %v861 = vmul.f32 %v860, 0.001953125
          %v862 = vmul.f32 %v859, %v859
          %v863 = vsub.f32 %v861, %v862
          %v864 = vmax.f32 %v863, 0.0
          %v865 = vld [vmem:[%s277] sm:$0x1]
          %v866 = vadd.f32 %v864, 1e-05
          %v867 = vrsqrt.pop %v866
          %v868 = vmul.f32 %v865, %v867
          %869 = vst [vmem:[#allocation5] sm:$0x1] %v868
          %v870 = vld [vmem:[%s280] sm:$0x1]
          %v871 = vmul.f32 %v859, %v868
          %v872 = vsub.f32 %v870, %v871
          %873 = vst [vmem:[#allocation6] sm:$0x1] %v872
        $region52: #{bottleneck_forward.4} parent=47 // pred_fallthru
          _
        %s874 = smul.u32 %s22, 256
        %s875 = scalar_lea.vmem [#allocation2], %s874
        %v876 = vld [vmem:[%s875] sm:$0xff]
        %v877 = vld [vmem:[%s875 + $0x8] sm:$0xff]
        %v878 = vld [vmem:[%s875 + $0x10] sm:$0xff]
        %v879 = vld [vmem:[%s875 + $0x18] sm:$0xff]
        %v880 = vld [vmem:[%s875 + $0x20] sm:$0xff]
        %v881 = vld [vmem:[%s875 + $0x28] sm:$0xff]
        %v882 = vld [vmem:[%s875 + $0x30] sm:$0xff]
        %v883 = vld [vmem:[%s875 + $0x38] sm:$0xff]
        %v884 = vld [vmem:[%s875 + $0x40] sm:$0xff]
        %v885 = vld [vmem:[%s875 + $0x48] sm:$0xff]
        %v886 = vld [vmem:[%s875 + $0x50] sm:$0xff]
        %v887 = vld [vmem:[%s875 + $0x58] sm:$0xff]
        %v888 = vld [vmem:[%s875 + $0x60] sm:$0xff]
        %v889 = vld [vmem:[%s875 + $0x68] sm:$0xff]
        %v890 = vld [vmem:[%s875 + $0x70] sm:$0xff]
        %v891 = vld [vmem:[%s875 + $0x78] sm:$0xff]
        %v892 = vld [vmem:[%s875 + $0x80] sm:$0xff]
        %v893 = vld [vmem:[%s875 + $0x88] sm:$0xff]
        %v894 = vld [vmem:[%s875 + $0x90] sm:$0xff]
        %v895 = vld [vmem:[%s875 + $0x98] sm:$0xff]
        %v896 = vld [vmem:[%s875 + $0xa0] sm:$0xff]
        %v897 = vld [vmem:[%s875 + $0xa8] sm:$0xff]
        %v898 = vld [vmem:[%s875 + $0xb0] sm:$0xff]
        %v899 = vld [vmem:[%s875 + $0xb8] sm:$0xff]
        %v900 = vld [vmem:[%s875 + $0xc0] sm:$0xff]
        %v901 = vld [vmem:[%s875 + $0xc8] sm:$0xff]
        %v902 = vld [vmem:[%s875 + $0xd0] sm:$0xff]
        %v903 = vld [vmem:[%s875 + $0xd8] sm:$0xff]
        %v904 = vld [vmem:[%s875 + $0xe0] sm:$0xff]
        %v905 = vld [vmem:[%s875 + $0xe8] sm:$0xff]
        %v906 = vld [vmem:[%s875 + $0xf0] sm:$0xff]
        %v907 = vld [vmem:[%s875 + $0xf8] sm:$0xff]
        %v908 = vld [vmem:[#allocation5] sm:$0x1]
        %v910 = vlaneseq
        %v911 = vshrl.u32 %v910, 7
        %v912 = vsub.s32 0, %v911
        %v913 = vrot.slane %v908, %v912
        %v915 = vmul.f32 %v876, %v913
        %v916 = vmul.f32 %v877, %v913
        %v917 = vmul.f32 %v878, %v913
        %v918 = vmul.f32 %v879, %v913
        %v919 = vmul.f32 %v880, %v913
        %v920 = vmul.f32 %v881, %v913
        %v921 = vmul.f32 %v882, %v913
        %v922 = vmul.f32 %v883, %v913
        %v923 = vmul.f32 %v884, %v913
        %v924 = vmul.f32 %v885, %v913
        %v925 = vmul.f32 %v886, %v913
        %v926 = vmul.f32 %v887, %v913
        %v927 = vmul.f32 %v888, %v913
        %v928 = vmul.f32 %v889, %v913
        %v929 = vmul.f32 %v890, %v913
        %v930 = vmul.f32 %v891, %v913
        %v931 = vmul.f32 %v892, %v913
        %v932 = vmul.f32 %v893, %v913
        %v933 = vmul.f32 %v894, %v913
        %v934 = vmul.f32 %v895, %v913
        %v935 = vmul.f32 %v896, %v913
        %v936 = vmul.f32 %v897, %v913
        %v937 = vmul.f32 %v898, %v913
        %v938 = vmul.f32 %v899, %v913
        %v939 = vmul.f32 %v900, %v913
        %v940 = vmul.f32 %v901, %v913
        %v941 = vmul.f32 %v902, %v913
        %v942 = vmul.f32 %v903, %v913
        %v943 = vmul.f32 %v904, %v913
        %v944 = vmul.f32 %v905, %v913
        %v945 = vmul.f32 %v906, %v913
        %v946 = vmul.f32 %v907, %v913
        %v947 = vld [vmem:[#allocation6] sm:$0x1]
        %v949 = vlaneseq
        %v950 = vshrl.u32 %v949, 7
        %v951 = vsub.s32 0, %v950
        %v952 = vrot.slane %v947, %v951
        %v954 = vadd.f32 %v915, %v952
        %v955 = vadd.f32 %v916, %v952
        %v956 = vadd.f32 %v917, %v952
        %v957 = vadd.f32 %v918, %v952
        %v958 = vadd.f32 %v919, %v952
        %v959 = vadd.f32 %v920, %v952
        %v960 = vadd.f32 %v921, %v952
        %v961 = vadd.f32 %v922, %v952
        %v962 = vadd.f32 %v923, %v952
        %v963 = vadd.f32 %v924, %v952
        %v964 = vadd.f32 %v925, %v952
        %v965 = vadd.f32 %v926, %v952
        %v966 = vadd.f32 %v927, %v952
        %v967 = vadd.f32 %v928, %v952
        %v968 = vadd.f32 %v929, %v952
        %v969 = vadd.f32 %v930, %v952
        %v970 = vadd.f32 %v931, %v952
        %v971 = vadd.f32 %v932, %v952
        %v972 = vadd.f32 %v933, %v952
        %v973 = vadd.f32 %v934, %v952
        %v974 = vadd.f32 %v935, %v952
        %v975 = vadd.f32 %v936, %v952
        %v976 = vadd.f32 %v937, %v952
        %v977 = vadd.f32 %v938, %v952
        %v978 = vadd.f32 %v939, %v952
        %v979 = vadd.f32 %v940, %v952
        %v980 = vadd.f32 %v941, %v952
        %v981 = vadd.f32 %v942, %v952
        %v982 = vadd.f32 %v943, %v952
        %v983 = vadd.f32 %v944, %v952
        %v984 = vadd.f32 %v945, %v952
        %v985 = vadd.f32 %v946, %v952
        %v986 = vmax.f32 %v954, 0.0
        %v987 = vmax.f32 %v955, 0.0
        %v988 = vmax.f32 %v956, 0.0
        %v989 = vmax.f32 %v957, 0.0
        %v990 = vmax.f32 %v958, 0.0
        %v991 = vmax.f32 %v959, 0.0
        %v992 = vmax.f32 %v960, 0.0
        %v993 = vmax.f32 %v961, 0.0
        %v994 = vmax.f32 %v962, 0.0
        %v995 = vmax.f32 %v963, 0.0
        %v996 = vmax.f32 %v964, 0.0
        %v997 = vmax.f32 %v965, 0.0
        %v998 = vmax.f32 %v966, 0.0
        %v999 = vmax.f32 %v967, 0.0
        %v1000 = vmax.f32 %v968, 0.0
        %v1001 = vmax.f32 %v969, 0.0
        %v1002 = vmax.f32 %v970, 0.0
        %v1003 = vmax.f32 %v971, 0.0
        %v1004 = vmax.f32 %v972, 0.0
        %v1005 = vmax.f32 %v973, 0.0
        %v1006 = vmax.f32 %v974, 0.0
        %v1007 = vmax.f32 %v975, 0.0
        %v1008 = vmax.f32 %v976, 0.0
        %v1009 = vmax.f32 %v977, 0.0
        %v1010 = vmax.f32 %v978, 0.0
        %v1011 = vmax.f32 %v979, 0.0
        %v1012 = vmax.f32 %v980, 0.0
        %v1013 = vmax.f32 %v981, 0.0
        %v1014 = vmax.f32 %v982, 0.0
        %v1015 = vmax.f32 %v983, 0.0
        %v1016 = vmax.f32 %v984, 0.0
        %v1017 = vmax.f32 %v985, 0.0
        %v1018 = vpack.c.bf16 %v987, %v986
        %v1019 = vpack.c.bf16 %v989, %v988
        %v1020 = vpack.c.bf16 %v991, %v990
        %v1021 = vpack.c.bf16 %v993, %v992
        %v1022 = vpack.c.bf16 %v995, %v994
        %v1023 = vpack.c.bf16 %v997, %v996
        %v1024 = vpack.c.bf16 %v999, %v998
        %v1025 = vpack.c.bf16 %v1001, %v1000
        %v1026 = vpack.c.bf16 %v1003, %v1002
        %v1027 = vpack.c.bf16 %v1005, %v1004
        %v1028 = vpack.c.bf16 %v1007, %v1006
        %v1029 = vpack.c.bf16 %v1009, %v1008
        %v1030 = vpack.c.bf16 %v1011, %v1010
        %v1031 = vpack.c.bf16 %v1013, %v1012
        %v1032 = vpack.c.bf16 %v1015, %v1014
        %v1033 = vpack.c.bf16 %v1017, %v1016
        %v1050 = vunpack.c.l.b16 %v1018
        %v1051 = vunpack.c.h.b16 %v1018
        %v1052 = vunpack.c.l.b16 %v1019
        %v1053 = vunpack.c.h.b16 %v1019
        %v1054 = vunpack.c.l.b16 %v1020
        %v1055 = vunpack.c.h.b16 %v1020
        %v1056 = vunpack.c.l.b16 %v1021
        %v1057 = vunpack.c.h.b16 %v1021
        %v1058 = vunpack.c.l.b16 %v1022
        %v1059 = vunpack.c.h.b16 %v1022
        %v1060 = vunpack.c.l.b16 %v1023
        %v1061 = vunpack.c.h.b16 %v1023
        %v1062 = vunpack.c.l.b16 %v1024
        %v1063 = vunpack.c.h.b16 %v1024
        %v1064 = vunpack.c.l.b16 %v1025
        %v1065 = vunpack.c.h.b16 %v1025
        %v1066 = vunpack.c.l.b16 %v1026
        %v1067 = vunpack.c.h.b16 %v1026
        %v1068 = vunpack.c.l.b16 %v1027
        %v1069 = vunpack.c.h.b16 %v1027
        %v1070 = vunpack.c.l.b16 %v1028
        %v1071 = vunpack.c.h.b16 %v1028
        %v1072 = vunpack.c.l.b16 %v1029
        %v1073 = vunpack.c.h.b16 %v1029
        %v1074 = vunpack.c.l.b16 %v1030
        %v1075 = vunpack.c.h.b16 %v1030
        %v1076 = vunpack.c.l.b16 %v1031
        %v1077 = vunpack.c.h.b16 %v1031
        %v1078 = vunpack.c.l.b16 %v1032
        %v1079 = vunpack.c.h.b16 %v1032
        %v1080 = vunpack.c.l.b16 %v1033
        %v1081 = vunpack.c.h.b16 %v1033
        %v1082 = vpack.c.b16 %v1050, %v1050
        %v1083 = vpack.c.b16 %v1051, %v1051
        %v1084 = vpack.c.b16 %v1052, %v1052
        %v1085 = vpack.c.b16 %v1053, %v1053
        %v1086 = vpack.c.b16 %v1054, %v1054
        %v1087 = vpack.c.b16 %v1055, %v1055
        %v1088 = vpack.c.b16 %v1056, %v1056
        %v1089 = vpack.c.b16 %v1057, %v1057
        %v1090 = vpack.c.b16 %v1058, %v1058
        %v1091 = vpack.c.b16 %v1059, %v1059
        %v1092 = vpack.c.b16 %v1060, %v1060
        %v1093 = vpack.c.b16 %v1061, %v1061
        %v1094 = vpack.c.b16 %v1062, %v1062
        %v1095 = vpack.c.b16 %v1063, %v1063
        %v1096 = vpack.c.b16 %v1064, %v1064
        %v1097 = vpack.c.b16 %v1065, %v1065
        %v1098 = vpack.c.b16 %v1066, %v1066
        %v1099 = vpack.c.b16 %v1067, %v1067
        %v1100 = vpack.c.b16 %v1068, %v1068
        %v1101 = vpack.c.b16 %v1069, %v1069
        %v1102 = vpack.c.b16 %v1070, %v1070
        %v1103 = vpack.c.b16 %v1071, %v1071
        %v1104 = vpack.c.b16 %v1072, %v1072
        %v1105 = vpack.c.b16 %v1073, %v1073
        %v1106 = vpack.c.b16 %v1074, %v1074
        %v1107 = vpack.c.b16 %v1075, %v1075
        %v1108 = vpack.c.b16 %v1076, %v1076
        %v1109 = vpack.c.b16 %v1077, %v1077
        %v1110 = vpack.c.b16 %v1078, %v1078
        %v1111 = vpack.c.b16 %v1079, %v1079
        %v1112 = vpack.c.b16 %v1080, %v1080
        %v1113 = vpack.c.b16 %v1081, %v1081
        %1146 = vst [vmem:[%s289] sm:$0xf] %v1082
        %1147 = vst [vmem:[%s289 + $0x4] sm:$0xf] %v1083
        %1148 = vst [vmem:[%s289 + $0x8] sm:$0xf] %v1084
        %1149 = vst [vmem:[%s289 + $0xc] sm:$0xf] %v1085
        %1150 = vst [vmem:[%s289 + $0x10] sm:$0xf] %v1086
        %1151 = vst [vmem:[%s289 + $0x14] sm:$0xf] %v1087
        %1152 = vst [vmem:[%s289 + $0x18] sm:$0xf] %v1088
        %1153 = vst [vmem:[%s289 + $0x1c] sm:$0xf] %v1089
        %1154 = vst [vmem:[%s289 + $0x20] sm:$0xf] %v1090
        %1155 = vst [vmem:[%s289 + $0x24] sm:$0xf] %v1091
        %1156 = vst [vmem:[%s289 + $0x28] sm:$0xf] %v1092
        %1157 = vst [vmem:[%s289 + $0x2c] sm:$0xf] %v1093
        %1158 = vst [vmem:[%s289 + $0x30] sm:$0xf] %v1094
        %1159 = vst [vmem:[%s289 + $0x34] sm:$0xf] %v1095
        %1160 = vst [vmem:[%s289 + $0x38] sm:$0xf] %v1096
        %1161 = vst [vmem:[%s289 + $0x3c] sm:$0xf] %v1097
        %1162 = vst [vmem:[%s289 + $0x40] sm:$0xf] %v1098
        %1163 = vst [vmem:[%s289 + $0x44] sm:$0xf] %v1099
        %1164 = vst [vmem:[%s289 + $0x48] sm:$0xf] %v1100
        %1165 = vst [vmem:[%s289 + $0x4c] sm:$0xf] %v1101
        %1166 = vst [vmem:[%s289 + $0x50] sm:$0xf] %v1102
        %1167 = vst [vmem:[%s289 + $0x54] sm:$0xf] %v1103
        %1168 = vst [vmem:[%s289 + $0x58] sm:$0xf] %v1104
        %1169 = vst [vmem:[%s289 + $0x5c] sm:$0xf] %v1105
        %1170 = vst [vmem:[%s289 + $0x60] sm:$0xf] %v1106
        %1171 = vst [vmem:[%s289 + $0x64] sm:$0xf] %v1107
        %1172 = vst [vmem:[%s289 + $0x68] sm:$0xf] %v1108
        %1173 = vst [vmem:[%s289 + $0x6c] sm:$0xf] %v1109
        %1174 = vst [vmem:[%s289 + $0x70] sm:$0xf] %v1110
        %1175 = vst [vmem:[%s289 + $0x74] sm:$0xf] %v1111
        %1176 = vst [vmem:[%s289 + $0x78] sm:$0xf] %v1112
        %1177 = vst [vmem:[%s289 + $0x7c] sm:$0xf] %v1113
      $region48: #{bottleneck_forward.4} parent=35 // pred_fallthru
        _
      %s1178 = smul.u32 %s22, %s21
      %s1179 = smul.u32 32, %s1178
      %p1180 = scmp.lt.s32.totalorder %s1179, 63
      %s1181 = scalar_select %p1180, %s1179, 63
      %p1182 = scmp.lt.s32.totalorder %s20, 0
      %s1183 = scalar_select %p1182, %s20, 0
      %s1184 = sadd.s32 %s1183, %s1181
      %s1185 = smul.addr %s1184, 4
      %s1186 = scalar_lea.vmem %s4, %s1185
      // Predicated region
      $region53: #{bottleneck_forward.4} parent=35 // pred_check
        %p1187 = pneg %p164
      $region54: #{bottleneck_forward.4} parent=35 // pred_check_branch
        %1189 = sbr.rel (%p1187) target = $region56
      $region55: #{bottleneck_forward.4} parent=35 // pred_region
        %s1190 = smul.u32 %s22, %s21
        %s1191 = smul.u32 32, %s1190
      $region56: #{bottleneck_forward.4} parent=35 // pred_fallthru
        _
    $region36: #{bottleneck_forward.4} parent=5 // pred_fallthru
      _
    %p1192 = scmp.le.s32.totalorder 2, %s10
    // Predicated region
    $region57: #{bottleneck_forward.4} parent=5 // pred_check
      %p1193 = pneg %p1192
    $region58: #{bottleneck_forward.4} parent=5 // pred_check_branch
      %1195 = sbr.rel (%p1193) target = $region60
    $region59: #{bottleneck_forward.4} parent=5 // pred_region
      %s1196 = ssub.s32 %s10, 2
      // Predicated region
      $region61: #{bottleneck_forward.4} parent=59 // pred_check
        %p1197 = pneg %p170
      $region62: #{bottleneck_forward.4} parent=59 // pred_check_branch
        %1199 = sbr.rel (%p1197) target = $region64
      $region63: #{bottleneck_forward.4} parent=59 // pred_region
        %s1200 = smul.u32 %s25, %s24
        %s1201 = smul.u32 32, %s1200
        %p1202 = scmp.lt.s32.totalorder %s1201, 63
        %s1203 = scalar_select %p1202, %s1201, 63
        %p1204 = scmp.lt.s32.totalorder %s23, 0
        %s1205 = scalar_select %p1204, %s23, 0
        %s1206 = sadd.s32 %s1205, %s1203
        %s1207 = smul.addr %s1206, 4
        %s1208 = scalar_lea.vmem %s4, %s1207
      $region64: #{bottleneck_forward.4} parent=59 // pred_fallthru
        _
    $region60: #{bottleneck_forward.4} parent=5 // pred_fallthru
      _
  $region6: #{bottleneck_forward.4} parent=0 // loop_footer
    %s14 = sadd.s32 1, %s10
  $region7: #{bottleneck_forward.4} parent=0 // loop_footer_branch
    %9 = sbr.rel target = $region3
  $region8: #{bottleneck_forward.4} parent=0 // loop_exit
    _

// kernel: bottleneck_forward.6
$region0: #{bottleneck_forward.6}
  #allocation0 [shape = 'u32[]', space=smem, size = 0x4, offset = 0x4, fixed_abs, tag = 'smem constant byte address 0x4 - core index']
  #allocation1 [shape = 'u32[144,128]{1,0:T(1,128)}', space=vmem, size = 0x12000, scoped, tag = 'internal scratch']
  #allocation2 [shape = 'f32[128,128]{1,0:T(8,128)}', space=vmem, size = 0x10000, scoped, tag = 'scratch operand']
  #allocation3 [shape = 'f32[1,128]{1,0:T(1,128)}', space=vmem, size = 0x200, scoped, tag = 'scratch operand']
  #allocation4 [shape = 'f32[1,128]{1,0:T(1,128)}', space=vmem, size = 0x200, scoped, tag = 'scratch operand']
  #allocation5 [shape = 'f32[1,128]{1,0:T(1,128)}', space=vmem, size = 0x200, scoped, tag = 'scratch operand']
  #allocation6 [shape = 'f32[1,128]{1,0:T(1,128)}', space=vmem, size = 0x200, scoped, tag = 'scratch operand']
  %s0 = inlined_call_operand.vmem [shape: bf16[128,128], index: 0, kind: input, shape index: {}]
  %s1 = inlined_call_operand.vmem [shape: bf16[128,128], index: 1, kind: input, shape index: {}]
  %s2 = inlined_call_operand.vmem [shape: f32[1,128], index: 2, kind: input, shape index: {}]
  %s3 = inlined_call_operand.vmem [shape: f32[1,128], index: 3, kind: input, shape index: {}]
  %s4 = inlined_call_operand.vmem [shape: bf16[128,128], index: 4, kind: output, shape index: {}]
  %s5 = sld [smem:[#allocation0]]
  $region65: #{bottleneck_forward.6} parent=0
    _
  %s7 = ssub.s32 1, %s5
  %s8 = scalar_select 0, %s7, %s5
  loop: start=0, step=1, limit=4
  $region2: #{bottleneck_forward.6} parent=0 // loop_pre_header
    _
  $region3: #{bottleneck_forward.6} parent=0 // loop_header
    %s10 = sphi 0, %s14
    %p11 = scmp.ge.s32.totalorder %s10, 4
    %s17 = sphi 0, %s36
    %s18 = sphi 0, %s32
    %s19 = sphi 0, %s28
    %s20 = sphi 0, %s17
    %s21 = sphi 0, %s18
    %s22 = sphi 0, %s19
    %s23 = sphi 0, %s20
    %s24 = sphi 0, %s21
    %s25 = sphi 0, %s22
    %s43 = sphi 0, %s45
    %s46 = sphi 0, %s43
    %s47 = sphi 0, %s46
    %s63 = sphi 0, %s47
    %s69 = sphi 0, %s71
    %s72 = sphi 0, %s69
    %s73 = sphi 0, %s72
    %s89 = sphi 0, %s73
    %s95 = sphi 0, %s97
    %s98 = sphi 0, %s95
    %s99 = sphi 0, %s98
    %s115 = sphi 0, %s99
    %s121 = sphi 0, %s123
    %s124 = sphi 0, %s121
    %s125 = sphi 0, %s124
    %s141 = sphi 0, %s125
    %s151 = sphi 0, %s153
    %s154 = sphi 0, %s151
    %s155 = sphi 0, %s154
    %s171 = sphi 0, %s155
  $region4: #{bottleneck_forward.6} parent=0 // loop_header_branch
    %13 = sbr.rel (%p11) target = $region8
  $region5: #{bottleneck_forward.6} parent=0 // loop_body
    %s15 = ssub.s32 %s10, 1
    %s16 = ssub.s32 %s10, 2
    %s26 = sadd.s32 1, %s19
    %p27 = scmp.ge.s32.totalorder %s26, 1
    %s28 = scalar_select %p27, 0, %s26
    %s29 = sadd.s32 1, %s18
    %s30 = scalar_select %p27, %s29, %s18
    %p31 = scmp.ge.s32.totalorder %s30, 2
    %s32 = scalar_select %p31, 0, %s30
    %s33 = sadd.s32 1, %s17
    %s34 = scalar_select %p31, %s33, %s17
    %p35 = scmp.ge.s32.totalorder %s34, 1
    %s36 = scalar_select %p35, 0, %s34
    %s37 = ssub.s32 1, %s18
    %s38 = smul.u32 %s19, %s37
    %s39 = ssub.s32 1, %s32
    %s40 = smul.u32 %s28, %s39
    %s41 = ssub.s32 %s38, %s40
    %p42 = scmp.eq.s32.totalorder %s41, 0
    %s44 = sadd.s32 %s43, 1
    %s45 = scalar_select %p42, %s43, %s44
    %p48 = pneg %p42
    %p49 = scmp.eq.s32.totalorder %s10, 1
    %p50 = por %p48, %p49
    %p51 = scmp.ne.s32.totalorder %s43, %s46
    %p52 = scmp.eq.s32.totalorder %s10, 0
    %p53 = por %p51, %p52
    %p54 = scmp.ne.s32.totalorder %s43, %s46
    %p55 = scmp.eq.s32.totalorder %s15, 1
    %p56 = por %p54, %p55
    %p57 = scmp.ne.s32.totalorder %s46, %s47
    %p58 = scmp.eq.s32.totalorder %s15, 0
    %p59 = por %p57, %p58
    %p60 = scmp.ne.s32.totalorder %s46, %s47
    %p61 = scmp.eq.s32.totalorder %s16, 1
    %p62 = por %p60, %p61
    %p64 = scmp.ne.s32.totalorder %s47, %s63
    %p65 = scmp.eq.s32.totalorder %s16, 0
    %p66 = por %p64, %p65
    %s67 = ssub.s32 %s17, %s36
    %p68 = scmp.eq.s32.totalorder %s67, 0
    %s70 = sadd.s32 %s69, 1
    %s71 = scalar_select %p68, %s69, %s70
    %p74 = pneg %p68
    %p75 = scmp.eq.s32.totalorder %s10, 1
    %p76 = por %p74, %p75
    %p77 = scmp.ne.s32.totalorder %s69, %s72
    %p78 = scmp.eq.s32.totalorder %s10, 0
    %p79 = por %p77, %p78
    %p80 = scmp.ne.s32.totalorder %s69, %s72
    %p81 = scmp.eq.s32.totalorder %s15, 1
    %p82 = por %p80, %p81
    %p83 = scmp.ne.s32.totalorder %s72, %s73
    %p84 = scmp.eq.s32.totalorder %s15, 0
    %p85 = por %p83, %p84
    %p86 = scmp.ne.s32.totalorder %s72, %s73
    %p87 = scmp.eq.s32.totalorder %s16, 1
    %p88 = por %p86, %p87
    %p90 = scmp.ne.s32.totalorder %s73, %s89
    %p91 = scmp.eq.s32.totalorder %s16, 0
    %p92 = por %p90, %p91
    %s93 = ssub.s32 %s17, %s36
    %p94 = scmp.eq.s32.totalorder %s93, 0
    %s96 = sadd.s32 %s95, 1
    %s97 = scalar_select %p94, %s95, %s96
    %p100 = pneg %p94
    %p101 = scmp.eq.s32.totalorder %s10, 1
    %p102 = por %p100, %p101
    %p103 = scmp.ne.s32.totalorder %s95, %s98
    %p104 = scmp.eq.s32.totalorder %s10, 0
    %p105 = por %p103, %p104
    %p106 = scmp.ne.s32.totalorder %s95, %s98
    %p107 = scmp.eq.s32.totalorder %s15, 1
    %p108 = por %p106, %p107
    %p109 = scmp.ne.s32.totalorder %s98, %s99
    %p110 = scmp.eq.s32.totalorder %s15, 0
    %p111 = por %p109, %p110
    %p112 = scmp.ne.s32.totalorder %s98, %s99
    %p113 = scmp.eq.s32.totalorder %s16, 1
    %p114 = por %p112, %p113
    %p116 = scmp.ne.s32.totalorder %s99, %s115
    %p117 = scmp.eq.s32.totalorder %s16, 0
    %p118 = por %p116, %p117
    %s119 = ssub.s32 %s17, %s36
    %p120 = scmp.eq.s32.totalorder %s119, 0
    %s122 = sadd.s32 %s121, 1
    %s123 = scalar_select %p120, %s121, %s122
    %p126 = pneg %p120
    %p127 = scmp.eq.s32.totalorder %s10, 1
    %p128 = por %p126, %p127
    %p129 = scmp.ne.s32.totalorder %s121, %s124
    %p130 = scmp.eq.s32.totalorder %s10, 0
    %p131 = por %p129, %p130
    %p132 = scmp.ne.s32.totalorder %s121, %s124
    %p133 = scmp.eq.s32.totalorder %s15, 1
    %p134 = por %p132, %p133
    %p135 = scmp.ne.s32.totalorder %s124, %s125
    %p136 = scmp.eq.s32.totalorder %s15, 0
    %p137 = por %p135, %p136
    %p138 = scmp.ne.s32.totalorder %s124, %s125
    %p139 = scmp.eq.s32.totalorder %s16, 1
    %p140 = por %p138, %p139
    %p142 = scmp.ne.s32.totalorder %s125, %s141
    %p143 = scmp.eq.s32.totalorder %s16, 0
    %p144 = por %p142, %p143
    %s145 = smul.u32 %s19, %s18
    %s146 = smul.u32 %s28, %s32
    %s147 = ssub.s32 %s145, %s146
    %s148 = ssub.s32 %s17, %s36
    %s149 = sor.u32 %s147, %s148
    %p150 = scmp.eq.s32.totalorder %s149, 0
    %s152 = sadd.s32 %s151, 1
    %s153 = scalar_select %p150, %s151, %s152
    %p156 = pneg %p150
    %p157 = scmp.eq.s32.totalorder %s10, 1
    %p158 = por %p156, %p157
    %p159 = scmp.ne.s32.totalorder %s151, %s154
    %p160 = scmp.eq.s32.totalorder %s10, 0
    %p161 = por %p159, %p160
    %p162 = scmp.ne.s32.totalorder %s151, %s154
    %p163 = scmp.eq.s32.totalorder %s15, 1
    %p164 = por %p162, %p163
    %p165 = scmp.ne.s32.totalorder %s154, %s155
    %p166 = scmp.eq.s32.totalorder %s15, 0
    %p167 = por %p165, %p166
    %p168 = scmp.ne.s32.totalorder %s154, %s155
    %p169 = scmp.eq.s32.totalorder %s16, 1
    %p170 = por %p168, %p169
    %p172 = scmp.ne.s32.totalorder %s155, %s171
    %p173 = scmp.eq.s32.totalorder %s16, 0
    %p174 = por %p172, %p173
    %p175 = scmp.le.s32.totalorder 1, %s10
    %p176 = scmp.lt.s32.totalorder %s10, 3
    %p177 = pnand %p175, %p176
    %p178 = pneg %p177
    // Predicated region
    $region9: #{bottleneck_forward.6} parent=5 // pred_check
      _
    $region10: #{bottleneck_forward.6} parent=5 // pred_check_branch
      %180 = sbr.rel (%p177) target = $region12
    $region11: #{bottleneck_forward.6} parent=5 // pred_region
      %s181 = ssub.s32 %s10, 1
      // Predicated region
      $region13: #{bottleneck_forward.6} parent=11 // pred_check
        %p182 = pneg %p85
      $region14: #{bottleneck_forward.6} parent=11 // pred_check_branch
        %184 = sbr.rel (%p182) target = $region16
      $region15: #{bottleneck_forward.6} parent=11 // pred_region
        %p185 = scmp.lt.s32.totalorder %s20, 0
        %s186 = scalar_select %p185, %s20, 0
        %s187 = smul.addr %s186, 4
        %s188 = scalar_lea.vmem %s1, %s187
      $region16: #{bottleneck_forward.6} parent=11 // pred_fallthru
        _
      // Predicated region
      $region17: #{bottleneck_forward.6} parent=11 // pred_check
        %p189 = pneg %p111
      $region18: #{bottleneck_forward.6} parent=11 // pred_check_branch
        %191 = sbr.rel (%p189) target = $region20
      $region19: #{bottleneck_forward.6} parent=11 // pred_region
        %p192 = scmp.lt.s32.totalorder %s20, 0
        %s193 = scalar_select %p192, %s20, 0
        %s194 = scalar_lea.vmem %s2, %s193
      $region20: #{bottleneck_forward.6} parent=11 // pred_fallthru
        _
      // Predicated region
      $region21: #{bottleneck_forward.6} parent=11 // pred_check
        %p195 = pneg %p137
      $region22: #{bottleneck_forward.6} parent=11 // pred_check_branch
        %197 = sbr.rel (%p195) target = $region24
      $region23: #{bottleneck_forward.6} parent=11 // pred_region
        %p198 = scmp.lt.s32.totalorder %s20, 0
        %s199 = scalar_select %p198, %s20, 0
        %s200 = scalar_lea.vmem %s3, %s199
      $region24: #{bottleneck_forward.6} parent=11 // pred_fallthru
        _
    $region12: #{bottleneck_forward.6} parent=5 // pred_fallthru
      _
    %p201 = scmp.lt.s32.totalorder %s10, 2
    // Predicated region
    $region25: #{bottleneck_forward.6} parent=5 // pred_check
      %p202 = pneg %p201
    $region26: #{bottleneck_forward.6} parent=5 // pred_check_branch
      %204 = sbr.rel (%p202) target = $region28
    $region27: #{bottleneck_forward.6} parent=5 // pred_region
      // Predicated region
      $region29: #{bottleneck_forward.6} parent=27 // pred_check
        %p205 = pneg %p53
      $region30: #{bottleneck_forward.6} parent=27 // pred_check_branch
        %207 = sbr.rel (%p205) target = $region32
      $region31: #{bottleneck_forward.6} parent=27 // pred_region
        %s208 = ssub.s32 1, %s18
        %s209 = smul.u32 %s19, %s208
        %s210 = smul.u32 16, %s209
        %p211 = scmp.lt.s32.totalorder %s210, 15
        %s212 = scalar_select %p211, %s210, 15
        %s213 = smul.addr %s212, 4
        %s214 = scalar_lea.vmem %s0, %s213
        %s215 = ssub.s32 1, %s18
        %s216 = smul.u32 %s19, %s215
        %s217 = smul.u32 16, %s216
      $region32: #{bottleneck_forward.6} parent=27 // pred_fallthru
        _
    $region28: #{bottleneck_forward.6} parent=5 // pred_fallthru
      _
    %p218 = scmp.le.s32.totalorder 1, %s10
    %p219 = scmp.lt.s32.totalorder %s10, 3
    %p220 = pnand %p218, %p219
    %p221 = pneg %p220
    // Predicated region
    $region33: #{bottleneck_forward.6} parent=5 // pred_check
      _
    $region34: #{bottleneck_forward.6} parent=5 // pred_check_branch
      %223 = sbr.rel (%p220) target = $region36
    $region35: #{bottleneck_forward.6} parent=5 // pred_region
      %s224 = ssub.s32 %s10, 1
      %s225 = ssub.s32 1, %s21
      %s226 = smul.u32 %s22, %s225
      %s227 = smul.u32 16, %s226
      %p228 = scmp.lt.s32.totalorder %s227, 15
      %s229 = scalar_select %p228, %s227, 15
      %s230 = smul.addr %s229, 4
      %s231 = scalar_lea.vmem %s0, %s230
      %p232 = pneg %p59
      %p233 = pneg %p56
      %p234 = scmp.lt.s32.totalorder %s20, 0
      %s235 = scalar_select %p234, %s20, 0
      %s236 = smul.addr %s235, 4
      %s237 = scalar_lea.vmem %s1, %s236
      %p238 = pneg %p85
      %p239 = pneg %p82
      %p240 = scmp.lt.s32.totalorder %s20, 0
      %s241 = scalar_select %p240, %s20, 0
      %s242 = scalar_lea.vmem %s2, %s241
      %p243 = pneg %p111
      %p244 = pneg %p108
      %p245 = scmp.lt.s32.totalorder %s20, 0
      %s246 = scalar_select %p245, %s20, 0
      %s247 = scalar_lea.vmem %s3, %s246
      %p248 = pneg %p137
      %p249 = pneg %p134
      %p250 = pneg %p167
      %p251 = pneg %p164
      %s252 = smul.u32 %s22, %s21
      %s253 = smul.u32 16, %s252
      %p254 = scmp.lt.s32.totalorder %s253, 15
      %s255 = scalar_select %p254, %s253, 15
      %p256 = scmp.lt.s32.totalorder %s20, 0
      %s257 = scalar_select %p256, %s20, 0
      %s258 = sadd.s32 %s257, %s255
      %s259 = smul.addr %s258, 4
      %s260 = scalar_lea.vmem %s4, %s259
      %s261 = ssub.s32 1, %s21
      %s262 = smul.u32 %s22, %s261
      %s263 = smul.u32 16, %s262
      %p264 = scmp.lt.s32.totalorder %s263, 15
      %s265 = scalar_select %p264, %s263, 15
      %s266 = smul.addr %s265, 4
      %s267 = scalar_lea.vmem %s0, %s266
      %s268 = ssub.s32 1, %s21
      %s269 = smul.u32 %s22, %s268
      %s270 = smul.u32 16, %s269
      %p271 = scmp.lt.s32.totalorder %s20, 0
      %s272 = scalar_select %p271, %s20, 0
      %s273 = smul.addr %s272, 4
      %s274 = scalar_lea.vmem %s1, %s273
      %p275 = scmp.lt.s32.totalorder %s20, 0
      %s276 = scalar_select %p275, %s20, 0
      %s277 = scalar_lea.vmem %s2, %s276
      %p278 = scmp.lt.s32.totalorder %s20, 0
      %s279 = scalar_select %p278, %s20, 0
      %s280 = scalar_lea.vmem %s3, %s279
      %s281 = smul.u32 %s22, %s21
      %s282 = smul.u32 16, %s281
      %p283 = scmp.lt.s32.totalorder %s282, 15
      %s284 = scalar_select %p283, %s282, 15
      %p285 = scmp.lt.s32.totalorder %s20, 0
      %s286 = scalar_select %p285, %s20, 0
      %s287 = sadd.s32 %s286, %s284
      %s288 = smul.addr %s287, 4
      %s289 = scalar_lea.vmem %s4, %s288
      %s290 = smul.u32 %s22, %s21
      %s291 = smul.u32 16, %s290
      %p293 = scmp.eq.s32.totalorder %s21, 0
      // Predicated region
      $region37: #{bottleneck_forward.6} parent=35 // pred_check
        %p294 = pneg %p293
      $region38: #{bottleneck_forward.6} parent=35 // pred_check_branch
        %296 = sbr.rel (%p294) target = $region40
      $region39: #{bottleneck_forward.6} parent=35 // pred_region
        %p297 = scmp.eq.s32.totalorder %s22, 0
        // Predicated region
        $region41: #{bottleneck_forward.6} parent=39 // pred_check
          %p298 = pneg %p297
        $region42: #{bottleneck_forward.6} parent=39 // pred_check_branch
          %300 = sbr.rel (%p298) target = $region44
        $region43: #{bottleneck_forward.6} parent=39 // pred_region
          %301 = vst [vmem:[#allocation3] sm:$0x1] 0.0
          %302 = vst [vmem:[#allocation4] sm:$0x1] 0.0
        $region44: #{bottleneck_forward.6} parent=39 // pred_fallthru
          _
        %s303 = smul.u32 %s22, 128
        %v304 = vld [vmem:[%s267] sm:$0xf]
        %v305 = vld [vmem:[%s267 + $0x4] sm:$0xf]
        %v306 = vld [vmem:[%s267 + $0x8] sm:$0xf]
        %v307 = vld [vmem:[%s267 + $0xc] sm:$0xf]
        %v308 = vld [vmem:[%s267 + $0x10] sm:$0xf]
        %v309 = vld [vmem:[%s267 + $0x14] sm:$0xf]
        %v310 = vld [vmem:[%s267 + $0x18] sm:$0xf]
        %v311 = vld [vmem:[%s267 + $0x1c] sm:$0xf]
        %v312 = vld [vmem:[%s267 + $0x20] sm:$0xf]
        %v313 = vld [vmem:[%s267 + $0x24] sm:$0xf]
        %v314 = vld [vmem:[%s267 + $0x28] sm:$0xf]
        %v315 = vld [vmem:[%s267 + $0x2c] sm:$0xf]
        %v316 = vld [vmem:[%s267 + $0x30] sm:$0xf]
        %v317 = vld [vmem:[%s267 + $0x34] sm:$0xf]
        %v318 = vld [vmem:[%s267 + $0x38] sm:$0xf]
        %v319 = vld [vmem:[%s267 + $0x3c] sm:$0xf]
        %v320 = vld [vmem:[%s274] sm:$0xf]
        %v321 = vld [vmem:[%s274 + $0x4] sm:$0xf]
        %v322 = vld [vmem:[%s274 + $0x8] sm:$0xf]
        %v323 = vld [vmem:[%s274 + $0xc] sm:$0xf]
        %v324 = vld [vmem:[%s274 + $0x10] sm:$0xf]
        %v325 = vld [vmem:[%s274 + $0x14] sm:$0xf]
        %v326 = vld [vmem:[%s274 + $0x18] sm:$0xf]
        %v327 = vld [vmem:[%s274 + $0x1c] sm:$0xf]
        %v328 = vld [vmem:[%s274 + $0x20] sm:$0xf]
        %v329 = vld [vmem:[%s274 + $0x24] sm:$0xf]
        %v330 = vld [vmem:[%s274 + $0x28] sm:$0xf]
        %v331 = vld [vmem:[%s274 + $0x2c] sm:$0xf]
        %v332 = vld [vmem:[%s274 + $0x30] sm:$0xf]
        %v333 = vld [vmem:[%s274 + $0x34] sm:$0xf]
        %v334 = vld [vmem:[%s274 + $0x38] sm:$0xf]
        %v335 = vld [vmem:[%s274 + $0x3c] sm:$0xf]
        %v352 = vunpack.c.l.b16 %v304
        %v353 = vunpack.c.l.b16 %v305
        %v354 = vunpack.c.l.b16 %v306
        %v355 = vunpack.c.l.b16 %v307
        %v356 = vunpack.c.l.b16 %v308
        %v357 = vunpack.c.l.b16 %v309
        %v358 = vunpack.c.l.b16 %v310
        %v359 = vunpack.c.l.b16 %v311
        %v360 = vunpack.c.l.b16 %v312
        %v361 = vunpack.c.l.b16 %v313
        %v362 = vunpack.c.l.b16 %v314
        %v363 = vunpack.c.l.b16 %v315
        %v364 = vunpack.c.l.b16 %v316
        %v365 = vunpack.c.l.b16 %v317
        %v366 = vunpack.c.l.b16 %v318
        %v367 = vunpack.c.l.b16 %v319
        %v368 = vpack.c.b16 %v353, %v352
        %v369 = vpack.c.b16 %v355, %v354
        %v370 = vpack.c.b16 %v357, %v356
        %v371 = vpack.c.b16 %v359, %v358
        %v372 = vpack.c.b16 %v361, %v360
        %v373 = vpack.c.b16 %v363, %v362
        %v374 = vpack.c.b16 %v365, %v364
        %v375 = vpack.c.b16 %v367, %v366
        %v400 = vunpack.c.l.b16 %v320
        %v401 = vunpack.c.l.b16 %v321
        %v402 = vunpack.c.l.b16 %v322
        %v403 = vunpack.c.l.b16 %v323
        %v404 = vunpack.c.l.b16 %v324
        %v405 = vunpack.c.l.b16 %v325
        %v406 = vunpack.c.l.b16 %v326
        %v407 = vunpack.c.l.b16 %v327
        %v408 = vunpack.c.l.b16 %v328
        %v409 = vunpack.c.l.b16 %v329
        %v410 = vunpack.c.l.b16 %v330
        %v411 = vunpack.c.l.b16 %v331
        %v412 = vunpack.c.l.b16 %v332
        %v413 = vunpack.c.l.b16 %v333
        %v414 = vunpack.c.l.b16 %v334
        %v415 = vunpack.c.l.b16 %v335
        %v416 = vpack.c.b16 %v401, %v400
        %v417 = vpack.c.b16 %v403, %v402
        %v418 = vpack.c.b16 %v405, %v404
        %v419 = vpack.c.b16 %v407, %v406
        %v420 = vpack.c.b16 %v409, %v408
        %v421 = vpack.c.b16 %v411, %v410
        %v422 = vpack.c.b16 %v413, %v412
        %v423 = vpack.c.b16 %v415, %v414
        %432 = vmatprep.subr.bf16.mxu0 0
        %433 = vmatpush1.bf16.msra.mxu0 %v423
        %434 = vmatprep.subr.bf16.mxu0 0
        %435 = vmatpush1.bf16.msra.mxu0 %v422
        %436 = vmatprep.subr.bf16.mxu0 0
        %437 = vmatpush1.bf16.msra.mxu0 %v421
        %438 = vmatprep.subr.bf16.mxu0 0
        %439 = vmatpush1.bf16.msra.mxu0 %v420
        %440 = vmatprep.subr.bf16.mxu0 0
        %441 = vmatpush1.bf16.msra.mxu0 %v419
        %442 = vmatprep.subr.bf16.mxu0 0
        %443 = vmatpush1.bf16.msra.mxu0 %v418
        %444 = vmatprep.subr.bf16.mxu0 0
        %445 = vmatpush1.bf16.msra.mxu0 %v417
        %446 = vmatprep.subr.bf16.mxu0 0
        %447 = vmatpush1.bf16.msra.mxu0 %v416
        %448 = vmatprep.subr.bf16.mxu0 0
        %449 = vmatpush2.bf16.msra.mxu0 0
        %450 = vmatprep.subr.bf16.mxu0 0
        %451 = vmatpush2.bf16.msra.mxu0 0
        %452 = vmatprep.subr.bf16.mxu0 0
        %453 = vmatpush2.bf16.msra.mxu0 0
        %454 = vmatprep.subr.bf16.mxu0 0
        %455 = vmatpush2.bf16.msra.mxu0 0
        %456 = vmatprep.subr.bf16.mxu0 0
        %457 = vmatpush2.bf16.msra.mxu0 0
        %458 = vmatprep.subr.bf16.mxu0 0
        %459 = vmatpush2.bf16.msra.mxu0 0
        %460 = vmatprep.subr.bf16.mxu0 0
        %461 = vmatpush2.bf16.msra.mxu0 0
        %462 = vmatprep.subr.bf16.mxu0 0
        %463 = vmatpush2.bf16.msra.mxu0 0
        %464 = vmatprep.mubr.bf16.mxu0 0
        %465 = vmatmul.mubr.bf16.gmra.mxu0 %v368
        %v466 = vpop.f32.mrf.mxu0
        %v467 = vadd.f32 0.0, %v466
        %v468 = vpop.f32.mrf.mxu0
        %v469 = vpop.f32.mrf.mxu0
        %v470 = vadd.f32 0.0, %v469
        %v471 = vpop.f32.mrf.mxu0
        %472 = vmatprep.mubr.bf16.mxu0 0
        %473 = vmatmul.mubr.bf16.gmra.mxu0 %v369
        %v474 = vpop.f32.mrf.mxu0
        %v475 = vadd.f32 0.0, %v474
        %v476 = vpop.f32.mrf.mxu0
        %v477 = vpop.f32.mrf.mxu0
        %v478 = vadd.f32 0.0, %v477
        %v479 = vpop.f32.mrf.mxu0
        %480 = vmatprep.mubr.bf16.mxu0 0
        %481 = vmatmul.mubr.bf16.gmra.mxu0 %v370
        %v482 = vpop.f32.mrf.mxu0
        %v483 = vadd.f32 0.0, %v482
        %v484 = vpop.f32.mrf.mxu0
        %v485 = vpop.f32.mrf.mxu0
        %v486 = vadd.f32 0.0, %v485
        %v487 = vpop.f32.mrf.mxu0
        %488 = vmatprep.mubr.bf16.mxu0 0
        %489 = vmatmul.mubr.bf16.gmra.mxu0 %v371
        %v490 = vpop.f32.mrf.mxu0
        %v491 = vadd.f32 0.0, %v490
        %v492 = vpop.f32.mrf.mxu0
        %v493 = vpop.f32.mrf.mxu0
        %v494 = vadd.f32 0.0, %v493
        %v495 = vpop.f32.mrf.mxu0
        %496 = vmatprep.mubr.bf16.mxu0 0
        %497 = vmatmul.mubr.bf16.gmra.mxu0 %v372
        %v498 = vpop.f32.mrf.mxu0
        %v499 = vadd.f32 0.0, %v498
        %v500 = vpop.f32.mrf.mxu0
        %v501 = vpop.f32.mrf.mxu0
        %v502 = vadd.f32 0.0, %v501
        %v503 = vpop.f32.mrf.mxu0
        %504 = vmatprep.mubr.bf16.mxu0 0
        %505 = vmatmul.mubr.bf16.gmra.mxu0 %v373
        %v506 = vpop.f32.mrf.mxu0
        %v507 = vadd.f32 0.0, %v506
        %v508 = vpop.f32.mrf.mxu0
        %v509 = vpop.f32.mrf.mxu0
        %v510 = vadd.f32 0.0, %v509
        %v511 = vpop.f32.mrf.mxu0
        %512 = vmatprep.mubr.bf16.mxu0 0
        %513 = vmatmul.mubr.bf16.gmra.mxu0 %v374
        %v514 = vpop.f32.mrf.mxu0
        %v515 = vadd.f32 0.0, %v514
        %v516 = vpop.f32.mrf.mxu0
        %v517 = vpop.f32.mrf.mxu0
        %v518 = vadd.f32 0.0, %v517
        %v519 = vpop.f32.mrf.mxu0
        %520 = vmatprep.mubr.bf16.mxu0 0
        %521 = vmatmul.mubr.bf16.gmra.mxu0 %v375
        %v522 = vpop.f32.mrf.mxu0
        %v523 = vadd.f32 0.0, %v522
        %v524 = vpop.f32.mrf.mxu0
        %v525 = vpop.f32.mrf.mxu0
        %v526 = vadd.f32 0.0, %v525
        %v527 = vpop.f32.mrf.mxu0
        %528 = vdwg.mxu0
        %s529 = scalar_lea.vmem [#allocation2], %s303
        %530 = vst [vmem:[%s529] sm:$0xff] %v467
        %531 = vst [vmem:[%s529 + $0x8] sm:$0xff] %v470
        %532 = vst [vmem:[%s529 + $0x10] sm:$0xff] %v475
        %533 = vst [vmem:[%s529 + $0x18] sm:$0xff] %v478
        %534 = vst [vmem:[%s529 + $0x20] sm:$0xff] %v483
        %535 = vst [vmem:[%s529 + $0x28] sm:$0xff] %v486
        %536 = vst [vmem:[%s529 + $0x30] sm:$0xff] %v491
        %537 = vst [vmem:[%s529 + $0x38] sm:$0xff] %v494
        %538 = vst [vmem:[%s529 + $0x40] sm:$0xff] %v499
        %539 = vst [vmem:[%s529 + $0x48] sm:$0xff] %v502
        %540 = vst [vmem:[%s529 + $0x50] sm:$0xff] %v507
        %541 = vst [vmem:[%s529 + $0x58] sm:$0xff] %v510
        %542 = vst [vmem:[%s529 + $0x60] sm:$0xff] %v515
        %543 = vst [vmem:[%s529 + $0x68] sm:$0xff] %v518
        %544 = vst [vmem:[%s529 + $0x70] sm:$0xff] %v523
        %545 = vst [vmem:[%s529 + $0x78] sm:$0xff] %v526
        %v546 = vld [vmem:[%s529] sm:$0xff]
        %v547 = vld [vmem:[%s529 + $0x8] sm:$0xff]
        %v548 = vld [vmem:[%s529 + $0x10] sm:$0xff]
        %v549 = vld [vmem:[%s529 + $0x18] sm:$0xff]
        %v550 = vld [vmem:[%s529 + $0x20] sm:$0xff]
        %v551 = vld [vmem:[%s529 + $0x28] sm:$0xff]
        %v552 = vld [vmem:[%s529 + $0x30] sm:$0xff]
        %v553 = vld [vmem:[%s529 + $0x38] sm:$0xff]
        %v554 = vld [vmem:[%s529 + $0x40] sm:$0xff]
        %v555 = vld [vmem:[%s529 + $0x48] sm:$0xff]
        %v556 = vld [vmem:[%s529 + $0x50] sm:$0xff]
        %v557 = vld [vmem:[%s529 + $0x58] sm:$0xff]
        %v558 = vld [vmem:[%s529 + $0x60] sm:$0xff]
        %v559 = vld [vmem:[%s529 + $0x68] sm:$0xff]
        %v560 = vld [vmem:[%s529 + $0x70] sm:$0xff]
        %v561 = vld [vmem:[%s529 + $0x78] sm:$0xff]
        %v562 = vadd.f32 %v546, %v547
        %v563 = vadd.f32 %v562, %v548
        %v564 = vadd.f32 %v563, %v549
        %v565 = vadd.f32 %v564, %v550
        %v566 = vadd.f32 %v565, %v551
        %v567 = vadd.f32 %v566, %v552
        %v568 = vadd.f32 %v567, %v553
        %v569 = vadd.f32 %v568, %v554
        %v570 = vadd.f32 %v569, %v555
        %v571 = vadd.f32 %v570, %v556
        %v572 = vadd.f32 %v571, %v557
        %v573 = vadd.f32 %v572, %v558
        %v574 = vadd.f32 %v573, %v559
        %v575 = vadd.f32 %v574, %v560
        %v576 = vadd.f32 %v575, %v561
        %v577 = vrot.slane %v576, 4
        %v578 = vadd.f32 %v576, %v577
        %v579 = vrot.slane %v578, 2
        %v580 = vadd.f32 %v578, %v579
        %v581 = vrot.slane %v580, 1
        %v582 = vadd.f32 %v580, %v581
        %v583 = vadd.f32 %v582, 0.0
        %v584 = vmul.f32 %v546, %v546
        %v585 = vmul.f32 %v547, %v547
        %v586 = vmul.f32 %v548, %v548
        %v587 = vmul.f32 %v549, %v549
        %v588 = vmul.f32 %v550, %v550
        %v589 = vmul.f32 %v551, %v551
        %v590 = vmul.f32 %v552, %v552
        %v591 = vmul.f32 %v553, %v553
        %v592 = vmul.f32 %v554, %v554
        %v593 = vmul.f32 %v555, %v555
        %v594 = vmul.f32 %v556, %v556
        %v595 = vmul.f32 %v557, %v557
        %v596 = vmul.f32 %v558, %v558
        %v597 = vmul.f32 %v559, %v559
        %v598 = vmul.f32 %v560, %v560
        %v599 = vmul.f32 %v561, %v561
        %v600 = vadd.f32 %v584, %v585
        %v601 = vadd.f32 %v600, %v586
        %v602 = vadd.f32 %v601, %v587
        %v603 = vadd.f32 %v602, %v588
        %v604 = vadd.f32 %v603, %v589
        %v605 = vadd.f32 %v604, %v590
        %v606 = vadd.f32 %v605, %v591
        %v607 = vadd.f32 %v606, %v592
        %v608 = vadd.f32 %v607, %v593
        %v609 = vadd.f32 %v608, %v594
        %v610 = vadd.f32 %v609, %v595
        %v611 = vadd.f32 %v610, %v596
        %v612 = vadd.f32 %v611, %v597
        %v613 = vadd.f32 %v612, %v598
        %v614 = vadd.f32 %v613, %v599
        %v615 = vrot.slane %v614, 4
        %v616 = vadd.f32 %v614, %v615
        %v617 = vrot.slane %v616, 2
        %v618 = vadd.f32 %v616, %v617
        %v619 = vrot.slane %v618, 1
        %v620 = vadd.f32 %v618, %v619
        %v621 = vadd.f32 %v620, 0.0
        %v622 = vld [vmem:[#allocation3] sm:$0x1]
        %v623 = vadd.f32 %v622, %v583
        %624 = vst [vmem:[#allocation3] sm:$0x1] %v623
        %v625 = vld [vmem:[#allocation4] sm:$0x1]
        %v626 = vadd.f32 %v625, %v621
        %627 = vst [vmem:[#allocation4] sm:$0x1] %v626
      $region40: #{bottleneck_forward.6} parent=35 // pred_fallthru
        _
      %p628 = scmp.eq.s32.totalorder %s21, 1
      // Predicated region
      $region45: #{bottleneck_forward.6} parent=35 // pred_check
        %p629 = pneg %p628
      $region46: #{bottleneck_forward.6} parent=35 // pred_check_branch
        %631 = sbr.rel (%p629) target = $region48
      $region47: #{bottleneck_forward.6} parent=35 // pred_region
        %p632 = scmp.eq.s32.totalorder %s22, 0
        // Predicated region
        $region49: #{bottleneck_forward.6} parent=47 // pred_check
          %p633 = pneg %p632
        $region50: #{bottleneck_forward.6} parent=47 // pred_check_branch
          %635 = sbr.rel (%p633) target = $region52
        $region51: #{bottleneck_forward.6} parent=47 // pred_region
          %v636 = vld [vmem:[#allocation3] sm:$0x1]
          %v637 = vmul.f32 %v636, 0.0078125
          %v638 = vld [vmem:[#allocation4] sm:$0x1]
          %v639 = vmul.f32 %v638, 0.0078125
          %v640 = vmul.f32 %v637, %v637
          %v641 = vsub.f32 %v639, %v640
          %v642 = vmax.f32 %v641, 0.0
          %v643 = vld [vmem:[%s277] sm:$0x1]
          %v644 = vadd.f32 %v642, 1e-05
          %v645 = vrsqrt.pop %v644
          %v646 = vmul.f32 %v643, %v645
          %647 = vst [vmem:[#allocation5] sm:$0x1] %v646
          %v648 = vld [vmem:[%s280] sm:$0x1]
          %v649 = vmul.f32 %v637, %v646
          %v650 = vsub.f32 %v648, %v649
          %651 = vst [vmem:[#allocation6] sm:$0x1] %v650
        $region52: #{bottleneck_forward.6} parent=47 // pred_fallthru
          _
        %s652 = smul.u32 %s22, 128
        %s653 = scalar_lea.vmem [#allocation2], %s652
        %v654 = vld [vmem:[%s653] sm:$0xff]
        %v655 = vld [vmem:[%s653 + $0x8] sm:$0xff]
        %v656 = vld [vmem:[%s653 + $0x10] sm:$0xff]
        %v657 = vld [vmem:[%s653 + $0x18] sm:$0xff]
        %v658 = vld [vmem:[%s653 + $0x20] sm:$0xff]
        %v659 = vld [vmem:[%s653 + $0x28] sm:$0xff]
        %v660 = vld [vmem:[%s653 + $0x30] sm:$0xff]
        %v661 = vld [vmem:[%s653 + $0x38] sm:$0xff]
        %v662 = vld [vmem:[%s653 + $0x40] sm:$0xff]
        %v663 = vld [vmem:[%s653 + $0x48] sm:$0xff]
        %v664 = vld [vmem:[%s653 + $0x50] sm:$0xff]
        %v665 = vld [vmem:[%s653 + $0x58] sm:$0xff]
        %v666 = vld [vmem:[%s653 + $0x60] sm:$0xff]
        %v667 = vld [vmem:[%s653 + $0x68] sm:$0xff]
        %v668 = vld [vmem:[%s653 + $0x70] sm:$0xff]
        %v669 = vld [vmem:[%s653 + $0x78] sm:$0xff]
        %v670 = vld [vmem:[#allocation5] sm:$0x1]
        %v672 = vlaneseq
        %v673 = vshrl.u32 %v672, 7
        %v674 = vsub.s32 0, %v673
        %v675 = vrot.slane %v670, %v674
        %v677 = vmul.f32 %v654, %v675
        %v678 = vmul.f32 %v655, %v675
        %v679 = vmul.f32 %v656, %v675
        %v680 = vmul.f32 %v657, %v675
        %v681 = vmul.f32 %v658, %v675
        %v682 = vmul.f32 %v659, %v675
        %v683 = vmul.f32 %v660, %v675
        %v684 = vmul.f32 %v661, %v675
        %v685 = vmul.f32 %v662, %v675
        %v686 = vmul.f32 %v663, %v675
        %v687 = vmul.f32 %v664, %v675
        %v688 = vmul.f32 %v665, %v675
        %v689 = vmul.f32 %v666, %v675
        %v690 = vmul.f32 %v667, %v675
        %v691 = vmul.f32 %v668, %v675
        %v692 = vmul.f32 %v669, %v675
        %v693 = vld [vmem:[#allocation6] sm:$0x1]
        %v695 = vlaneseq
        %v696 = vshrl.u32 %v695, 7
        %v697 = vsub.s32 0, %v696
        %v698 = vrot.slane %v693, %v697
        %v700 = vadd.f32 %v677, %v698
        %v701 = vadd.f32 %v678, %v698
        %v702 = vadd.f32 %v679, %v698
        %v703 = vadd.f32 %v680, %v698
        %v704 = vadd.f32 %v681, %v698
        %v705 = vadd.f32 %v682, %v698
        %v706 = vadd.f32 %v683, %v698
        %v707 = vadd.f32 %v684, %v698
        %v708 = vadd.f32 %v685, %v698
        %v709 = vadd.f32 %v686, %v698
        %v710 = vadd.f32 %v687, %v698
        %v711 = vadd.f32 %v688, %v698
        %v712 = vadd.f32 %v689, %v698
        %v713 = vadd.f32 %v690, %v698
        %v714 = vadd.f32 %v691, %v698
        %v715 = vadd.f32 %v692, %v698
        %v716 = vpack.c.bf16 %v701, %v700
        %v717 = vpack.c.bf16 %v703, %v702
        %v718 = vpack.c.bf16 %v705, %v704
        %v719 = vpack.c.bf16 %v707, %v706
        %v720 = vpack.c.bf16 %v709, %v708
        %v721 = vpack.c.bf16 %v711, %v710
        %v722 = vpack.c.bf16 %v713, %v712
        %v723 = vpack.c.bf16 %v715, %v714
        %v732 = vunpack.c.l.b16 %v716
        %v733 = vunpack.c.h.b16 %v716
        %v734 = vunpack.c.l.b16 %v717
        %v735 = vunpack.c.h.b16 %v717
        %v736 = vunpack.c.l.b16 %v718
        %v737 = vunpack.c.h.b16 %v718
        %v738 = vunpack.c.l.b16 %v719
        %v739 = vunpack.c.h.b16 %v719
        %v740 = vunpack.c.l.b16 %v720
        %v741 = vunpack.c.h.b16 %v720
        %v742 = vunpack.c.l.b16 %v721
        %v743 = vunpack.c.h.b16 %v721
        %v744 = vunpack.c.l.b16 %v722
        %v745 = vunpack.c.h.b16 %v722
        %v746 = vunpack.c.l.b16 %v723
        %v747 = vunpack.c.h.b16 %v723
        %v748 = vpack.c.b16 %v732, %v732
        %v749 = vpack.c.b16 %v733, %v733
        %v750 = vpack.c.b16 %v734, %v734
        %v751 = vpack.c.b16 %v735, %v735
        %v752 = vpack.c.b16 %v736, %v736
        %v753 = vpack.c.b16 %v737, %v737
        %v754 = vpack.c.b16 %v738, %v738
        %v755 = vpack.c.b16 %v739, %v739
        %v756 = vpack.c.b16 %v740, %v740
        %v757 = vpack.c.b16 %v741, %v741
        %v758 = vpack.c.b16 %v742, %v742
        %v759 = vpack.c.b16 %v743, %v743
        %v760 = vpack.c.b16 %v744, %v744
        %v761 = vpack.c.b16 %v745, %v745
        %v762 = vpack.c.b16 %v746, %v746
        %v763 = vpack.c.b16 %v747, %v747
        %780 = vst [vmem:[%s289] sm:$0xf] %v748
        %781 = vst [vmem:[%s289 + $0x4] sm:$0xf] %v749
        %782 = vst [vmem:[%s289 + $0x8] sm:$0xf] %v750
        %783 = vst [vmem:[%s289 + $0xc] sm:$0xf] %v751
        %784 = vst [vmem:[%s289 + $0x10] sm:$0xf] %v752
        %785 = vst [vmem:[%s289 + $0x14] sm:$0xf] %v753
        %786 = vst [vmem:[%s289 + $0x18] sm:$0xf] %v754
        %787 = vst [vmem:[%s289 + $0x1c] sm:$0xf] %v755
        %788 = vst [vmem:[%s289 + $0x20] sm:$0xf] %v756
        %789 = vst [vmem:[%s289 + $0x24] sm:$0xf] %v757
        %790 = vst [vmem:[%s289 + $0x28] sm:$0xf] %v758
        %791 = vst [vmem:[%s289 + $0x2c] sm:$0xf] %v759
        %792 = vst [vmem:[%s289 + $0x30] sm:$0xf] %v760
        %793 = vst [vmem:[%s289 + $0x34] sm:$0xf] %v761
        %794 = vst [vmem:[%s289 + $0x38] sm:$0xf] %v762
        %795 = vst [vmem:[%s289 + $0x3c] sm:$0xf] %v763
      $region48: #{bottleneck_forward.6} parent=35 // pred_fallthru
        _
      %s796 = smul.u32 %s22, %s21
      %s797 = smul.u32 16, %s796
      %p798 = scmp.lt.s32.totalorder %s797, 15
      %s799 = scalar_select %p798, %s797, 15
      %p800 = scmp.lt.s32.totalorder %s20, 0
      %s801 = scalar_select %p800, %s20, 0
      %s802 = sadd.s32 %s801, %s799
      %s803 = smul.addr %s802, 4
      %s804 = scalar_lea.vmem %s4, %s803
      // Predicated region
      $region53: #{bottleneck_forward.6} parent=35 // pred_check
        %p805 = pneg %p164
      $region54: #{bottleneck_forward.6} parent=35 // pred_check_branch
        %807 = sbr.rel (%p805) target = $region56
      $region55: #{bottleneck_forward.6} parent=35 // pred_region
        %s808 = smul.u32 %s22, %s21
        %s809 = smul.u32 16, %s808
      $region56: #{bottleneck_forward.6} parent=35 // pred_fallthru
        _
    $region36: #{bottleneck_forward.6} parent=5 // pred_fallthru
      _
    %p810 = scmp.le.s32.totalorder 2, %s10
    // Predicated region
    $region57: #{bottleneck_forward.6} parent=5 // pred_check
      %p811 = pneg %p810
    $region58: #{bottleneck_forward.6} parent=5 // pred_check_branch
      %813 = sbr.rel (%p811) target = $region60
    $region59: #{bottleneck_forward.6} parent=5 // pred_region
      %s814 = ssub.s32 %s10, 2
      // Predicated region
      $region61: #{bottleneck_forward.6} parent=59 // pred_check
        %p815 = pneg %p170
      $region62: #{bottleneck_forward.6} parent=59 // pred_check_branch
        %817 = sbr.rel (%p815) target = $region64
      $region63: #{bottleneck_forward.6} parent=59 // pred_region
        %s818 = smul.u32 %s25, %s24
        %s819 = smul.u32 16, %s818
        %p820 = scmp.lt.s32.totalorder %s819, 15
        %s821 = scalar_select %p820, %s819, 15
        %p822 = scmp.lt.s32.totalorder %s23, 0
        %s823 = scalar_select %p822, %s23, 0
        %s824 = sadd.s32 %s823, %s821
        %s825 = smul.addr %s824, 4
        %s826 = scalar_lea.vmem %s4, %s825
      $region64: #{bottleneck_forward.6} parent=59 // pred_fallthru
        _
    $region60: #{bottleneck_forward.6} parent=5 // pred_fallthru
      _
  $region6: #{bottleneck_forward.6} parent=0 // loop_footer
    %s14 = sadd.s32 1, %s10
  $region7: #{bottleneck_forward.6} parent=0 // loop_footer_branch
    %9 = sbr.rel target = $region3
  $region8: #{bottleneck_forward.6} parent=0 // loop_exit
    _

// kernel: bottleneck_forward.7
$region0: #{bottleneck_forward.7}
  #allocation0 [shape = 'u32[]', space=smem, size = 0x4, offset = 0x4, fixed_abs, tag = 'smem constant byte address 0x4 - core index']
  #allocation1 [shape = 'u32[144,128]{1,0:T(1,128)}', space=vmem, size = 0x12000, scoped, tag = 'internal scratch']
  #allocation2 [shape = 'f32[128,128]{1,0:T(8,128)}', space=vmem, size = 0x10000, scoped, tag = 'scratch operand']
  #allocation3 [shape = 'f32[1,128]{1,0:T(1,128)}', space=vmem, size = 0x200, scoped, tag = 'scratch operand']
  #allocation4 [shape = 'f32[1,128]{1,0:T(1,128)}', space=vmem, size = 0x200, scoped, tag = 'scratch operand']
  #allocation5 [shape = 'f32[1,128]{1,0:T(1,128)}', space=vmem, size = 0x200, scoped, tag = 'scratch operand']
  #allocation6 [shape = 'f32[1,128]{1,0:T(1,128)}', space=vmem, size = 0x200, scoped, tag = 'scratch operand']
  %s0 = inlined_call_operand.vmem [shape: bf16[128,128], index: 0, kind: input, shape index: {}]
  %s1 = inlined_call_operand.vmem [shape: bf16[128,128], index: 1, kind: input, shape index: {}]
  %s2 = inlined_call_operand.vmem [shape: f32[1,128], index: 2, kind: input, shape index: {}]
  %s3 = inlined_call_operand.vmem [shape: f32[1,128], index: 3, kind: input, shape index: {}]
  %s4 = inlined_call_operand.vmem [shape: bf16[128,128], index: 4, kind: input, shape index: {}]
  %s5 = inlined_call_operand.vmem [shape: bf16[128,128], index: 5, kind: output, shape index: {}]
  %s6 = sld [smem:[#allocation0]]
  $region69: #{bottleneck_forward.7} parent=0
    _
  %s8 = ssub.s32 1, %s6
  %s9 = scalar_select 0, %s8, %s6
  loop: start=0, step=1, limit=4
  $region2: #{bottleneck_forward.7} parent=0 // loop_pre_header
    _
  $region3: #{bottleneck_forward.7} parent=0 // loop_header
    %s11 = sphi 0, %s15
    %p12 = scmp.ge.s32.totalorder %s11, 4
    %s18 = sphi 0, %s37
    %s19 = sphi 0, %s33
    %s20 = sphi 0, %s29
    %s21 = sphi 0, %s18
    %s22 = sphi 0, %s19
    %s23 = sphi 0, %s20
    %s24 = sphi 0, %s21
    %s25 = sphi 0, %s22
    %s26 = sphi 0, %s23
    %s44 = sphi 0, %s46
    %s47 = sphi 0, %s44
    %s48 = sphi 0, %s47
    %s64 = sphi 0, %s48
    %s70 = sphi 0, %s72
    %s73 = sphi 0, %s70
    %s74 = sphi 0, %s73
    %s90 = sphi 0, %s74
    %s96 = sphi 0, %s98
    %s99 = sphi 0, %s96
    %s100 = sphi 0, %s99
    %s116 = sphi 0, %s100
    %s122 = sphi 0, %s124
    %s125 = sphi 0, %s122
    %s126 = sphi 0, %s125
    %s142 = sphi 0, %s126
    %s152 = sphi 0, %s154
    %s155 = sphi 0, %s152
    %s156 = sphi 0, %s155
    %s172 = sphi 0, %s156
    %s182 = sphi 0, %s184
    %s185 = sphi 0, %s182
    %s186 = sphi 0, %s185
    %s202 = sphi 0, %s186
  $region4: #{bottleneck_forward.7} parent=0 // loop_header_branch
    %14 = sbr.rel (%p12) target = $region8
  $region5: #{bottleneck_forward.7} parent=0 // loop_body
    %s16 = ssub.s32 %s11, 1
    %s17 = ssub.s32 %s11, 2
    %s27 = sadd.s32 1, %s20
    %p28 = scmp.ge.s32.totalorder %s27, 1
    %s29 = scalar_select %p28, 0, %s27
    %s30 = sadd.s32 1, %s19
    %s31 = scalar_select %p28, %s30, %s19
    %p32 = scmp.ge.s32.totalorder %s31, 2
    %s33 = scalar_select %p32, 0, %s31
    %s34 = sadd.s32 1, %s18
    %s35 = scalar_select %p32, %s34, %s18
    %p36 = scmp.ge.s32.totalorder %s35, 1
    %s37 = scalar_select %p36, 0, %s35
    %s38 = ssub.s32 1, %s19
    %s39 = smul.u32 %s20, %s38
    %s40 = ssub.s32 1, %s33
    %s41 = smul.u32 %s29, %s40
    %s42 = ssub.s32 %s39, %s41
    %p43 = scmp.eq.s32.totalorder %s42, 0
    %s45 = sadd.s32 %s44, 1
    %s46 = scalar_select %p43, %s44, %s45
    %p49 = pneg %p43
    %p50 = scmp.eq.s32.totalorder %s11, 1
    %p51 = por %p49, %p50
    %p52 = scmp.ne.s32.totalorder %s44, %s47
    %p53 = scmp.eq.s32.totalorder %s11, 0
    %p54 = por %p52, %p53
    %p55 = scmp.ne.s32.totalorder %s44, %s47
    %p56 = scmp.eq.s32.totalorder %s16, 1
    %p57 = por %p55, %p56
    %p58 = scmp.ne.s32.totalorder %s47, %s48
    %p59 = scmp.eq.s32.totalorder %s16, 0
    %p60 = por %p58, %p59
    %p61 = scmp.ne.s32.totalorder %s47, %s48
    %p62 = scmp.eq.s32.totalorder %s17, 1
    %p63 = por %p61, %p62
    %p65 = scmp.ne.s32.totalorder %s48, %s64
    %p66 = scmp.eq.s32.totalorder %s17, 0
    %p67 = por %p65, %p66
    %s68 = ssub.s32 %s18, %s37
    %p69 = scmp.eq.s32.totalorder %s68, 0
    %s71 = sadd.s32 %s70, 1
    %s72 = scalar_select %p69, %s70, %s71
    %p75 = pneg %p69
    %p76 = scmp.eq.s32.totalorder %s11, 1
    %p77 = por %p75, %p76
    %p78 = scmp.ne.s32.totalorder %s70, %s73
    %p79 = scmp.eq.s32.totalorder %s11, 0
    %p80 = por %p78, %p79
    %p81 = scmp.ne.s32.totalorder %s70, %s73
    %p82 = scmp.eq.s32.totalorder %s16, 1
    %p83 = por %p81, %p82
    %p84 = scmp.ne.s32.totalorder %s73, %s74
    %p85 = scmp.eq.s32.totalorder %s16, 0
    %p86 = por %p84, %p85
    %p87 = scmp.ne.s32.totalorder %s73, %s74
    %p88 = scmp.eq.s32.totalorder %s17, 1
    %p89 = por %p87, %p88
    %p91 = scmp.ne.s32.totalorder %s74, %s90
    %p92 = scmp.eq.s32.totalorder %s17, 0
    %p93 = por %p91, %p92
    %s94 = ssub.s32 %s18, %s37
    %p95 = scmp.eq.s32.totalorder %s94, 0
    %s97 = sadd.s32 %s96, 1
    %s98 = scalar_select %p95, %s96, %s97
    %p101 = pneg %p95
    %p102 = scmp.eq.s32.totalorder %s11, 1
    %p103 = por %p101, %p102
    %p104 = scmp.ne.s32.totalorder %s96, %s99
    %p105 = scmp.eq.s32.totalorder %s11, 0
    %p106 = por %p104, %p105
    %p107 = scmp.ne.s32.totalorder %s96, %s99
    %p108 = scmp.eq.s32.totalorder %s16, 1
    %p109 = por %p107, %p108
    %p110 = scmp.ne.s32.totalorder %s99, %s100
    %p111 = scmp.eq.s32.totalorder %s16, 0
    %p112 = por %p110, %p111
    %p113 = scmp.ne.s32.totalorder %s99, %s100
    %p114 = scmp.eq.s32.totalorder %s17, 1
    %p115 = por %p113, %p114
    %p117 = scmp.ne.s32.totalorder %s100, %s116
    %p118 = scmp.eq.s32.totalorder %s17, 0
    %p119 = por %p117, %p118
    %s120 = ssub.s32 %s18, %s37
    %p121 = scmp.eq.s32.totalorder %s120, 0
    %s123 = sadd.s32 %s122, 1
    %s124 = scalar_select %p121, %s122, %s123
    %p127 = pneg %p121
    %p128 = scmp.eq.s32.totalorder %s11, 1
    %p129 = por %p127, %p128
    %p130 = scmp.ne.s32.totalorder %s122, %s125
    %p131 = scmp.eq.s32.totalorder %s11, 0
    %p132 = por %p130, %p131
    %p133 = scmp.ne.s32.totalorder %s122, %s125
    %p134 = scmp.eq.s32.totalorder %s16, 1
    %p135 = por %p133, %p134
    %p136 = scmp.ne.s32.totalorder %s125, %s126
    %p137 = scmp.eq.s32.totalorder %s16, 0
    %p138 = por %p136, %p137
    %p139 = scmp.ne.s32.totalorder %s125, %s126
    %p140 = scmp.eq.s32.totalorder %s17, 1
    %p141 = por %p139, %p140
    %p143 = scmp.ne.s32.totalorder %s126, %s142
    %p144 = scmp.eq.s32.totalorder %s17, 0
    %p145 = por %p143, %p144
    %s146 = smul.u32 %s20, %s19
    %s147 = smul.u32 %s29, %s33
    %s148 = ssub.s32 %s146, %s147
    %s149 = ssub.s32 %s18, %s37
    %s150 = sor.u32 %s148, %s149
    %p151 = scmp.eq.s32.totalorder %s150, 0
    %s153 = sadd.s32 %s152, 1
    %s154 = scalar_select %p151, %s152, %s153
    %p157 = pneg %p151
    %p158 = scmp.eq.s32.totalorder %s11, 1
    %p159 = por %p157, %p158
    %p160 = scmp.ne.s32.totalorder %s152, %s155
    %p161 = scmp.eq.s32.totalorder %s11, 0
    %p162 = por %p160, %p161
    %p163 = scmp.ne.s32.totalorder %s152, %s155
    %p164 = scmp.eq.s32.totalorder %s16, 1
    %p165 = por %p163, %p164
    %p166 = scmp.ne.s32.totalorder %s155, %s156
    %p167 = scmp.eq.s32.totalorder %s16, 0
    %p168 = por %p166, %p167
    %p169 = scmp.ne.s32.totalorder %s155, %s156
    %p170 = scmp.eq.s32.totalorder %s17, 1
    %p171 = por %p169, %p170
    %p173 = scmp.ne.s32.totalorder %s156, %s172
    %p174 = scmp.eq.s32.totalorder %s17, 0
    %p175 = por %p173, %p174
    %s176 = smul.u32 %s20, %s19
    %s177 = smul.u32 %s29, %s33
    %s178 = ssub.s32 %s176, %s177
    %s179 = ssub.s32 %s18, %s37
    %s180 = sor.u32 %s178, %s179
    %p181 = scmp.eq.s32.totalorder %s180, 0
    %s183 = sadd.s32 %s182, 1
    %s184 = scalar_select %p181, %s182, %s183
    %p187 = pneg %p181
    %p188 = scmp.eq.s32.totalorder %s11, 1
    %p189 = por %p187, %p188
    %p190 = scmp.ne.s32.totalorder %s182, %s185
    %p191 = scmp.eq.s32.totalorder %s11, 0
    %p192 = por %p190, %p191
    %p193 = scmp.ne.s32.totalorder %s182, %s185
    %p194 = scmp.eq.s32.totalorder %s16, 1
    %p195 = por %p193, %p194
    %p196 = scmp.ne.s32.totalorder %s185, %s186
    %p197 = scmp.eq.s32.totalorder %s16, 0
    %p198 = por %p196, %p197
    %p199 = scmp.ne.s32.totalorder %s185, %s186
    %p200 = scmp.eq.s32.totalorder %s17, 1
    %p201 = por %p199, %p200
    %p203 = scmp.ne.s32.totalorder %s186, %s202
    %p204 = scmp.eq.s32.totalorder %s17, 0
    %p205 = por %p203, %p204
    %p206 = scmp.le.s32.totalorder 1, %s11
    %p207 = scmp.lt.s32.totalorder %s11, 3
    %p208 = pnand %p206, %p207
    %p209 = pneg %p208
    // Predicated region
    $region9: #{bottleneck_forward.7} parent=5 // pred_check
      _
    $region10: #{bottleneck_forward.7} parent=5 // pred_check_branch
      %211 = sbr.rel (%p208) target = $region12
    $region11: #{bottleneck_forward.7} parent=5 // pred_region
      %s212 = ssub.s32 %s11, 1
      // Predicated region
      $region13: #{bottleneck_forward.7} parent=11 // pred_check
        %p213 = pneg %p86
      $region14: #{bottleneck_forward.7} parent=11 // pred_check_branch
        %215 = sbr.rel (%p213) target = $region16
      $region15: #{bottleneck_forward.7} parent=11 // pred_region
        %p216 = scmp.lt.s32.totalorder %s21, 0
        %s217 = scalar_select %p216, %s21, 0
        %s218 = smul.addr %s217, 4
        %s219 = scalar_lea.vmem %s1, %s218
      $region16: #{bottleneck_forward.7} parent=11 // pred_fallthru
        _
      // Predicated region
      $region17: #{bottleneck_forward.7} parent=11 // pred_check
        %p220 = pneg %p112
      $region18: #{bottleneck_forward.7} parent=11 // pred_check_branch
        %222 = sbr.rel (%p220) target = $region20
      $region19: #{bottleneck_forward.7} parent=11 // pred_region
        %p223 = scmp.lt.s32.totalorder %s21, 0
        %s224 = scalar_select %p223, %s21, 0
        %s225 = scalar_lea.vmem %s2, %s224
      $region20: #{bottleneck_forward.7} parent=11 // pred_fallthru
        _
      // Predicated region
      $region21: #{bottleneck_forward.7} parent=11 // pred_check
        %p226 = pneg %p138
      $region22: #{bottleneck_forward.7} parent=11 // pred_check_branch
        %228 = sbr.rel (%p226) target = $region24
      $region23: #{bottleneck_forward.7} parent=11 // pred_region
        %p229 = scmp.lt.s32.totalorder %s21, 0
        %s230 = scalar_select %p229, %s21, 0
        %s231 = scalar_lea.vmem %s3, %s230
      $region24: #{bottleneck_forward.7} parent=11 // pred_fallthru
        _
    $region12: #{bottleneck_forward.7} parent=5 // pred_fallthru
      _
    %p232 = scmp.lt.s32.totalorder %s11, 2
    // Predicated region
    $region25: #{bottleneck_forward.7} parent=5 // pred_check
      %p233 = pneg %p232
    $region26: #{bottleneck_forward.7} parent=5 // pred_check_branch
      %235 = sbr.rel (%p233) target = $region28
    $region27: #{bottleneck_forward.7} parent=5 // pred_region
      // Predicated region
      $region29: #{bottleneck_forward.7} parent=27 // pred_check
        %p236 = pneg %p54
      $region30: #{bottleneck_forward.7} parent=27 // pred_check_branch
        %238 = sbr.rel (%p236) target = $region32
      $region31: #{bottleneck_forward.7} parent=27 // pred_region
        %s239 = ssub.s32 1, %s19
        %s240 = smul.u32 %s20, %s239
        %s241 = smul.u32 16, %s240
        %p242 = scmp.lt.s32.totalorder %s241, 15
        %s243 = scalar_select %p242, %s241, 15
        %s244 = smul.addr %s243, 4
        %s245 = scalar_lea.vmem %s0, %s244
        %s246 = ssub.s32 1, %s19
        %s247 = smul.u32 %s20, %s246
        %s248 = smul.u32 16, %s247
      $region32: #{bottleneck_forward.7} parent=27 // pred_fallthru
        _
      // Predicated region
      $region33: #{bottleneck_forward.7} parent=27 // pred_check
        %p249 = pneg %p162
      $region34: #{bottleneck_forward.7} parent=27 // pred_check_branch
        %251 = sbr.rel (%p249) target = $region36
      $region35: #{bottleneck_forward.7} parent=27 // pred_region
        %s252 = smul.u32 %s20, %s19
        %s253 = smul.u32 16, %s252
        %p254 = scmp.lt.s32.totalorder %s253, 15
        %s255 = scalar_select %p254, %s253, 15
        %p256 = scmp.lt.s32.totalorder %s18, 0
        %s257 = scalar_select %p256, %s18, 0
        %s258 = sadd.s32 %s257, %s255
        %s259 = smul.addr %s258, 4
        %s260 = scalar_lea.vmem %s4, %s259
        %s261 = smul.u32 %s20, %s19
        %s262 = smul.u32 16, %s261
      $region36: #{bottleneck_forward.7} parent=27 // pred_fallthru
        _
    $region28: #{bottleneck_forward.7} parent=5 // pred_fallthru
      _
    %p263 = scmp.le.s32.totalorder 1, %s11
    %p264 = scmp.lt.s32.totalorder %s11, 3
    %p265 = pnand %p263, %p264
    %p266 = pneg %p265
    // Predicated region
    $region37: #{bottleneck_forward.7} parent=5 // pred_check
      _
    $region38: #{bottleneck_forward.7} parent=5 // pred_check_branch
      %268 = sbr.rel (%p265) target = $region40
    $region39: #{bottleneck_forward.7} parent=5 // pred_region
      %s269 = ssub.s32 %s11, 1
      %s270 = ssub.s32 1, %s22
      %s271 = smul.u32 %s23, %s270
      %s272 = smul.u32 16, %s271
      %p273 = scmp.lt.s32.totalorder %s272, 15
      %s274 = scalar_select %p273, %s272, 15
      %s275 = smul.addr %s274, 4
      %s276 = scalar_lea.vmem %s0, %s275
      %p277 = pneg %p60
      %p278 = pneg %p57
      %p279 = scmp.lt.s32.totalorder %s21, 0
      %s280 = scalar_select %p279, %s21, 0
      %s281 = smul.addr %s280, 4
      %s282 = scalar_lea.vmem %s1, %s281
      %p283 = pneg %p86
      %p284 = pneg %p83
      %p285 = scmp.lt.s32.totalorder %s21, 0
      %s286 = scalar_select %p285, %s21, 0
      %s287 = scalar_lea.vmem %s2, %s286
      %p288 = pneg %p112
      %p289 = pneg %p109
      %p290 = scmp.lt.s32.totalorder %s21, 0
      %s291 = scalar_select %p290, %s21, 0
      %s292 = scalar_lea.vmem %s3, %s291
      %p293 = pneg %p138
      %p294 = pneg %p135
      %s295 = smul.u32 %s23, %s22
      %s296 = smul.u32 16, %s295
      %p297 = scmp.lt.s32.totalorder %s296, 15
      %s298 = scalar_select %p297, %s296, 15
      %p299 = scmp.lt.s32.totalorder %s21, 0
      %s300 = scalar_select %p299, %s21, 0
      %s301 = sadd.s32 %s300, %s298
      %s302 = smul.addr %s301, 4
      %s303 = scalar_lea.vmem %s4, %s302
      %p304 = pneg %p168
      %p305 = pneg %p165
      %p306 = pneg %p198
      %p307 = pneg %p195
      %s308 = smul.u32 %s23, %s22
      %s309 = smul.u32 16, %s308
      %p310 = scmp.lt.s32.totalorder %s309, 15
      %s311 = scalar_select %p310, %s309, 15
      %p312 = scmp.lt.s32.totalorder %s21, 0
      %s313 = scalar_select %p312, %s21, 0
      %s314 = sadd.s32 %s313, %s311
      %s315 = smul.addr %s314, 4
      %s316 = scalar_lea.vmem %s5, %s315
      %s317 = ssub.s32 1, %s22
      %s318 = smul.u32 %s23, %s317
      %s319 = smul.u32 16, %s318
      %p320 = scmp.lt.s32.totalorder %s319, 15
      %s321 = scalar_select %p320, %s319, 15
      %s322 = smul.addr %s321, 4
      %s323 = scalar_lea.vmem %s0, %s322
      %s324 = ssub.s32 1, %s22
      %s325 = smul.u32 %s23, %s324
      %s326 = smul.u32 16, %s325
      %p327 = scmp.lt.s32.totalorder %s21, 0
      %s328 = scalar_select %p327, %s21, 0
      %s329 = smul.addr %s328, 4
      %s330 = scalar_lea.vmem %s1, %s329
      %p331 = scmp.lt.s32.totalorder %s21, 0
      %s332 = scalar_select %p331, %s21, 0
      %s333 = scalar_lea.vmem %s2, %s332
      %p334 = scmp.lt.s32.totalorder %s21, 0
      %s335 = scalar_select %p334, %s21, 0
      %s336 = scalar_lea.vmem %s3, %s335
      %s337 = smul.u32 %s23, %s22
      %s338 = smul.u32 16, %s337
      %p339 = scmp.lt.s32.totalorder %s338, 15
      %s340 = scalar_select %p339, %s338, 15
      %p341 = scmp.lt.s32.totalorder %s21, 0
      %s342 = scalar_select %p341, %s21, 0
      %s343 = sadd.s32 %s342, %s340
      %s344 = smul.addr %s343, 4
      %s345 = scalar_lea.vmem %s4, %s344
      %s346 = smul.u32 %s23, %s22
      %s347 = smul.u32 16, %s346
      %s348 = smul.u32 %s23, %s22
      %s349 = smul.u32 16, %s348
      %p350 = scmp.lt.s32.totalorder %s349, 15
      %s351 = scalar_select %p350, %s349, 15
      %p352 = scmp.lt.s32.totalorder %s21, 0
      %s353 = scalar_select %p352, %s21, 0
      %s354 = sadd.s32 %s353, %s351
      %s355 = smul.addr %s354, 4
      %s356 = scalar_lea.vmem %s5, %s355
      %s357 = smul.u32 %s23, %s22
      %s358 = smul.u32 16, %s357
      %p360 = scmp.eq.s32.totalorder %s22, 0
      // Predicated region
      $region41: #{bottleneck_forward.7} parent=39 // pred_check
        %p361 = pneg %p360
      $region42: #{bottleneck_forward.7} parent=39 // pred_check_branch
        %363 = sbr.rel (%p361) target = $region44
      $region43: #{bottleneck_forward.7} parent=39 // pred_region
        %p364 = scmp.eq.s32.totalorder %s23, 0
        // Predicated region
        $region45: #{bottleneck_forward.7} parent=43 // pred_check
          %p365 = pneg %p364
        $region46: #{bottleneck_forward.7} parent=43 // pred_check_branch
          %367 = sbr.rel (%p365) target = $region48
        $region47: #{bottleneck_forward.7} parent=43 // pred_region
          %368 = vst [vmem:[#allocation3] sm:$0x1] 0.0
          %369 = vst [vmem:[#allocation4] sm:$0x1] 0.0
        $region48: #{bottleneck_forward.7} parent=43 // pred_fallthru
          _
        %s370 = smul.u32 %s23, 128
        %v371 = vld [vmem:[%s323] sm:$0xf]
        %v372 = vld [vmem:[%s323 + $0x4] sm:$0xf]
        %v373 = vld [vmem:[%s323 + $0x8] sm:$0xf]
        %v374 = vld [vmem:[%s323 + $0xc] sm:$0xf]
        %v375 = vld [vmem:[%s323 + $0x10] sm:$0xf]
        %v376 = vld [vmem:[%s323 + $0x14] sm:$0xf]
        %v377 = vld [vmem:[%s323 + $0x18] sm:$0xf]
        %v378 = vld [vmem:[%s323 + $0x1c] sm:$0xf]
        %v379 = vld [vmem:[%s323 + $0x20] sm:$0xf]
        %v380 = vld [vmem:[%s323 + $0x24] sm:$0xf]
        %v381 = vld [vmem:[%s323 + $0x28] sm:$0xf]
        %v382 = vld [vmem:[%s323 + $0x2c] sm:$0xf]
        %v383 = vld [vmem:[%s323 + $0x30] sm:$0xf]
        %v384 = vld [vmem:[%s323 + $0x34] sm:$0xf]
        %v385 = vld [vmem:[%s323 + $0x38] sm:$0xf]
        %v386 = vld [vmem:[%s323 + $0x3c] sm:$0xf]
        %v387 = vld [vmem:[%s330] sm:$0xf]
        %v388 = vld [vmem:[%s330 + $0x4] sm:$0xf]
        %v389 = vld [vmem:[%s330 + $0x8] sm:$0xf]
        %v390 = vld [vmem:[%s330 + $0xc] sm:$0xf]
        %v391 = vld [vmem:[%s330 + $0x10] sm:$0xf]
        %v392 = vld [vmem:[%s330 + $0x14] sm:$0xf]
        %v393 = vld [vmem:[%s330 + $0x18] sm:$0xf]
        %v394 = vld [vmem:[%s330 + $0x1c] sm:$0xf]
        %v395 = vld [vmem:[%s330 + $0x20] sm:$0xf]
        %v396 = vld [vmem:[%s330 + $0x24] sm:$0xf]
        %v397 = vld [vmem:[%s330 + $0x28] sm:$0xf]
        %v398 = vld [vmem:[%s330 + $0x2c] sm:$0xf]
        %v399 = vld [vmem:[%s330 + $0x30] sm:$0xf]
        %v400 = vld [vmem:[%s330 + $0x34] sm:$0xf]
        %v401 = vld [vmem:[%s330 + $0x38] sm:$0xf]
        %v402 = vld [vmem:[%s330 + $0x3c] sm:$0xf]
        %v419 = vunpack.c.l.b16 %v371
        %v420 = vunpack.c.l.b16 %v372
        %v421 = vunpack.c.l.b16 %v373
        %v422 = vunpack.c.l.b16 %v374
        %v423 = vunpack.c.l.b16 %v375
        %v424 = vunpack.c.l.b16 %v376
        %v425 = vunpack.c.l.b16 %v377
        %v426 = vunpack.c.l.b16 %v378
        %v427 = vunpack.c.l.b16 %v379
        %v428 = vunpack.c.l.b16 %v380
        %v429 = vunpack.c.l.b16 %v381
        %v430 = vunpack.c.l.b16 %v382
        %v431 = vunpack.c.l.b16 %v383
        %v432 = vunpack.c.l.b16 %v384
        %v433 = vunpack.c.l.b16 %v385
        %v434 = vunpack.c.l.b16 %v386
        %v435 = vpack.c.b16 %v420, %v419
        %v436 = vpack.c.b16 %v422, %v421
        %v437 = vpack.c.b16 %v424, %v423
        %v438 = vpack.c.b16 %v426, %v425
        %v439 = vpack.c.b16 %v428, %v427
        %v440 = vpack.c.b16 %v430, %v429
        %v441 = vpack.c.b16 %v432, %v431
        %v442 = vpack.c.b16 %v434, %v433
        %v467 = vunpack.c.l.b16 %v387
        %v468 = vunpack.c.l.b16 %v388
        %v469 = vunpack.c.l.b16 %v389
        %v470 = vunpack.c.l.b16 %v390
        %v471 = vunpack.c.l.b16 %v391
        %v472 = vunpack.c.l.b16 %v392
        %v473 = vunpack.c.l.b16 %v393
        %v474 = vunpack.c.l.b16 %v394
        %v475 = vunpack.c.l.b16 %v395
        %v476 = vunpack.c.l.b16 %v396
        %v477 = vunpack.c.l.b16 %v397
        %v478 = vunpack.c.l.b16 %v398
        %v479 = vunpack.c.l.b16 %v399
        %v480 = vunpack.c.l.b16 %v400
        %v481 = vunpack.c.l.b16 %v401
        %v482 = vunpack.c.l.b16 %v402
        %v483 = vpack.c.b16 %v468, %v467
        %v484 = vpack.c.b16 %v470, %v469
        %v485 = vpack.c.b16 %v472, %v471
        %v486 = vpack.c.b16 %v474, %v473
        %v487 = vpack.c.b16 %v476, %v475
        %v488 = vpack.c.b16 %v478, %v477
        %v489 = vpack.c.b16 %v480, %v479
        %v490 = vpack.c.b16 %v482, %v481
        %499 = vmatprep.subr.bf16.mxu0 0
        %500 = vmatpush1.bf16.msra.mxu0 %v490
        %501 = vmatprep.subr.bf16.mxu0 0
        %502 = vmatpush1.bf16.msra.mxu0 %v489
        %503 = vmatprep.subr.bf16.mxu0 0
        %504 = vmatpush1.bf16.msra.mxu0 %v488
        %505 = vmatprep.subr.bf16.mxu0 0
        %506 = vmatpush1.bf16.msra.mxu0 %v487
        %507 = vmatprep.subr.bf16.mxu0 0
        %508 = vmatpush1.bf16.msra.mxu0 %v486
        %509 = vmatprep.subr.bf16.mxu0 0
        %510 = vmatpush1.bf16.msra.mxu0 %v485
        %511 = vmatprep.subr.bf16.mxu0 0
        %512 = vmatpush1.bf16.msra.mxu0 %v484
        %513 = vmatprep.subr.bf16.mxu0 0
        %514 = vmatpush1.bf16.msra.mxu0 %v483
        %515 = vmatprep.subr.bf16.mxu0 0
        %516 = vmatpush2.bf16.msra.mxu0 0
        %517 = vmatprep.subr.bf16.mxu0 0
        %518 = vmatpush2.bf16.msra.mxu0 0
        %519 = vmatprep.subr.bf16.mxu0 0
        %520 = vmatpush2.bf16.msra.mxu0 0
        %521 = vmatprep.subr.bf16.mxu0 0
        %522 = vmatpush2.bf16.msra.mxu0 0
        %523 = vmatprep.subr.bf16.mxu0 0
        %524 = vmatpush2.bf16.msra.mxu0 0
        %525 = vmatprep.subr.bf16.mxu0 0
        %526 = vmatpush2.bf16.msra.mxu0 0
        %527 = vmatprep.subr.bf16.mxu0 0
        %528 = vmatpush2.bf16.msra.mxu0 0
        %529 = vmatprep.subr.bf16.mxu0 0
        %530 = vmatpush2.bf16.msra.mxu0 0
        %531 = vmatprep.mubr.bf16.mxu0 0
        %532 = vmatmul.mubr.bf16.gmra.mxu0 %v435
        %v533 = vpop.f32.mrf.mxu0
        %v534 = vadd.f32 0.0, %v533
        %v535 = vpop.f32.mrf.mxu0
        %v536 = vpop.f32.mrf.mxu0
        %v537 = vadd.f32 0.0, %v536
        %v538 = vpop.f32.mrf.mxu0
        %539 = vmatprep.mubr.bf16.mxu0 0
        %540 = vmatmul.mubr.bf16.gmra.mxu0 %v436
        %v541 = vpop.f32.mrf.mxu0
        %v542 = vadd.f32 0.0, %v541
        %v543 = vpop.f32.mrf.mxu0
        %v544 = vpop.f32.mrf.mxu0
        %v545 = vadd.f32 0.0, %v544
        %v546 = vpop.f32.mrf.mxu0
        %547 = vmatprep.mubr.bf16.mxu0 0
        %548 = vmatmul.mubr.bf16.gmra.mxu0 %v437
        %v549 = vpop.f32.mrf.mxu0
        %v550 = vadd.f32 0.0, %v549
        %v551 = vpop.f32.mrf.mxu0
        %v552 = vpop.f32.mrf.mxu0
        %v553 = vadd.f32 0.0, %v552
        %v554 = vpop.f32.mrf.mxu0
        %555 = vmatprep.mubr.bf16.mxu0 0
        %556 = vmatmul.mubr.bf16.gmra.mxu0 %v438
        %v557 = vpop.f32.mrf.mxu0
        %v558 = vadd.f32 0.0, %v557
        %v559 = vpop.f32.mrf.mxu0
        %v560 = vpop.f32.mrf.mxu0
        %v561 = vadd.f32 0.0, %v560
        %v562 = vpop.f32.mrf.mxu0
        %563 = vmatprep.mubr.bf16.mxu0 0
        %564 = vmatmul.mubr.bf16.gmra.mxu0 %v439
        %v565 = vpop.f32.mrf.mxu0
        %v566 = vadd.f32 0.0, %v565
        %v567 = vpop.f32.mrf.mxu0
        %v568 = vpop.f32.mrf.mxu0
        %v569 = vadd.f32 0.0, %v568
        %v570 = vpop.f32.mrf.mxu0
        %571 = vmatprep.mubr.bf16.mxu0 0
        %572 = vmatmul.mubr.bf16.gmra.mxu0 %v440
        %v573 = vpop.f32.mrf.mxu0
        %v574 = vadd.f32 0.0, %v573
        %v575 = vpop.f32.mrf.mxu0
        %v576 = vpop.f32.mrf.mxu0
        %v577 = vadd.f32 0.0, %v576
        %v578 = vpop.f32.mrf.mxu0
        %579 = vmatprep.mubr.bf16.mxu0 0
        %580 = vmatmul.mubr.bf16.gmra.mxu0 %v441
        %v581 = vpop.f32.mrf.mxu0
        %v582 = vadd.f32 0.0, %v581
        %v583 = vpop.f32.mrf.mxu0
        %v584 = vpop.f32.mrf.mxu0
        %v585 = vadd.f32 0.0, %v584
        %v586 = vpop.f32.mrf.mxu0
        %587 = vmatprep.mubr.bf16.mxu0 0
        %588 = vmatmul.mubr.bf16.gmra.mxu0 %v442
        %v589 = vpop.f32.mrf.mxu0
        %v590 = vadd.f32 0.0, %v589
        %v591 = vpop.f32.mrf.mxu0
        %v592 = vpop.f32.mrf.mxu0
        %v593 = vadd.f32 0.0, %v592
        %v594 = vpop.f32.mrf.mxu0
        %595 = vdwg.mxu0
        %s596 = scalar_lea.vmem [#allocation2], %s370
        %597 = vst [vmem:[%s596] sm:$0xff] %v534
        %598 = vst [vmem:[%s596 + $0x8] sm:$0xff] %v537
        %599 = vst [vmem:[%s596 + $0x10] sm:$0xff] %v542
        %600 = vst [vmem:[%s596 + $0x18] sm:$0xff] %v545
        %601 = vst [vmem:[%s596 + $0x20] sm:$0xff] %v550
        %602 = vst [vmem:[%s596 + $0x28] sm:$0xff] %v553
        %603 = vst [vmem:[%s596 + $0x30] sm:$0xff] %v558
        %604 = vst [vmem:[%s596 + $0x38] sm:$0xff] %v561
        %605 = vst [vmem:[%s596 + $0x40] sm:$0xff] %v566
        %606 = vst [vmem:[%s596 + $0x48] sm:$0xff] %v569
        %607 = vst [vmem:[%s596 + $0x50] sm:$0xff] %v574
        %608 = vst [vmem:[%s596 + $0x58] sm:$0xff] %v577
        %609 = vst [vmem:[%s596 + $0x60] sm:$0xff] %v582
        %610 = vst [vmem:[%s596 + $0x68] sm:$0xff] %v585
        %611 = vst [vmem:[%s596 + $0x70] sm:$0xff] %v590
        %612 = vst [vmem:[%s596 + $0x78] sm:$0xff] %v593
        %v613 = vld [vmem:[%s596] sm:$0xff]
        %v614 = vld [vmem:[%s596 + $0x8] sm:$0xff]
        %v615 = vld [vmem:[%s596 + $0x10] sm:$0xff]
        %v616 = vld [vmem:[%s596 + $0x18] sm:$0xff]
        %v617 = vld [vmem:[%s596 + $0x20] sm:$0xff]
        %v618 = vld [vmem:[%s596 + $0x28] sm:$0xff]
        %v619 = vld [vmem:[%s596 + $0x30] sm:$0xff]
        %v620 = vld [vmem:[%s596 + $0x38] sm:$0xff]
        %v621 = vld [vmem:[%s596 + $0x40] sm:$0xff]
        %v622 = vld [vmem:[%s596 + $0x48] sm:$0xff]
        %v623 = vld [vmem:[%s596 + $0x50] sm:$0xff]
        %v624 = vld [vmem:[%s596 + $0x58] sm:$0xff]
        %v625 = vld [vmem:[%s596 + $0x60] sm:$0xff]
        %v626 = vld [vmem:[%s596 + $0x68] sm:$0xff]
        %v627 = vld [vmem:[%s596 + $0x70] sm:$0xff]
        %v628 = vld [vmem:[%s596 + $0x78] sm:$0xff]
        %v629 = vadd.f32 %v613, %v614
        %v630 = vadd.f32 %v629, %v615
        %v631 = vadd.f32 %v630, %v616
        %v632 = vadd.f32 %v631, %v617
        %v633 = vadd.f32 %v632, %v618
        %v634 = vadd.f32 %v633, %v619
        %v635 = vadd.f32 %v634, %v620
        %v636 = vadd.f32 %v635, %v621
        %v637 = vadd.f32 %v636, %v622
        %v638 = vadd.f32 %v637, %v623
        %v639 = vadd.f32 %v638, %v624
        %v640 = vadd.f32 %v639, %v625
        %v641 = vadd.f32 %v640, %v626
        %v642 = vadd.f32 %v641, %v627
        %v643 = vadd.f32 %v642, %v628
        %v644 = vrot.slane %v643, 4
        %v645 = vadd.f32 %v643, %v644
        %v646 = vrot.slane %v645, 2
        %v647 = vadd.f32 %v645, %v646
        %v648 = vrot.slane %v647, 1
        %v649 = vadd.f32 %v647, %v648
        %v650 = vadd.f32 %v649, 0.0
        %v651 = vmul.f32 %v613, %v613
        %v652 = vmul.f32 %v614, %v614
        %v653 = vmul.f32 %v615, %v615
        %v654 = vmul.f32 %v616, %v616
        %v655 = vmul.f32 %v617, %v617
        %v656 = vmul.f32 %v618, %v618
        %v657 = vmul.f32 %v619, %v619
        %v658 = vmul.f32 %v620, %v620
        %v659 = vmul.f32 %v621, %v621
        %v660 = vmul.f32 %v622, %v622
        %v661 = vmul.f32 %v623, %v623
        %v662 = vmul.f32 %v624, %v624
        %v663 = vmul.f32 %v625, %v625
        %v664 = vmul.f32 %v626, %v626
        %v665 = vmul.f32 %v627, %v627
        %v666 = vmul.f32 %v628, %v628
        %v667 = vadd.f32 %v651, %v652
        %v668 = vadd.f32 %v667, %v653
        %v669 = vadd.f32 %v668, %v654
        %v670 = vadd.f32 %v669, %v655
        %v671 = vadd.f32 %v670, %v656
        %v672 = vadd.f32 %v671, %v657
        %v673 = vadd.f32 %v672, %v658
        %v674 = vadd.f32 %v673, %v659
        %v675 = vadd.f32 %v674, %v660
        %v676 = vadd.f32 %v675, %v661
        %v677 = vadd.f32 %v676, %v662
        %v678 = vadd.f32 %v677, %v663
        %v679 = vadd.f32 %v678, %v664
        %v680 = vadd.f32 %v679, %v665
        %v681 = vadd.f32 %v680, %v666
        %v682 = vrot.slane %v681, 4
        %v683 = vadd.f32 %v681, %v682
        %v684 = vrot.slane %v683, 2
        %v685 = vadd.f32 %v683, %v684
        %v686 = vrot.slane %v685, 1
        %v687 = vadd.f32 %v685, %v686
        %v688 = vadd.f32 %v687, 0.0
        %v689 = vld [vmem:[#allocation3] sm:$0x1]
        %v690 = vadd.f32 %v689, %v650
        %691 = vst [vmem:[#allocation3] sm:$0x1] %v690
        %v692 = vld [vmem:[#allocation4] sm:$0x1]
        %v693 = vadd.f32 %v692, %v688
        %694 = vst [vmem:[#allocation4] sm:$0x1] %v693
      $region44: #{bottleneck_forward.7} parent=39 // pred_fallthru
        _
      %p695 = scmp.eq.s32.totalorder %s22, 1
      // Predicated region
      $region49: #{bottleneck_forward.7} parent=39 // pred_check
        %p696 = pneg %p695
      $region50: #{bottleneck_forward.7} parent=39 // pred_check_branch
        %698 = sbr.rel (%p696) target = $region52
      $region51: #{bottleneck_forward.7} parent=39 // pred_region
        %p699 = scmp.eq.s32.totalorder %s23, 0
        // Predicated region
        $region53: #{bottleneck_forward.7} parent=51 // pred_check
          %p700 = pneg %p699
        $region54: #{bottleneck_forward.7} parent=51 // pred_check_branch
          %702 = sbr.rel (%p700) target = $region56
        $region55: #{bottleneck_forward.7} parent=51 // pred_region
          %v703 = vld [vmem:[#allocation3] sm:$0x1]
          %v704 = vmul.f32 %v703, 0.0078125
          %v705 = vld [vmem:[#allocation4] sm:$0x1]
          %v706 = vmul.f32 %v705, 0.0078125
          %v707 = vmul.f32 %v704, %v704
          %v708 = vsub.f32 %v706, %v707
          %v709 = vmax.f32 %v708, 0.0
          %v710 = vld [vmem:[%s333] sm:$0x1]
          %v711 = vadd.f32 %v709, 1e-05
          %v712 = vrsqrt.pop %v711
          %v713 = vmul.f32 %v710, %v712
          %714 = vst [vmem:[#allocation5] sm:$0x1] %v713
          %v715 = vld [vmem:[%s336] sm:$0x1]
          %v716 = vmul.f32 %v704, %v713
          %v717 = vsub.f32 %v715, %v716
          %718 = vst [vmem:[#allocation6] sm:$0x1] %v717
        $region56: #{bottleneck_forward.7} parent=51 // pred_fallthru
          _
        %s719 = smul.u32 %s23, 128
        %s720 = scalar_lea.vmem [#allocation2], %s719
        %v721 = vld [vmem:[%s720] sm:$0xff]
        %v722 = vld [vmem:[%s720 + $0x8] sm:$0xff]
        %v723 = vld [vmem:[%s720 + $0x10] sm:$0xff]
        %v724 = vld [vmem:[%s720 + $0x18] sm:$0xff]
        %v725 = vld [vmem:[%s720 + $0x20] sm:$0xff]
        %v726 = vld [vmem:[%s720 + $0x28] sm:$0xff]
        %v727 = vld [vmem:[%s720 + $0x30] sm:$0xff]
        %v728 = vld [vmem:[%s720 + $0x38] sm:$0xff]
        %v729 = vld [vmem:[%s720 + $0x40] sm:$0xff]
        %v730 = vld [vmem:[%s720 + $0x48] sm:$0xff]
        %v731 = vld [vmem:[%s720 + $0x50] sm:$0xff]
        %v732 = vld [vmem:[%s720 + $0x58] sm:$0xff]
        %v733 = vld [vmem:[%s720 + $0x60] sm:$0xff]
        %v734 = vld [vmem:[%s720 + $0x68] sm:$0xff]
        %v735 = vld [vmem:[%s720 + $0x70] sm:$0xff]
        %v736 = vld [vmem:[%s720 + $0x78] sm:$0xff]
        %v737 = vld [vmem:[#allocation5] sm:$0x1]
        %v739 = vlaneseq
        %v740 = vshrl.u32 %v739, 7
        %v741 = vsub.s32 0, %v740
        %v742 = vrot.slane %v737, %v741
        %v744 = vmul.f32 %v721, %v742
        %v745 = vmul.f32 %v722, %v742
        %v746 = vmul.f32 %v723, %v742
        %v747 = vmul.f32 %v724, %v742
        %v748 = vmul.f32 %v725, %v742
        %v749 = vmul.f32 %v726, %v742
        %v750 = vmul.f32 %v727, %v742
        %v751 = vmul.f32 %v728, %v742
        %v752 = vmul.f32 %v729, %v742
        %v753 = vmul.f32 %v730, %v742
        %v754 = vmul.f32 %v731, %v742
        %v755 = vmul.f32 %v732, %v742
        %v756 = vmul.f32 %v733, %v742
        %v757 = vmul.f32 %v734, %v742
        %v758 = vmul.f32 %v735, %v742
        %v759 = vmul.f32 %v736, %v742
        %v760 = vld [vmem:[#allocation6] sm:$0x1]
        %v762 = vlaneseq
        %v763 = vshrl.u32 %v762, 7
        %v764 = vsub.s32 0, %v763
        %v765 = vrot.slane %v760, %v764
        %v767 = vadd.f32 %v744, %v765
        %v768 = vadd.f32 %v745, %v765
        %v769 = vadd.f32 %v746, %v765
        %v770 = vadd.f32 %v747, %v765
        %v771 = vadd.f32 %v748, %v765
        %v772 = vadd.f32 %v749, %v765
        %v773 = vadd.f32 %v750, %v765
        %v774 = vadd.f32 %v751, %v765
        %v775 = vadd.f32 %v752, %v765
        %v776 = vadd.f32 %v753, %v765
        %v777 = vadd.f32 %v754, %v765
        %v778 = vadd.f32 %v755, %v765
        %v779 = vadd.f32 %v756, %v765
        %v780 = vadd.f32 %v757, %v765
        %v781 = vadd.f32 %v758, %v765
        %v782 = vadd.f32 %v759, %v765
        %v783 = vld [vmem:[%s345] sm:$0xf]
        %v784 = vld [vmem:[%s345 + $0x4] sm:$0xf]
        %v785 = vld [vmem:[%s345 + $0x8] sm:$0xf]
        %v786 = vld [vmem:[%s345 + $0xc] sm:$0xf]
        %v787 = vld [vmem:[%s345 + $0x10] sm:$0xf]
        %v788 = vld [vmem:[%s345 + $0x14] sm:$0xf]
        %v789 = vld [vmem:[%s345 + $0x18] sm:$0xf]
        %v790 = vld [vmem:[%s345 + $0x1c] sm:$0xf]
        %v791 = vld [vmem:[%s345 + $0x20] sm:$0xf]
        %v792 = vld [vmem:[%s345 + $0x24] sm:$0xf]
        %v793 = vld [vmem:[%s345 + $0x28] sm:$0xf]
        %v794 = vld [vmem:[%s345 + $0x2c] sm:$0xf]
        %v795 = vld [vmem:[%s345 + $0x30] sm:$0xf]
        %v796 = vld [vmem:[%s345 + $0x34] sm:$0xf]
        %v797 = vld [vmem:[%s345 + $0x38] sm:$0xf]
        %v798 = vld [vmem:[%s345 + $0x3c] sm:$0xf]
        %v799 = vunpack.c.l.bf16 %v783
        %v800 = vunpack.c.l.bf16 %v784
        %v801 = vunpack.c.l.bf16 %v785
        %v802 = vunpack.c.l.bf16 %v786
        %v803 = vunpack.c.l.bf16 %v787
        %v804 = vunpack.c.l.bf16 %v788
        %v805 = vunpack.c.l.bf16 %v789
        %v806 = vunpack.c.l.bf16 %v790
        %v807 = vunpack.c.l.bf16 %v791
        %v808 = vunpack.c.l.bf16 %v792
        %v809 = vunpack.c.l.bf16 %v793
        %v810 = vunpack.c.l.bf16 %v794
        %v811 = vunpack.c.l.bf16 %v795
        %v812 = vunpack.c.l.bf16 %v796
        %v813 = vunpack.c.l.bf16 %v797
        %v814 = vunpack.c.l.bf16 %v798
        %v815 = vadd.f32 %v767, %v799
        %v816 = vadd.f32 %v768, %v800
        %v817 = vadd.f32 %v769, %v801
        %v818 = vadd.f32 %v770, %v802
        %v819 = vadd.f32 %v771, %v803
        %v820 = vadd.f32 %v772, %v804
        %v821 = vadd.f32 %v773, %v805
        %v822 = vadd.f32 %v774, %v806
        %v823 = vadd.f32 %v775, %v807
        %v824 = vadd.f32 %v776, %v808
        %v825 = vadd.f32 %v777, %v809
        %v826 = vadd.f32 %v778, %v810
        %v827 = vadd.f32 %v779, %v811
        %v828 = vadd.f32 %v780, %v812
        %v829 = vadd.f32 %v781, %v813
        %v830 = vadd.f32 %v782, %v814
        %v831 = vmax.f32 %v815, 0.0
        %v832 = vmax.f32 %v816, 0.0
        %v833 = vmax.f32 %v817, 0.0
        %v834 = vmax.f32 %v818, 0.0
        %v835 = vmax.f32 %v819, 0.0
        %v836 = vmax.f32 %v820, 0.0
        %v837 = vmax.f32 %v821, 0.0
        %v838 = vmax.f32 %v822, 0.0
        %v839 = vmax.f32 %v823, 0.0
        %v840 = vmax.f32 %v824, 0.0
        %v841 = vmax.f32 %v825, 0.0
        %v842 = vmax.f32 %v826, 0.0
        %v843 = vmax.f32 %v827, 0.0
        %v844 = vmax.f32 %v828, 0.0
        %v845 = vmax.f32 %v829, 0.0
        %v846 = vmax.f32 %v830, 0.0
        %v847 = vpack.c.bf16 %v832, %v831
        %v848 = vpack.c.bf16 %v834, %v833
        %v849 = vpack.c.bf16 %v836, %v835
        %v850 = vpack.c.bf16 %v838, %v837
        %v851 = vpack.c.bf16 %v840, %v839
        %v852 = vpack.c.bf16 %v842, %v841
        %v853 = vpack.c.bf16 %v844, %v843
        %v854 = vpack.c.bf16 %v846, %v845
        %v863 = vunpack.c.l.b16 %v847
        %v864 = vunpack.c.h.b16 %v847
        %v865 = vunpack.c.l.b16 %v848
        %v866 = vunpack.c.h.b16 %v848
        %v867 = vunpack.c.l.b16 %v849
        %v868 = vunpack.c.h.b16 %v849
        %v869 = vunpack.c.l.b16 %v850
        %v870 = vunpack.c.h.b16 %v850
        %v871 = vunpack.c.l.b16 %v851
        %v872 = vunpack.c.h.b16 %v851
        %v873 = vunpack.c.l.b16 %v852
        %v874 = vunpack.c.h.b16 %v852
        %v875 = vunpack.c.l.b16 %v853
        %v876 = vunpack.c.h.b16 %v853
        %v877 = vunpack.c.l.b16 %v854
        %v878 = vunpack.c.h.b16 %v854
        %v879 = vpack.c.b16 %v863, %v863
        %v880 = vpack.c.b16 %v864, %v864
        %v881 = vpack.c.b16 %v865, %v865
        %v882 = vpack.c.b16 %v866, %v866
        %v883 = vpack.c.b16 %v867, %v867
        %v884 = vpack.c.b16 %v868, %v868
        %v885 = vpack.c.b16 %v869, %v869
        %v886 = vpack.c.b16 %v870, %v870
        %v887 = vpack.c.b16 %v871, %v871
        %v888 = vpack.c.b16 %v872, %v872
        %v889 = vpack.c.b16 %v873, %v873
        %v890 = vpack.c.b16 %v874, %v874
        %v891 = vpack.c.b16 %v875, %v875
        %v892 = vpack.c.b16 %v876, %v876
        %v893 = vpack.c.b16 %v877, %v877
        %v894 = vpack.c.b16 %v878, %v878
        %911 = vst [vmem:[%s356] sm:$0xf] %v879
        %912 = vst [vmem:[%s356 + $0x4] sm:$0xf] %v880
        %913 = vst [vmem:[%s356 + $0x8] sm:$0xf] %v881
        %914 = vst [vmem:[%s356 + $0xc] sm:$0xf] %v882
        %915 = vst [vmem:[%s356 + $0x10] sm:$0xf] %v883
        %916 = vst [vmem:[%s356 + $0x14] sm:$0xf] %v884
        %917 = vst [vmem:[%s356 + $0x18] sm:$0xf] %v885
        %918 = vst [vmem:[%s356 + $0x1c] sm:$0xf] %v886
        %919 = vst [vmem:[%s356 + $0x20] sm:$0xf] %v887
        %920 = vst [vmem:[%s356 + $0x24] sm:$0xf] %v888
        %921 = vst [vmem:[%s356 + $0x28] sm:$0xf] %v889
        %922 = vst [vmem:[%s356 + $0x2c] sm:$0xf] %v890
        %923 = vst [vmem:[%s356 + $0x30] sm:$0xf] %v891
        %924 = vst [vmem:[%s356 + $0x34] sm:$0xf] %v892
        %925 = vst [vmem:[%s356 + $0x38] sm:$0xf] %v893
        %926 = vst [vmem:[%s356 + $0x3c] sm:$0xf] %v894
      $region52: #{bottleneck_forward.7} parent=39 // pred_fallthru
        _
      %s927 = smul.u32 %s23, %s22
      %s928 = smul.u32 16, %s927
      %p929 = scmp.lt.s32.totalorder %s928, 15
      %s930 = scalar_select %p929, %s928, 15
      %p931 = scmp.lt.s32.totalorder %s21, 0
      %s932 = scalar_select %p931, %s21, 0
      %s933 = sadd.s32 %s932, %s930
      %s934 = smul.addr %s933, 4
      %s935 = scalar_lea.vmem %s5, %s934
      // Predicated region
      $region57: #{bottleneck_forward.7} parent=39 // pred_check
        %p936 = pneg %p195
      $region58: #{bottleneck_forward.7} parent=39 // pred_check_branch
        %938 = sbr.rel (%p936) target = $region60
      $region59: #{bottleneck_forward.7} parent=39 // pred_region
        %s939 = smul.u32 %s23, %s22
        %s940 = smul.u32 16, %s939
      $region60: #{bottleneck_forward.7} parent=39 // pred_fallthru
        _
    $region40: #{bottleneck_forward.7} parent=5 // pred_fallthru
      _
    %p941 = scmp.le.s32.totalorder 2, %s11
    // Predicated region
    $region61: #{bottleneck_forward.7} parent=5 // pred_check
      %p942 = pneg %p941
    $region62: #{bottleneck_forward.7} parent=5 // pred_check_branch
      %944 = sbr.rel (%p942) target = $region64
    $region63: #{bottleneck_forward.7} parent=5 // pred_region
      %s945 = ssub.s32 %s11, 2
      // Predicated region
      $region65: #{bottleneck_forward.7} parent=63 // pred_check
        %p946 = pneg %p201
      $region66: #{bottleneck_forward.7} parent=63 // pred_check_branch
        %948 = sbr.rel (%p946) target = $region68
      $region67: #{bottleneck_forward.7} parent=63 // pred_region
        %s949 = smul.u32 %s26, %s25
        %s950 = smul.u32 16, %s949
        %p951 = scmp.lt.s32.totalorder %s950, 15
        %s952 = scalar_select %p951, %s950, 15
        %p953 = scmp.lt.s32.totalorder %s24, 0
        %s954 = scalar_select %p953, %s24, 0
        %s955 = sadd.s32 %s954, %s952
        %s956 = smul.addr %s955, 4
        %s957 = scalar_lea.vmem %s5, %s956
      $region68: #{bottleneck_forward.7} parent=63 // pred_fallthru
        _
    $region64: #{bottleneck_forward.7} parent=5 // pred_fallthru
      _
  $region6: #{bottleneck_forward.7} parent=0 // loop_footer
    %s15 = sadd.s32 1, %s11
  $region7: #{bottleneck_forward.7} parent=0 // loop_footer_branch
    %10 = sbr.rel target = $region3
  $region8: #{bottleneck_forward.7} parent=0 // loop_exit
    _

// kernel: bottleneck_forward.5
$region0: #{bottleneck_forward.5}
  #allocation0 [shape = 'u32[]', space=smem, size = 0x4, offset = 0x4, fixed_abs, tag = 'smem constant byte address 0x4 - core index']
  #allocation1 [shape = 'u32[144,128]{1,0:T(1,128)}', space=vmem, size = 0x12000, scoped, tag = 'internal scratch']
  #allocation2 [shape = 'f32[128,128]{1,0:T(8,128)}', space=vmem, size = 0x10000, scoped, tag = 'scratch operand']
  #allocation3 [shape = 'f32[1,128]{1,0:T(1,128)}', space=vmem, size = 0x200, scoped, tag = 'scratch operand']
  #allocation4 [shape = 'f32[1,128]{1,0:T(1,128)}', space=vmem, size = 0x200, scoped, tag = 'scratch operand']
  #allocation5 [shape = 'f32[1,128]{1,0:T(1,128)}', space=vmem, size = 0x200, scoped, tag = 'scratch operand']
  #allocation6 [shape = 'f32[1,128]{1,0:T(1,128)}', space=vmem, size = 0x200, scoped, tag = 'scratch operand']
  %s0 = inlined_call_operand.vmem [shape: bf16[128,1152], index: 0, kind: input, shape index: {}]
  %s1 = inlined_call_operand.vmem [shape: bf16[1152,128], index: 1, kind: input, shape index: {}]
  %s2 = inlined_call_operand.vmem [shape: f32[1,128], index: 2, kind: input, shape index: {}]
  %s3 = inlined_call_operand.vmem [shape: f32[1,128], index: 3, kind: input, shape index: {}]
  %s4 = inlined_call_operand.vmem [shape: bf16[128,128], index: 4, kind: output, shape index: {}]
  %s5 = sld [smem:[#allocation0]]
  $region65: #{bottleneck_forward.5} parent=0
    _
  %s7 = ssub.s32 1, %s5
  %s8 = scalar_select 0, %s7, %s5
  loop: start=0, step=1, limit=4
  $region2: #{bottleneck_forward.5} parent=0 // loop_pre_header
    _
  $region3: #{bottleneck_forward.5} parent=0 // loop_header
    %s10 = sphi 0, %s14
    %p11 = scmp.ge.s32.totalorder %s10, 4
    %s17 = sphi 0, %s36
    %s18 = sphi 0, %s32
    %s19 = sphi 0, %s28
    %s20 = sphi 0, %s17
    %s21 = sphi 0, %s18
    %s22 = sphi 0, %s19
    %s23 = sphi 0, %s20
    %s24 = sphi 0, %s21
    %s25 = sphi 0, %s22
    %s43 = sphi 0, %s45
    %s46 = sphi 0, %s43
    %s47 = sphi 0, %s46
    %s63 = sphi 0, %s47
    %s69 = sphi 0, %s71
    %s72 = sphi 0, %s69
    %s73 = sphi 0, %s72
    %s89 = sphi 0, %s73
    %s95 = sphi 0, %s97
    %s98 = sphi 0, %s95
    %s99 = sphi 0, %s98
    %s115 = sphi 0, %s99
    %s121 = sphi 0, %s123
    %s124 = sphi 0, %s121
    %s125 = sphi 0, %s124
    %s141 = sphi 0, %s125
    %s151 = sphi 0, %s153
    %s154 = sphi 0, %s151
    %s155 = sphi 0, %s154
    %s171 = sphi 0, %s155
  $region4: #{bottleneck_forward.5} parent=0 // loop_header_branch
    %13 = sbr.rel (%p11) target = $region8
  $region5: #{bottleneck_forward.5} parent=0 // loop_body
    %s15 = ssub.s32 %s10, 1
    %s16 = ssub.s32 %s10, 2
    %s26 = sadd.s32 1, %s19
    %p27 = scmp.ge.s32.totalorder %s26, 1
    %s28 = scalar_select %p27, 0, %s26
    %s29 = sadd.s32 1, %s18
    %s30 = scalar_select %p27, %s29, %s18
    %p31 = scmp.ge.s32.totalorder %s30, 2
    %s32 = scalar_select %p31, 0, %s30
    %s33 = sadd.s32 1, %s17
    %s34 = scalar_select %p31, %s33, %s17
    %p35 = scmp.ge.s32.totalorder %s34, 1
    %s36 = scalar_select %p35, 0, %s34
    %s37 = ssub.s32 1, %s18
    %s38 = smul.u32 %s19, %s37
    %s39 = ssub.s32 1, %s32
    %s40 = smul.u32 %s28, %s39
    %s41 = ssub.s32 %s38, %s40
    %p42 = scmp.eq.s32.totalorder %s41, 0
    %s44 = sadd.s32 %s43, 1
    %s45 = scalar_select %p42, %s43, %s44
    %p48 = pneg %p42
    %p49 = scmp.eq.s32.totalorder %s10, 1
    %p50 = por %p48, %p49
    %p51 = scmp.ne.s32.totalorder %s43, %s46
    %p52 = scmp.eq.s32.totalorder %s10, 0
    %p53 = por %p51, %p52
    %p54 = scmp.ne.s32.totalorder %s43, %s46
    %p55 = scmp.eq.s32.totalorder %s15, 1
    %p56 = por %p54, %p55
    %p57 = scmp.ne.s32.totalorder %s46, %s47
    %p58 = scmp.eq.s32.totalorder %s15, 0
    %p59 = por %p57, %p58
    %p60 = scmp.ne.s32.totalorder %s46, %s47
    %p61 = scmp.eq.s32.totalorder %s16, 1
    %p62 = por %p60, %p61
    %p64 = scmp.ne.s32.totalorder %s47, %s63
    %p65 = scmp.eq.s32.totalorder %s16, 0
    %p66 = por %p64, %p65
    %s67 = ssub.s32 %s17, %s36
    %p68 = scmp.eq.s32.totalorder %s67, 0
    %s70 = sadd.s32 %s69, 1
    %s71 = scalar_select %p68, %s69, %s70
    %p74 = pneg %p68
    %p75 = scmp.eq.s32.totalorder %s10, 1
    %p76 = por %p74, %p75
    %p77 = scmp.ne.s32.totalorder %s69, %s72
    %p78 = scmp.eq.s32.totalorder %s10, 0
    %p79 = por %p77, %p78
    %p80 = scmp.ne.s32.totalorder %s69, %s72
    %p81 = scmp.eq.s32.totalorder %s15, 1
    %p82 = por %p80, %p81
    %p83 = scmp.ne.s32.totalorder %s72, %s73
    %p84 = scmp.eq.s32.totalorder %s15, 0
    %p85 = por %p83, %p84
    %p86 = scmp.ne.s32.totalorder %s72, %s73
    %p87 = scmp.eq.s32.totalorder %s16, 1
    %p88 = por %p86, %p87
    %p90 = scmp.ne.s32.totalorder %s73, %s89
    %p91 = scmp.eq.s32.totalorder %s16, 0
    %p92 = por %p90, %p91
    %s93 = ssub.s32 %s17, %s36
    %p94 = scmp.eq.s32.totalorder %s93, 0
    %s96 = sadd.s32 %s95, 1
    %s97 = scalar_select %p94, %s95, %s96
    %p100 = pneg %p94
    %p101 = scmp.eq.s32.totalorder %s10, 1
    %p102 = por %p100, %p101
    %p103 = scmp.ne.s32.totalorder %s95, %s98
    %p104 = scmp.eq.s32.totalorder %s10, 0
    %p105 = por %p103, %p104
    %p106 = scmp.ne.s32.totalorder %s95, %s98
    %p107 = scmp.eq.s32.totalorder %s15, 1
    %p108 = por %p106, %p107
    %p109 = scmp.ne.s32.totalorder %s98, %s99
    %p110 = scmp.eq.s32.totalorder %s15, 0
    %p111 = por %p109, %p110
    %p112 = scmp.ne.s32.totalorder %s98, %s99
    %p113 = scmp.eq.s32.totalorder %s16, 1
    %p114 = por %p112, %p113
    %p116 = scmp.ne.s32.totalorder %s99, %s115
    %p117 = scmp.eq.s32.totalorder %s16, 0
    %p118 = por %p116, %p117
    %s119 = ssub.s32 %s17, %s36
    %p120 = scmp.eq.s32.totalorder %s119, 0
    %s122 = sadd.s32 %s121, 1
    %s123 = scalar_select %p120, %s121, %s122
    %p126 = pneg %p120
    %p127 = scmp.eq.s32.totalorder %s10, 1
    %p128 = por %p126, %p127
    %p129 = scmp.ne.s32.totalorder %s121, %s124
    %p130 = scmp.eq.s32.totalorder %s10, 0
    %p131 = por %p129, %p130
    %p132 = scmp.ne.s32.totalorder %s121, %s124
    %p133 = scmp.eq.s32.totalorder %s15, 1
    %p134 = por %p132, %p133
    %p135 = scmp.ne.s32.totalorder %s124, %s125
    %p136 = scmp.eq.s32.totalorder %s15, 0
    %p137 = por %p135, %p136
    %p138 = scmp.ne.s32.totalorder %s124, %s125
    %p139 = scmp.eq.s32.totalorder %s16, 1
    %p140 = por %p138, %p139
    %p142 = scmp.ne.s32.totalorder %s125, %s141
    %p143 = scmp.eq.s32.totalorder %s16, 0
    %p144 = por %p142, %p143
    %s145 = smul.u32 %s19, %s18
    %s146 = smul.u32 %s28, %s32
    %s147 = ssub.s32 %s145, %s146
    %s148 = ssub.s32 %s17, %s36
    %s149 = sor.u32 %s147, %s148
    %p150 = scmp.eq.s32.totalorder %s149, 0
    %s152 = sadd.s32 %s151, 1
    %s153 = scalar_select %p150, %s151, %s152
    %p156 = pneg %p150
    %p157 = scmp.eq.s32.totalorder %s10, 1
    %p158 = por %p156, %p157
    %p159 = scmp.ne.s32.totalorder %s151, %s154
    %p160 = scmp.eq.s32.totalorder %s10, 0
    %p161 = por %p159, %p160
    %p162 = scmp.ne.s32.totalorder %s151, %s154
    %p163 = scmp.eq.s32.totalorder %s15, 1
    %p164 = por %p162, %p163
    %p165 = scmp.ne.s32.totalorder %s154, %s155
    %p166 = scmp.eq.s32.totalorder %s15, 0
    %p167 = por %p165, %p166
    %p168 = scmp.ne.s32.totalorder %s154, %s155
    %p169 = scmp.eq.s32.totalorder %s16, 1
    %p170 = por %p168, %p169
    %p172 = scmp.ne.s32.totalorder %s155, %s171
    %p173 = scmp.eq.s32.totalorder %s16, 0
    %p174 = por %p172, %p173
    %p175 = scmp.le.s32.totalorder 1, %s10
    %p176 = scmp.lt.s32.totalorder %s10, 3
    %p177 = pnand %p175, %p176
    %p178 = pneg %p177
    // Predicated region
    $region9: #{bottleneck_forward.5} parent=5 // pred_check
      _
    $region10: #{bottleneck_forward.5} parent=5 // pred_check_branch
      %180 = sbr.rel (%p177) target = $region12
    $region11: #{bottleneck_forward.5} parent=5 // pred_region
      %s181 = ssub.s32 %s10, 1
      // Predicated region
      $region13: #{bottleneck_forward.5} parent=11 // pred_check
        %p182 = pneg %p85
      $region14: #{bottleneck_forward.5} parent=11 // pred_check_branch
        %184 = sbr.rel (%p182) target = $region16
      $region15: #{bottleneck_forward.5} parent=11 // pred_region
        %p185 = scmp.lt.s32.totalorder %s20, 0
        %s186 = scalar_select %p185, %s20, 0
        %s187 = smul.addr %s186, 4
        %s188 = scalar_lea.vmem %s1, %s187
      $region16: #{bottleneck_forward.5} parent=11 // pred_fallthru
        _
      // Predicated region
      $region17: #{bottleneck_forward.5} parent=11 // pred_check
        %p189 = pneg %p111
      $region18: #{bottleneck_forward.5} parent=11 // pred_check_branch
        %191 = sbr.rel (%p189) target = $region20
      $region19: #{bottleneck_forward.5} parent=11 // pred_region
        %p192 = scmp.lt.s32.totalorder %s20, 0
        %s193 = scalar_select %p192, %s20, 0
        %s194 = scalar_lea.vmem %s2, %s193
      $region20: #{bottleneck_forward.5} parent=11 // pred_fallthru
        _
      // Predicated region
      $region21: #{bottleneck_forward.5} parent=11 // pred_check
        %p195 = pneg %p137
      $region22: #{bottleneck_forward.5} parent=11 // pred_check_branch
        %197 = sbr.rel (%p195) target = $region24
      $region23: #{bottleneck_forward.5} parent=11 // pred_region
        %p198 = scmp.lt.s32.totalorder %s20, 0
        %s199 = scalar_select %p198, %s20, 0
        %s200 = scalar_lea.vmem %s3, %s199
      $region24: #{bottleneck_forward.5} parent=11 // pred_fallthru
        _
    $region12: #{bottleneck_forward.5} parent=5 // pred_fallthru
      _
    %p201 = scmp.lt.s32.totalorder %s10, 2
    // Predicated region
    $region25: #{bottleneck_forward.5} parent=5 // pred_check
      %p202 = pneg %p201
    $region26: #{bottleneck_forward.5} parent=5 // pred_check_branch
      %204 = sbr.rel (%p202) target = $region28
    $region27: #{bottleneck_forward.5} parent=5 // pred_region
      // Predicated region
      $region29: #{bottleneck_forward.5} parent=27 // pred_check
        %p205 = pneg %p53
      $region30: #{bottleneck_forward.5} parent=27 // pred_check_branch
        %207 = sbr.rel (%p205) target = $region32
      $region31: #{bottleneck_forward.5} parent=27 // pred_region
        %s208 = ssub.s32 1, %s18
        %s209 = smul.u32 %s19, %s208
        %s210 = smul.u32 16, %s209
        %p211 = scmp.lt.s32.totalorder %s210, 15
        %s212 = scalar_select %p211, %s210, 15
        %s213 = smul.addr %s212, 9
        %s214 = smul.addr %s213, 4
        %s215 = scalar_lea.vmem %s0, %s214
        %s216 = ssub.s32 1, %s18
        %s217 = smul.u32 %s19, %s216
        %s218 = smul.u32 16, %s217
      $region32: #{bottleneck_forward.5} parent=27 // pred_fallthru
        _
    $region28: #{bottleneck_forward.5} parent=5 // pred_fallthru
      _
    %p219 = scmp.le.s32.totalorder 1, %s10
    %p220 = scmp.lt.s32.totalorder %s10, 3
    %p221 = pnand %p219, %p220
    %p222 = pneg %p221
    // Predicated region
    $region33: #{bottleneck_forward.5} parent=5 // pred_check
      _
    $region34: #{bottleneck_forward.5} parent=5 // pred_check_branch
      %224 = sbr.rel (%p221) target = $region36
    $region35: #{bottleneck_forward.5} parent=5 // pred_region
      %s225 = ssub.s32 %s10, 1
      %s226 = ssub.s32 1, %s21
      %s227 = smul.u32 %s22, %s226
      %s228 = smul.u32 16, %s227
      %p229 = scmp.lt.s32.totalorder %s228, 15
      %s230 = scalar_select %p229, %s228, 15
      %s231 = smul.addr %s230, 9
      %s232 = smul.addr %s231, 4
      %s233 = scalar_lea.vmem %s0, %s232
      %p234 = pneg %p59
      %p235 = pneg %p56
      %p236 = scmp.lt.s32.totalorder %s20, 0
      %s237 = scalar_select %p236, %s20, 0
      %s238 = smul.addr %s237, 4
      %s239 = scalar_lea.vmem %s1, %s238
      %p240 = pneg %p85
      %p241 = pneg %p82
      %p242 = scmp.lt.s32.totalorder %s20, 0
      %s243 = scalar_select %p242, %s20, 0
      %s244 = scalar_lea.vmem %s2, %s243
      %p245 = pneg %p111
      %p246 = pneg %p108
      %p247 = scmp.lt.s32.totalorder %s20, 0
      %s248 = scalar_select %p247, %s20, 0
      %s249 = scalar_lea.vmem %s3, %s248
      %p250 = pneg %p137
      %p251 = pneg %p134
      %p252 = pneg %p167
      %p253 = pneg %p164
      %s254 = smul.u32 %s22, %s21
      %s255 = smul.u32 16, %s254
      %p256 = scmp.lt.s32.totalorder %s255, 15
      %s257 = scalar_select %p256, %s255, 15
      %p258 = scmp.lt.s32.totalorder %s20, 0
      %s259 = scalar_select %p258, %s20, 0
      %s260 = sadd.s32 %s259, %s257
      %s261 = smul.addr %s260, 4
      %s262 = scalar_lea.vmem %s4, %s261
      %s263 = ssub.s32 1, %s21
      %s264 = smul.u32 %s22, %s263
      %s265 = smul.u32 16, %s264
      %p266 = scmp.lt.s32.totalorder %s265, 15
      %s267 = scalar_select %p266, %s265, 15
      %s268 = smul.addr %s267, 9
      %s269 = smul.addr %s268, 4
      %s270 = scalar_lea.vmem %s0, %s269
      %s271 = ssub.s32 1, %s21
      %s272 = smul.u32 %s22, %s271
      %s273 = smul.u32 16, %s272
      %p274 = scmp.lt.s32.totalorder %s20, 0
      %s275 = scalar_select %p274, %s20, 0
      %s276 = smul.addr %s275, 4
      %s277 = scalar_lea.vmem %s1, %s276
      %p278 = scmp.lt.s32.totalorder %s20, 0
      %s279 = scalar_select %p278, %s20, 0
      %s280 = scalar_lea.vmem %s2, %s279
      %p281 = scmp.lt.s32.totalorder %s20, 0
      %s282 = scalar_select %p281, %s20, 0
      %s283 = scalar_lea.vmem %s3, %s282
      %s284 = smul.u32 %s22, %s21
      %s285 = smul.u32 16, %s284
      %p286 = scmp.lt.s32.totalorder %s285, 15
      %s287 = scalar_select %p286, %s285, 15
      %p288 = scmp.lt.s32.totalorder %s20, 0
      %s289 = scalar_select %p288, %s20, 0
      %s290 = sadd.s32 %s289, %s287
      %s291 = smul.addr %s290, 4
      %s292 = scalar_lea.vmem %s4, %s291
      %s293 = smul.u32 %s22, %s21
      %s294 = smul.u32 16, %s293
      %p296 = scmp.eq.s32.totalorder %s21, 0
      // Predicated region
      $region37: #{bottleneck_forward.5} parent=35 // pred_check
        %p297 = pneg %p296
      $region38: #{bottleneck_forward.5} parent=35 // pred_check_branch
        %299 = sbr.rel (%p297) target = $region40
      $region39: #{bottleneck_forward.5} parent=35 // pred_region
        %p300 = scmp.eq.s32.totalorder %s22, 0
        // Predicated region
        $region41: #{bottleneck_forward.5} parent=39 // pred_check
          %p301 = pneg %p300
        $region42: #{bottleneck_forward.5} parent=39 // pred_check_branch
          %303 = sbr.rel (%p301) target = $region44
        $region43: #{bottleneck_forward.5} parent=39 // pred_region
          %304 = vst [vmem:[#allocation3] sm:$0x1] 0.0
          %305 = vst [vmem:[#allocation4] sm:$0x1] 0.0
        $region44: #{bottleneck_forward.5} parent=39 // pred_fallthru
          _
        %s306 = smul.u32 %s22, 128
        %v307 = vld [vmem:[%s270] sm:$0xff]
        %v308 = vld [vmem:[%s270 + $0x8] sm:$0xff]
        %v309 = vld [vmem:[%s270 + $0x10] sm:$0xff]
        %v310 = vld [vmem:[%s270 + $0x18] sm:$0xff]
        %v311 = vld [vmem:[%s270 + $0x20] sm:$0xf]
        %v312 = vld [vmem:[%s270 + $0x24] sm:$0xff]
        %v313 = vld [vmem:[%s270 + $0x2c] sm:$0xff]
        %v314 = vld [vmem:[%s270 + $0x34] sm:$0xff]
        %v315 = vld [vmem:[%s270 + $0x3c] sm:$0xff]
        %v316 = vld [vmem:[%s270 + $0x44] sm:$0xf]
        %v317 = vld [vmem:[%s270 + $0x48] sm:$0xff]
        %v318 = vld [vmem:[%s270 + $0x50] sm:$0xff]
        %v319 = vld [vmem:[%s270 + $0x58] sm:$0xff]
        %v320 = vld [vmem:[%s270 + $0x60] sm:$0xff]
        %v321 = vld [vmem:[%s270 + $0x68] sm:$0xf]
        %v322 = vld [vmem:[%s270 + $0x6c] sm:$0xff]
        %v323 = vld [vmem:[%s270 + $0x74] sm:$0xff]
        %v324 = vld [vmem:[%s270 + $0x7c] sm:$0xff]
        %v325 = vld [vmem:[%s270 + $0x84] sm:$0xff]
        %v326 = vld [vmem:[%s270 + $0x8c] sm:$0xf]
        %v327 = vld [vmem:[%s270 + $0x90] sm:$0xff]
        %v328 = vld [vmem:[%s270 + $0x98] sm:$0xff]
        %v329 = vld [vmem:[%s270 + $0xa0] sm:$0xff]
        %v330 = vld [vmem:[%s270 + $0xa8] sm:$0xff]
        %v331 = vld [vmem:[%s270 + $0xb0] sm:$0xf]
        %v332 = vld [vmem:[%s270 + $0xb4] sm:$0xff]
        %v333 = vld [vmem:[%s270 + $0xbc] sm:$0xff]
        %v334 = vld [vmem:[%s270 + $0xc4] sm:$0xff]
        %v335 = vld [vmem:[%s270 + $0xcc] sm:$0xff]
        %v336 = vld [vmem:[%s270 + $0xd4] sm:$0xf]
        %v337 = vld [vmem:[%s270 + $0xd8] sm:$0xff]
        %v338 = vld [vmem:[%s270 + $0xe0] sm:$0xff]
        %v339 = vld [vmem:[%s270 + $0xe8] sm:$0xff]
        %v340 = vld [vmem:[%s270 + $0xf0] sm:$0xff]
        %v341 = vld [vmem:[%s270 + $0xf8] sm:$0xf]
        %v342 = vld [vmem:[%s270 + $0xfc] sm:$0xff]
        %v343 = vld [vmem:[%s270 + $0x104] sm:$0xff]
        %v344 = vld [vmem:[%s270 + $0x10c] sm:$0xff]
        %v345 = vld [vmem:[%s270 + $0x114] sm:$0xff]
        %v346 = vld [vmem:[%s270 + $0x11c] sm:$0xf]
        %v347 = vld [vmem:[%s270 + $0x120] sm:$0xff]
        %v348 = vld [vmem:[%s270 + $0x128] sm:$0xff]
        %v349 = vld [vmem:[%s270 + $0x130] sm:$0xff]
        %v350 = vld [vmem:[%s270 + $0x138] sm:$0xff]
        %v351 = vld [vmem:[%s270 + $0x140] sm:$0xf]
        %v352 = vld [vmem:[%s270 + $0x144] sm:$0xff]
        %v353 = vld [vmem:[%s270 + $0x14c] sm:$0xff]
        %v354 = vld [vmem:[%s270 + $0x154] sm:$0xff]
        %v355 = vld [vmem:[%s270 + $0x15c] sm:$0xff]
        %v356 = vld [vmem:[%s270 + $0x164] sm:$0xf]
        %v357 = vld [vmem:[%s270 + $0x168] sm:$0xff]
        %v358 = vld [vmem:[%s270 + $0x170] sm:$0xff]
        %v359 = vld [vmem:[%s270 + $0x178] sm:$0xff]
        %v360 = vld [vmem:[%s270 + $0x180] sm:$0xff]
        %v361 = vld [vmem:[%s270 + $0x188] sm:$0xf]
        %v362 = vld [vmem:[%s270 + $0x18c] sm:$0xff]
        %v363 = vld [vmem:[%s270 + $0x194] sm:$0xff]
        %v364 = vld [vmem:[%s270 + $0x19c] sm:$0xff]
        %v365 = vld [vmem:[%s270 + $0x1a4] sm:$0xff]
        %v366 = vld [vmem:[%s270 + $0x1ac] sm:$0xf]
        %v367 = vld [vmem:[%s270 + $0x1b0] sm:$0xff]
        %v368 = vld [vmem:[%s270 + $0x1b8] sm:$0xff]
        %v369 = vld [vmem:[%s270 + $0x1c0] sm:$0xff]
        %v370 = vld [vmem:[%s270 + $0x1c8] sm:$0xff]
        %v371 = vld [vmem:[%s270 + $0x1d0] sm:$0xf]
        %v372 = vld [vmem:[%s270 + $0x1d4] sm:$0xff]
        %v373 = vld [vmem:[%s270 + $0x1dc] sm:$0xff]
        %v374 = vld [vmem:[%s270 + $0x1e4] sm:$0xff]
        %v375 = vld [vmem:[%s270 + $0x1ec] sm:$0xff]
        %v376 = vld [vmem:[%s270 + $0x1f4] sm:$0xf]
        %v377 = vld [vmem:[%s270 + $0x1f8] sm:$0xff]
        %v378 = vld [vmem:[%s270 + $0x200] sm:$0xff]
        %v379 = vld [vmem:[%s270 + $0x208] sm:$0xff]
        %v380 = vld [vmem:[%s270 + $0x210] sm:$0xff]
        %v381 = vld [vmem:[%s270 + $0x218] sm:$0xf]
        %v382 = vld [vmem:[%s270 + $0x21c] sm:$0xff]
        %v383 = vld [vmem:[%s270 + $0x224] sm:$0xff]
        %v384 = vld [vmem:[%s270 + $0x22c] sm:$0xff]
        %v385 = vld [vmem:[%s270 + $0x234] sm:$0xff]
        %v386 = vld [vmem:[%s270 + $0x23c] sm:$0xf]
        %v387 = vld [vmem:[%s277] sm:$0xf]
        %v388 = vld [vmem:[%s277 + $0x4] sm:$0xf]
        %v389 = vld [vmem:[%s277 + $0x8] sm:$0xf]
        %v390 = vld [vmem:[%s277 + $0xc] sm:$0xf]
        %v391 = vld [vmem:[%s277 + $0x10] sm:$0xf]
        %v392 = vld [vmem:[%s277 + $0x14] sm:$0xf]
        %v393 = vld [vmem:[%s277 + $0x18] sm:$0xf]
        %v394 = vld [vmem:[%s277 + $0x1c] sm:$0xf]
        %v395 = vld [vmem:[%s277 + $0x20] sm:$0xf]
        %v396 = vld [vmem:[%s277 + $0x24] sm:$0xf]
        %v397 = vld [vmem:[%s277 + $0x28] sm:$0xf]
        %v398 = vld [vmem:[%s277 + $0x2c] sm:$0xf]
        %v399 = vld [vmem:[%s277 + $0x30] sm:$0xf]
        %v400 = vld [vmem:[%s277 + $0x34] sm:$0xf]
        %v401 = vld [vmem:[%s277 + $0x38] sm:$0xf]
        %v402 = vld [vmem:[%s277 + $0x3c] sm:$0xf]
        %v403 = vld [vmem:[%s277 + $0x40] sm:$0xf]
        %v404 = vld [vmem:[%s277 + $0x44] sm:$0xf]
        %v405 = vld [vmem:[%s277 + $0x48] sm:$0xf]
        %v406 = vld [vmem:[%s277 + $0x4c] sm:$0xf]
        %v407 = vld [vmem:[%s277 + $0x50] sm:$0xf]
        %v408 = vld [vmem:[%s277 + $0x54] sm:$0xf]
        %v409 = vld [vmem:[%s277 + $0x58] sm:$0xf]
        %v410 = vld [vmem:[%s277 + $0x5c] sm:$0xf]
        %v411 = vld [vmem:[%s277 + $0x60] sm:$0xf]
        %v412 = vld [vmem:[%s277 + $0x64] sm:$0xf]
        %v413 = vld [vmem:[%s277 + $0x68] sm:$0xf]
        %v414 = vld [vmem:[%s277 + $0x6c] sm:$0xf]
        %v415 = vld [vmem:[%s277 + $0x70] sm:$0xf]
        %v416 = vld [vmem:[%s277 + $0x74] sm:$0xf]
        %v417 = vld [vmem:[%s277 + $0x78] sm:$0xf]
        %v418 = vld [vmem:[%s277 + $0x7c] sm:$0xf]
        %v419 = vld [vmem:[%s277 + $0x80] sm:$0xf]
        %v420 = vld [vmem:[%s277 + $0x84] sm:$0xf]
        %v421 = vld [vmem:[%s277 + $0x88] sm:$0xf]
        %v422 = vld [vmem:[%s277 + $0x8c] sm:$0xf]
        %v423 = vld [vmem:[%s277 + $0x90] sm:$0xf]
        %v424 = vld [vmem:[%s277 + $0x94] sm:$0xf]
        %v425 = vld [vmem:[%s277 + $0x98] sm:$0xf]
        %v426 = vld [vmem:[%s277 + $0x9c] sm:$0xf]
        %v427 = vld [vmem:[%s277 + $0xa0] sm:$0xf]
        %v428 = vld [vmem:[%s277 + $0xa4] sm:$0xf]
        %v429 = vld [vmem:[%s277 + $0xa8] sm:$0xf]
        %v430 = vld [vmem:[%s277 + $0xac] sm:$0xf]
        %v431 = vld [vmem:[%s277 + $0xb0] sm:$0xf]
        %v432 = vld [vmem:[%s277 + $0xb4] sm:$0xf]
        %v433 = vld [vmem:[%s277 + $0xb8] sm:$0xf]
        %v434 = vld [vmem:[%s277 + $0xbc] sm:$0xf]
        %v435 = vld [vmem:[%s277 + $0xc0] sm:$0xf]
        %v436 = vld [vmem:[%s277 + $0xc4] sm:$0xf]
        %v437 = vld [vmem:[%s277 + $0xc8] sm:$0xf]
        %v438 = vld [vmem:[%s277 + $0xcc] sm:$0xf]
        %v439 = vld [vmem:[%s277 + $0xd0] sm:$0xf]
        %v440 = vld [vmem:[%s277 + $0xd4] sm:$0xf]
        %v441 = vld [vmem:[%s277 + $0xd8] sm:$0xf]
        %v442 = vld [vmem:[%s277 + $0xdc] sm:$0xf]
        %v443 = vld [vmem:[%s277 + $0xe0] sm:$0xf]
        %v444 = vld [vmem:[%s277 + $0xe4] sm:$0xf]
        %v445 = vld [vmem:[%s277 + $0xe8] sm:$0xf]
        %v446 = vld [vmem:[%s277 + $0xec] sm:$0xf]
        %v447 = vld [vmem:[%s277 + $0xf0] sm:$0xf]
        %v448 = vld [vmem:[%s277 + $0xf4] sm:$0xf]
        %v449 = vld [vmem:[%s277 + $0xf8] sm:$0xf]
        %v450 = vld [vmem:[%s277 + $0xfc] sm:$0xf]
        %v451 = vld [vmem:[%s277 + $0x100] sm:$0xf]
        %v452 = vld [vmem:[%s277 + $0x104] sm:$0xf]
        %v453 = vld [vmem:[%s277 + $0x108] sm:$0xf]
        %v454 = vld [vmem:[%s277 + $0x10c] sm:$0xf]
        %v455 = vld [vmem:[%s277 + $0x110] sm:$0xf]
        %v456 = vld [vmem:[%s277 + $0x114] sm:$0xf]
        %v457 = vld [vmem:[%s277 + $0x118] sm:$0xf]
        %v458 = vld [vmem:[%s277 + $0x11c] sm:$0xf]
        %v459 = vld [vmem:[%s277 + $0x120] sm:$0xf]
        %v460 = vld [vmem:[%s277 + $0x124] sm:$0xf]
        %v461 = vld [vmem:[%s277 + $0x128] sm:$0xf]
        %v462 = vld [vmem:[%s277 + $0x12c] sm:$0xf]
        %v463 = vld [vmem:[%s277 + $0x130] sm:$0xf]
        %v464 = vld [vmem:[%s277 + $0x134] sm:$0xf]
        %v465 = vld [vmem:[%s277 + $0x138] sm:$0xf]
        %v466 = vld [vmem:[%s277 + $0x13c] sm:$0xf]
        %v467 = vld [vmem:[%s277 + $0x140] sm:$0xf]
        %v468 = vld [vmem:[%s277 + $0x144] sm:$0xf]
        %v469 = vld [vmem:[%s277 + $0x148] sm:$0xf]
        %v470 = vld [vmem:[%s277 + $0x14c] sm:$0xf]
        %v471 = vld [vmem:[%s277 + $0x150] sm:$0xf]
        %v472 = vld [vmem:[%s277 + $0x154] sm:$0xf]
        %v473 = vld [vmem:[%s277 + $0x158] sm:$0xf]
        %v474 = vld [vmem:[%s277 + $0x15c] sm:$0xf]
        %v475 = vld [vmem:[%s277 + $0x160] sm:$0xf]
        %v476 = vld [vmem:[%s277 + $0x164] sm:$0xf]
        %v477 = vld [vmem:[%s277 + $0x168] sm:$0xf]
        %v478 = vld [vmem:[%s277 + $0x16c] sm:$0xf]
        %v479 = vld [vmem:[%s277 + $0x170] sm:$0xf]
        %v480 = vld [vmem:[%s277 + $0x174] sm:$0xf]
        %v481 = vld [vmem:[%s277 + $0x178] sm:$0xf]
        %v482 = vld [vmem:[%s277 + $0x17c] sm:$0xf]
        %v483 = vld [vmem:[%s277 + $0x180] sm:$0xf]
        %v484 = vld [vmem:[%s277 + $0x184] sm:$0xf]
        %v485 = vld [vmem:[%s277 + $0x188] sm:$0xf]
        %v486 = vld [vmem:[%s277 + $0x18c] sm:$0xf]
        %v487 = vld [vmem:[%s277 + $0x190] sm:$0xf]
        %v488 = vld [vmem:[%s277 + $0x194] sm:$0xf]
        %v489 = vld [vmem:[%s277 + $0x198] sm:$0xf]
        %v490 = vld [vmem:[%s277 + $0x19c] sm:$0xf]
        %v491 = vld [vmem:[%s277 + $0x1a0] sm:$0xf]
        %v492 = vld [vmem:[%s277 + $0x1a4] sm:$0xf]
        %v493 = vld [vmem:[%s277 + $0x1a8] sm:$0xf]
        %v494 = vld [vmem:[%s277 + $0x1ac] sm:$0xf]
        %v495 = vld [vmem:[%s277 + $0x1b0] sm:$0xf]
        %v496 = vld [vmem:[%s277 + $0x1b4] sm:$0xf]
        %v497 = vld [vmem:[%s277 + $0x1b8] sm:$0xf]
        %v498 = vld [vmem:[%s277 + $0x1bc] sm:$0xf]
        %v499 = vld [vmem:[%s277 + $0x1c0] sm:$0xf]
        %v500 = vld [vmem:[%s277 + $0x1c4] sm:$0xf]
        %v501 = vld [vmem:[%s277 + $0x1c8] sm:$0xf]
        %v502 = vld [vmem:[%s277 + $0x1cc] sm:$0xf]
        %v503 = vld [vmem:[%s277 + $0x1d0] sm:$0xf]
        %v504 = vld [vmem:[%s277 + $0x1d4] sm:$0xf]
        %v505 = vld [vmem:[%s277 + $0x1d8] sm:$0xf]
        %v506 = vld [vmem:[%s277 + $0x1dc] sm:$0xf]
        %v507 = vld [vmem:[%s277 + $0x1e0] sm:$0xf]
        %v508 = vld [vmem:[%s277 + $0x1e4] sm:$0xf]
        %v509 = vld [vmem:[%s277 + $0x1e8] sm:$0xf]
        %v510 = vld [vmem:[%s277 + $0x1ec] sm:$0xf]
        %v511 = vld [vmem:[%s277 + $0x1f0] sm:$0xf]
        %v512 = vld [vmem:[%s277 + $0x1f4] sm:$0xf]
        %v513 = vld [vmem:[%s277 + $0x1f8] sm:$0xf]
        %v514 = vld [vmem:[%s277 + $0x1fc] sm:$0xf]
        %v515 = vld [vmem:[%s277 + $0x200] sm:$0xf]
        %v516 = vld [vmem:[%s277 + $0x204] sm:$0xf]
        %v517 = vld [vmem:[%s277 + $0x208] sm:$0xf]
        %v518 = vld [vmem:[%s277 + $0x20c] sm:$0xf]
        %v519 = vld [vmem:[%s277 + $0x210] sm:$0xf]
        %v520 = vld [vmem:[%s277 + $0x214] sm:$0xf]
        %v521 = vld [vmem:[%s277 + $0x218] sm:$0xf]
        %v522 = vld [vmem:[%s277 + $0x21c] sm:$0xf]
        %v523 = vld [vmem:[%s277 + $0x220] sm:$0xf]
        %v524 = vld [vmem:[%s277 + $0x224] sm:$0xf]
        %v525 = vld [vmem:[%s277 + $0x228] sm:$0xf]
        %v526 = vld [vmem:[%s277 + $0x22c] sm:$0xf]
        %v527 = vld [vmem:[%s277 + $0x230] sm:$0xf]
        %v528 = vld [vmem:[%s277 + $0x234] sm:$0xf]
        %v529 = vld [vmem:[%s277 + $0x238] sm:$0xf]
        %v530 = vld [vmem:[%s277 + $0x23c] sm:$0xf]
        %v611 = vunpack.c.l.b16 %v307
        %v612 = vunpack.c.h.b16 %v307
        %v613 = vunpack.c.l.b16 %v308
        %v614 = vunpack.c.h.b16 %v308
        %v615 = vunpack.c.l.b16 %v309
        %v616 = vunpack.c.h.b16 %v309
        %v617 = vunpack.c.l.b16 %v310
        %v618 = vunpack.c.h.b16 %v310
        %v619 = vunpack.c.l.b16 %v311
        %v620 = vunpack.c.l.b16 %v312
        %v621 = vunpack.c.h.b16 %v312
        %v622 = vunpack.c.l.b16 %v313
        %v623 = vunpack.c.h.b16 %v313
        %v624 = vunpack.c.l.b16 %v314
        %v625 = vunpack.c.h.b16 %v314
        %v626 = vunpack.c.l.b16 %v315
        %v627 = vunpack.c.h.b16 %v315
        %v628 = vunpack.c.l.b16 %v316
        %v629 = vunpack.c.l.b16 %v317
        %v630 = vunpack.c.h.b16 %v317
        %v631 = vunpack.c.l.b16 %v318
        %v632 = vunpack.c.h.b16 %v318
        %v633 = vunpack.c.l.b16 %v319
        %v634 = vunpack.c.h.b16 %v319
        %v635 = vunpack.c.l.b16 %v320
        %v636 = vunpack.c.h.b16 %v320
        %v637 = vunpack.c.l.b16 %v321
        %v638 = vunpack.c.l.b16 %v322
        %v639 = vunpack.c.h.b16 %v322
        %v640 = vunpack.c.l.b16 %v323
        %v641 = vunpack.c.h.b16 %v323
        %v642 = vunpack.c.l.b16 %v324
        %v643 = vunpack.c.h.b16 %v324
        %v644 = vunpack.c.l.b16 %v325
        %v645 = vunpack.c.h.b16 %v325
        %v646 = vunpack.c.l.b16 %v326
        %v647 = vunpack.c.l.b16 %v327
        %v648 = vunpack.c.h.b16 %v327
        %v649 = vunpack.c.l.b16 %v328
        %v650 = vunpack.c.h.b16 %v328
        %v651 = vunpack.c.l.b16 %v329
        %v652 = vunpack.c.h.b16 %v329
        %v653 = vunpack.c.l.b16 %v330
        %v654 = vunpack.c.h.b16 %v330
        %v655 = vunpack.c.l.b16 %v331
        %v656 = vunpack.c.l.b16 %v332
        %v657 = vunpack.c.h.b16 %v332
        %v658 = vunpack.c.l.b16 %v333
        %v659 = vunpack.c.h.b16 %v333
        %v660 = vunpack.c.l.b16 %v334
        %v661 = vunpack.c.h.b16 %v334
        %v662 = vunpack.c.l.b16 %v335
        %v663 = vunpack.c.h.b16 %v335
        %v664 = vunpack.c.l.b16 %v336
        %v665 = vunpack.c.l.b16 %v337
        %v666 = vunpack.c.h.b16 %v337
        %v667 = vunpack.c.l.b16 %v338
        %v668 = vunpack.c.h.b16 %v338
        %v669 = vunpack.c.l.b16 %v339
        %v670 = vunpack.c.h.b16 %v339
        %v671 = vunpack.c.l.b16 %v340
        %v672 = vunpack.c.h.b16 %v340
        %v673 = vunpack.c.l.b16 %v341
        %v674 = vunpack.c.l.b16 %v342
        %v675 = vunpack.c.h.b16 %v342
        %v676 = vunpack.c.l.b16 %v343
        %v677 = vunpack.c.h.b16 %v343
        %v678 = vunpack.c.l.b16 %v344
        %v679 = vunpack.c.h.b16 %v344
        %v680 = vunpack.c.l.b16 %v345
        %v681 = vunpack.c.h.b16 %v345
        %v682 = vunpack.c.l.b16 %v346
        %v683 = vunpack.c.l.b16 %v347
        %v684 = vunpack.c.h.b16 %v347
        %v685 = vunpack.c.l.b16 %v348
        %v686 = vunpack.c.h.b16 %v348
        %v687 = vunpack.c.l.b16 %v349
        %v688 = vunpack.c.h.b16 %v349
        %v689 = vunpack.c.l.b16 %v350
        %v690 = vunpack.c.h.b16 %v350
        %v691 = vunpack.c.l.b16 %v351
        %v692 = vunpack.c.l.b16 %v352
        %v693 = vunpack.c.h.b16 %v352
        %v694 = vunpack.c.l.b16 %v353
        %v695 = vunpack.c.h.b16 %v353
        %v696 = vunpack.c.l.b16 %v354
        %v697 = vunpack.c.h.b16 %v354
        %v698 = vunpack.c.l.b16 %v355
        %v699 = vunpack.c.h.b16 %v355
        %v700 = vunpack.c.l.b16 %v356
        %v701 = vunpack.c.l.b16 %v357
        %v702 = vunpack.c.h.b16 %v357
        %v703 = vunpack.c.l.b16 %v358
        %v704 = vunpack.c.h.b16 %v358
        %v705 = vunpack.c.l.b16 %v359
        %v706 = vunpack.c.h.b16 %v359
        %v707 = vunpack.c.l.b16 %v360
        %v708 = vunpack.c.h.b16 %v360
        %v709 = vunpack.c.l.b16 %v361
        %v710 = vunpack.c.l.b16 %v362
        %v711 = vunpack.c.h.b16 %v362
        %v712 = vunpack.c.l.b16 %v363
        %v713 = vunpack.c.h.b16 %v363
        %v714 = vunpack.c.l.b16 %v364
        %v715 = vunpack.c.h.b16 %v364
        %v716 = vunpack.c.l.b16 %v365
        %v717 = vunpack.c.h.b16 %v365
        %v718 = vunpack.c.l.b16 %v366
        %v719 = vunpack.c.l.b16 %v367
        %v720 = vunpack.c.h.b16 %v367
        %v721 = vunpack.c.l.b16 %v368
        %v722 = vunpack.c.h.b16 %v368
        %v723 = vunpack.c.l.b16 %v369
        %v724 = vunpack.c.h.b16 %v369
        %v725 = vunpack.c.l.b16 %v370
        %v726 = vunpack.c.h.b16 %v370
        %v727 = vunpack.c.l.b16 %v371
        %v728 = vunpack.c.l.b16 %v372
        %v729 = vunpack.c.h.b16 %v372
        %v730 = vunpack.c.l.b16 %v373
        %v731 = vunpack.c.h.b16 %v373
        %v732 = vunpack.c.l.b16 %v374
        %v733 = vunpack.c.h.b16 %v374
        %v734 = vunpack.c.l.b16 %v375
        %v735 = vunpack.c.h.b16 %v375
        %v736 = vunpack.c.l.b16 %v376
        %v737 = vunpack.c.l.b16 %v377
        %v738 = vunpack.c.h.b16 %v377
        %v739 = vunpack.c.l.b16 %v378
        %v740 = vunpack.c.h.b16 %v378
        %v741 = vunpack.c.l.b16 %v379
        %v742 = vunpack.c.h.b16 %v379
        %v743 = vunpack.c.l.b16 %v380
        %v744 = vunpack.c.h.b16 %v380
        %v745 = vunpack.c.l.b16 %v381
        %v746 = vunpack.c.l.b16 %v382
        %v747 = vunpack.c.h.b16 %v382
        %v748 = vunpack.c.l.b16 %v383
        %v749 = vunpack.c.h.b16 %v383
        %v750 = vunpack.c.l.b16 %v384
        %v751 = vunpack.c.h.b16 %v384
        %v752 = vunpack.c.l.b16 %v385
        %v753 = vunpack.c.h.b16 %v385
        %v754 = vunpack.c.l.b16 %v386
        %v755 = vpack.c.b16 %v620, %v611
        %v756 = vpack.c.b16 %v621, %v612
        %v757 = vpack.c.b16 %v622, %v613
        %v758 = vpack.c.b16 %v623, %v614
        %v759 = vpack.c.b16 %v624, %v615
        %v760 = vpack.c.b16 %v625, %v616
        %v761 = vpack.c.b16 %v626, %v617
        %v762 = vpack.c.b16 %v627, %v618
        %v763 = vpack.c.b16 %v628, %v619
        %v764 = vpack.c.b16 %v638, %v629
        %v765 = vpack.c.b16 %v639, %v630
        %v766 = vpack.c.b16 %v640, %v631
        %v767 = vpack.c.b16 %v641, %v632
        %v768 = vpack.c.b16 %v642, %v633
        %v769 = vpack.c.b16 %v643, %v634
        %v770 = vpack.c.b16 %v644, %v635
        %v771 = vpack.c.b16 %v645, %v636
        %v772 = vpack.c.b16 %v646, %v637
        %v773 = vpack.c.b16 %v656, %v647
        %v774 = vpack.c.b16 %v657, %v648
        %v775 = vpack.c.b16 %v658, %v649
        %v776 = vpack.c.b16 %v659, %v650
        %v777 = vpack.c.b16 %v660, %v651
        %v778 = vpack.c.b16 %v661, %v652
        %v779 = vpack.c.b16 %v662, %v653
        %v780 = vpack.c.b16 %v663, %v654
        %v781 = vpack.c.b16 %v664, %v655
        %v782 = vpack.c.b16 %v674, %v665
        %v783 = vpack.c.b16 %v675, %v666
        %v784 = vpack.c.b16 %v676, %v667
        %v785 = vpack.c.b16 %v677, %v668
        %v786 = vpack.c.b16 %v678, %v669
        %v787 = vpack.c.b16 %v679, %v670
        %v788 = vpack.c.b16 %v680, %v671
        %v789 = vpack.c.b16 %v681, %v672
        %v790 = vpack.c.b16 %v682, %v673
        %v791 = vpack.c.b16 %v692, %v683
        %v792 = vpack.c.b16 %v693, %v684
        %v793 = vpack.c.b16 %v694, %v685
        %v794 = vpack.c.b16 %v695, %v686
        %v795 = vpack.c.b16 %v696, %v687
        %v796 = vpack.c.b16 %v697, %v688
        %v797 = vpack.c.b16 %v698, %v689
        %v798 = vpack.c.b16 %v699, %v690
        %v799 = vpack.c.b16 %v700, %v691
        %v800 = vpack.c.b16 %v710, %v701
        %v801 = vpack.c.b16 %v711, %v702
        %v802 = vpack.c.b16 %v712, %v703
        %v803 = vpack.c.b16 %v713, %v704
        %v804 = vpack.c.b16 %v714, %v705
        %v805 = vpack.c.b16 %v715, %v706
        %v806 = vpack.c.b16 %v716, %v707
        %v807 = vpack.c.b16 %v717, %v708
        %v808 = vpack.c.b16 %v718, %v709
        %v809 = vpack.c.b16 %v728, %v719
        %v810 = vpack.c.b16 %v729, %v720
        %v811 = vpack.c.b16 %v730, %v721
        %v812 = vpack.c.b16 %v731, %v722
        %v813 = vpack.c.b16 %v732, %v723
        %v814 = vpack.c.b16 %v733, %v724
        %v815 = vpack.c.b16 %v734, %v725
        %v816 = vpack.c.b16 %v735, %v726
        %v817 = vpack.c.b16 %v736, %v727
        %v818 = vpack.c.b16 %v746, %v737
        %v819 = vpack.c.b16 %v747, %v738
        %v820 = vpack.c.b16 %v748, %v739
        %v821 = vpack.c.b16 %v749, %v740
        %v822 = vpack.c.b16 %v750, %v741
        %v823 = vpack.c.b16 %v751, %v742
        %v824 = vpack.c.b16 %v752, %v743
        %v825 = vpack.c.b16 %v753, %v744
        %v826 = vpack.c.b16 %v754, %v745
        %v1043 = vunpack.c.l.b16 %v387
        %v1044 = vunpack.c.l.b16 %v388
        %v1045 = vunpack.c.l.b16 %v389
        %v1046 = vunpack.c.l.b16 %v390
        %v1047 = vunpack.c.l.b16 %v391
        %v1048 = vunpack.c.l.b16 %v392
        %v1049 = vunpack.c.l.b16 %v393
        %v1050 = vunpack.c.l.b16 %v394
        %v1051 = vunpack.c.l.b16 %v395
        %v1052 = vunpack.c.l.b16 %v396
        %v1053 = vunpack.c.l.b16 %v397
        %v1054 = vunpack.c.l.b16 %v398
        %v1055 = vunpack.c.l.b16 %v399
        %v1056 = vunpack.c.l.b16 %v400
        %v1057 = vunpack.c.l.b16 %v401
        %v1058 = vunpack.c.l.b16 %v402
        %v1059 = vunpack.c.l.b16 %v403
        %v1060 = vunpack.c.l.b16 %v404
        %v1061 = vunpack.c.l.b16 %v405
        %v1062 = vunpack.c.l.b16 %v406
        %v1063 = vunpack.c.l.b16 %v407
        %v1064 = vunpack.c.l.b16 %v408
        %v1065 = vunpack.c.l.b16 %v409
        %v1066 = vunpack.c.l.b16 %v410
        %v1067 = vunpack.c.l.b16 %v411
        %v1068 = vunpack.c.l.b16 %v412
        %v1069 = vunpack.c.l.b16 %v413
        %v1070 = vunpack.c.l.b16 %v414
        %v1071 = vunpack.c.l.b16 %v415
        %v1072 = vunpack.c.l.b16 %v416
        %v1073 = vunpack.c.l.b16 %v417
        %v1074 = vunpack.c.l.b16 %v418
        %v1075 = vunpack.c.l.b16 %v419
        %v1076 = vunpack.c.l.b16 %v420
        %v1077 = vunpack.c.l.b16 %v421
        %v1078 = vunpack.c.l.b16 %v422
        %v1079 = vunpack.c.l.b16 %v423
        %v1080 = vunpack.c.l.b16 %v424
        %v1081 = vunpack.c.l.b16 %v425
        %v1082 = vunpack.c.l.b16 %v426
        %v1083 = vunpack.c.l.b16 %v427
        %v1084 = vunpack.c.l.b16 %v428
        %v1085 = vunpack.c.l.b16 %v429
        %v1086 = vunpack.c.l.b16 %v430
        %v1087 = vunpack.c.l.b16 %v431
        %v1088 = vunpack.c.l.b16 %v432
        %v1089 = vunpack.c.l.b16 %v433
        %v1090 = vunpack.c.l.b16 %v434
        %v1091 = vunpack.c.l.b16 %v435
        %v1092 = vunpack.c.l.b16 %v436
        %v1093 = vunpack.c.l.b16 %v437
        %v1094 = vunpack.c.l.b16 %v438
        %v1095 = vunpack.c.l.b16 %v439
        %v1096 = vunpack.c.l.b16 %v440
        %v1097 = vunpack.c.l.b16 %v441
        %v1098 = vunpack.c.l.b16 %v442
        %v1099 = vunpack.c.l.b16 %v443
        %v1100 = vunpack.c.l.b16 %v444
        %v1101 = vunpack.c.l.b16 %v445
        %v1102 = vunpack.c.l.b16 %v446
        %v1103 = vunpack.c.l.b16 %v447
        %v1104 = vunpack.c.l.b16 %v448
        %v1105 = vunpack.c.l.b16 %v449
        %v1106 = vunpack.c.l.b16 %v450
        %v1107 = vunpack.c.l.b16 %v451
        %v1108 = vunpack.c.l.b16 %v452
        %v1109 = vunpack.c.l.b16 %v453
        %v1110 = vunpack.c.l.b16 %v454
        %v1111 = vunpack.c.l.b16 %v455
        %v1112 = vunpack.c.l.b16 %v456
        %v1113 = vunpack.c.l.b16 %v457
        %v1114 = vunpack.c.l.b16 %v458
        %v1115 = vunpack.c.l.b16 %v459
        %v1116 = vunpack.c.l.b16 %v460
        %v1117 = vunpack.c.l.b16 %v461
        %v1118 = vunpack.c.l.b16 %v462
        %v1119 = vunpack.c.l.b16 %v463
        %v1120 = vunpack.c.l.b16 %v464
        %v1121 = vunpack.c.l.b16 %v465
        %v1122 = vunpack.c.l.b16 %v466
        %v1123 = vunpack.c.l.b16 %v467
        %v1124 = vunpack.c.l.b16 %v468
        %v1125 = vunpack.c.l.b16 %v469
        %v1126 = vunpack.c.l.b16 %v470
        %v1127 = vunpack.c.l.b16 %v471
        %v1128 = vunpack.c.l.b16 %v472
        %v1129 = vunpack.c.l.b16 %v473
        %v1130 = vunpack.c.l.b16 %v474
        %v1131 = vunpack.c.l.b16 %v475
        %v1132 = vunpack.c.l.b16 %v476
        %v1133 = vunpack.c.l.b16 %v477
        %v1134 = vunpack.c.l.b16 %v478
        %v1135 = vunpack.c.l.b16 %v479
        %v1136 = vunpack.c.l.b16 %v480
        %v1137 = vunpack.c.l.b16 %v481
        %v1138 = vunpack.c.l.b16 %v482
        %v1139 = vunpack.c.l.b16 %v483
        %v1140 = vunpack.c.l.b16 %v484
        %v1141 = vunpack.c.l.b16 %v485
        %v1142 = vunpack.c.l.b16 %v486
        %v1143 = vunpack.c.l.b16 %v487
        %v1144 = vunpack.c.l.b16 %v488
        %v1145 = vunpack.c.l.b16 %v489
        %v1146 = vunpack.c.l.b16 %v490
        %v1147 = vunpack.c.l.b16 %v491
        %v1148 = vunpack.c.l.b16 %v492
        %v1149 = vunpack.c.l.b16 %v493
        %v1150 = vunpack.c.l.b16 %v494
        %v1151 = vunpack.c.l.b16 %v495
        %v1152 = vunpack.c.l.b16 %v496
        %v1153 = vunpack.c.l.b16 %v497
        %v1154 = vunpack.c.l.b16 %v498
        %v1155 = vunpack.c.l.b16 %v499
        %v1156 = vunpack.c.l.b16 %v500
        %v1157 = vunpack.c.l.b16 %v501
        %v1158 = vunpack.c.l.b16 %v502
        %v1159 = vunpack.c.l.b16 %v503
        %v1160 = vunpack.c.l.b16 %v504
        %v1161 = vunpack.c.l.b16 %v505
        %v1162 = vunpack.c.l.b16 %v506
        %v1163 = vunpack.c.l.b16 %v507
        %v1164 = vunpack.c.l.b16 %v508
        %v1165 = vunpack.c.l.b16 %v509
        %v1166 = vunpack.c.l.b16 %v510
        %v1167 = vunpack.c.l.b16 %v511
        %v1168 = vunpack.c.l.b16 %v512
        %v1169 = vunpack.c.l.b16 %v513
        %v1170 = vunpack.c.l.b16 %v514
        %v1171 = vunpack.c.l.b16 %v515
        %v1172 = vunpack.c.l.b16 %v516
        %v1173 = vunpack.c.l.b16 %v517
        %v1174 = vunpack.c.l.b16 %v518
        %v1175 = vunpack.c.l.b16 %v519
        %v1176 = vunpack.c.l.b16 %v520
        %v1177 = vunpack.c.l.b16 %v521
        %v1178 = vunpack.c.l.b16 %v522
        %v1179 = vunpack.c.l.b16 %v523
        %v1180 = vunpack.c.l.b16 %v524
        %v1181 = vunpack.c.l.b16 %v525
        %v1182 = vunpack.c.l.b16 %v526
        %v1183 = vunpack.c.l.b16 %v527
        %v1184 = vunpack.c.l.b16 %v528
        %v1185 = vunpack.c.l.b16 %v529
        %v1186 = vunpack.c.l.b16 %v530
        %v1187 = vpack.c.b16 %v1044, %v1043
        %v1188 = vpack.c.b16 %v1046, %v1045
        %v1189 = vpack.c.b16 %v1048, %v1047
        %v1190 = vpack.c.b16 %v1050, %v1049
        %v1191 = vpack.c.b16 %v1052, %v1051
        %v1192 = vpack.c.b16 %v1054, %v1053
        %v1193 = vpack.c.b16 %v1056, %v1055
        %v1194 = vpack.c.b16 %v1058, %v1057
        %v1195 = vpack.c.b16 %v1060, %v1059
        %v1196 = vpack.c.b16 %v1062, %v1061
        %v1197 = vpack.c.b16 %v1064, %v1063
        %v1198 = vpack.c.b16 %v1066, %v1065
        %v1199 = vpack.c.b16 %v1068, %v1067
        %v1200 = vpack.c.b16 %v1070, %v1069
        %v1201 = vpack.c.b16 %v1072, %v1071
        %v1202 = vpack.c.b16 %v1074, %v1073
        %v1203 = vpack.c.b16 %v1076, %v1075
        %v1204 = vpack.c.b16 %v1078, %v1077
        %v1205 = vpack.c.b16 %v1080, %v1079
        %v1206 = vpack.c.b16 %v1082, %v1081
        %v1207 = vpack.c.b16 %v1084, %v1083
        %v1208 = vpack.c.b16 %v1086, %v1085
        %v1209 = vpack.c.b16 %v1088, %v1087
        %v1210 = vpack.c.b16 %v1090, %v1089
        %v1211 = vpack.c.b16 %v1092, %v1091
        %v1212 = vpack.c.b16 %v1094, %v1093
        %v1213 = vpack.c.b16 %v1096, %v1095
        %v1214 = vpack.c.b16 %v1098, %v1097
        %v1215 = vpack.c.b16 %v1100, %v1099
        %v1216 = vpack.c.b16 %v1102, %v1101
        %v1217 = vpack.c.b16 %v1104, %v1103
        %v1218 = vpack.c.b16 %v1106, %v1105
        %v1219 = vpack.c.b16 %v1108, %v1107
        %v1220 = vpack.c.b16 %v1110, %v1109
        %v1221 = vpack.c.b16 %v1112, %v1111
        %v1222 = vpack.c.b16 %v1114, %v1113
        %v1223 = vpack.c.b16 %v1116, %v1115
        %v1224 = vpack.c.b16 %v1118, %v1117
        %v1225 = vpack.c.b16 %v1120, %v1119
        %v1226 = vpack.c.b16 %v1122, %v1121
        %v1227 = vpack.c.b16 %v1124, %v1123
        %v1228 = vpack.c.b16 %v1126, %v1125
        %v1229 = vpack.c.b16 %v1128, %v1127
        %v1230 = vpack.c.b16 %v1130, %v1129
        %v1231 = vpack.c.b16 %v1132, %v1131
        %v1232 = vpack.c.b16 %v1134, %v1133
        %v1233 = vpack.c.b16 %v1136, %v1135
        %v1234 = vpack.c.b16 %v1138, %v1137
        %v1235 = vpack.c.b16 %v1140, %v1139
        %v1236 = vpack.c.b16 %v1142, %v1141
        %v1237 = vpack.c.b16 %v1144, %v1143
        %v1238 = vpack.c.b16 %v1146, %v1145
        %v1239 = vpack.c.b16 %v1148, %v1147
        %v1240 = vpack.c.b16 %v1150, %v1149
        %v1241 = vpack.c.b16 %v1152, %v1151
        %v1242 = vpack.c.b16 %v1154, %v1153
        %v1243 = vpack.c.b16 %v1156, %v1155
        %v1244 = vpack.c.b16 %v1158, %v1157
        %v1245 = vpack.c.b16 %v1160, %v1159
        %v1246 = vpack.c.b16 %v1162, %v1161
        %v1247 = vpack.c.b16 %v1164, %v1163
        %v1248 = vpack.c.b16 %v1166, %v1165
        %v1249 = vpack.c.b16 %v1168, %v1167
        %v1250 = vpack.c.b16 %v1170, %v1169
        %v1251 = vpack.c.b16 %v1172, %v1171
        %v1252 = vpack.c.b16 %v1174, %v1173
        %v1253 = vpack.c.b16 %v1176, %v1175
        %v1254 = vpack.c.b16 %v1178, %v1177
        %v1255 = vpack.c.b16 %v1180, %v1179
        %v1256 = vpack.c.b16 %v1182, %v1181
        %v1257 = vpack.c.b16 %v1184, %v1183
        %v1258 = vpack.c.b16 %v1186, %v1185
        %1331 = vmatprep.subr.bf16.mxu0 0
        %1332 = vmatpush1.bf16.msra.mxu0 %v1194
        %1333 = vmatprep.subr.bf16.mxu0 0
        %1334 = vmatpush1.bf16.msra.mxu0 %v1193
        %1335 = vmatprep.subr.bf16.mxu0 0
        %1336 = vmatpush1.bf16.msra.mxu0 %v1192
        %1337 = vmatprep.subr.bf16.mxu0 0
        %1338 = vmatpush1.bf16.msra.mxu0 %v1191
        %1339 = vmatprep.subr.bf16.mxu0 0
        %1340 = vmatpush1.bf16.msra.mxu0 %v1190
        %1341 = vmatprep.subr.bf16.mxu0 0
        %1342 = vmatpush1.bf16.msra.mxu0 %v1189
        %1343 = vmatprep.subr.bf16.mxu0 0
        %1344 = vmatpush1.bf16.msra.mxu0 %v1188
        %1345 = vmatprep.subr.bf16.mxu0 0
        %1346 = vmatpush1.bf16.msra.mxu0 %v1187
        %1347 = vmatprep.subr.bf16.mxu0 0
        %1348 = vmatpush2.bf16.msra.mxu0 %v1202
        %1349 = vmatprep.subr.bf16.mxu0 0
        %1350 = vmatpush2.bf16.msra.mxu0 %v1201
        %1351 = vmatprep.subr.bf16.mxu0 0
        %1352 = vmatpush2.bf16.msra.mxu0 %v1200
        %1353 = vmatprep.subr.bf16.mxu0 0
        %1354 = vmatpush2.bf16.msra.mxu0 %v1199
        %1355 = vmatprep.subr.bf16.mxu0 0
        %1356 = vmatpush2.bf16.msra.mxu0 %v1198
        %1357 = vmatprep.subr.bf16.mxu0 0
        %1358 = vmatpush2.bf16.msra.mxu0 %v1197
        %1359 = vmatprep.subr.bf16.mxu0 0
        %1360 = vmatpush2.bf16.msra.mxu0 %v1196
        %1361 = vmatprep.subr.bf16.mxu0 0
        %1362 = vmatpush2.bf16.msra.mxu0 %v1195
        %1363 = vmatprep.mubr.bf16.mxu0 %v756
        %1364 = vmatmul.mubr.bf16.gmra.mxu0 %v755
        %v1365 = vpop.f32.mrf.mxu0
        %v1366 = vadd.f32 0.0, %v1365
        %v1367 = vpop.f32.mrf.mxu0
        %v1368 = vpop.f32.mrf.mxu0
        %v1369 = vadd.f32 0.0, %v1368
        %v1370 = vpop.f32.mrf.mxu0
        %1371 = vmatprep.mubr.bf16.mxu0 %v765
        %1372 = vmatmul.mubr.bf16.gmra.mxu0 %v764
        %v1373 = vpop.f32.mrf.mxu0
        %v1374 = vadd.f32 0.0, %v1373
        %v1375 = vpop.f32.mrf.mxu0
        %v1376 = vpop.f32.mrf.mxu0
        %v1377 = vadd.f32 0.0, %v1376
        %v1378 = vpop.f32.mrf.mxu0
        %1379 = vmatprep.mubr.bf16.mxu0 %v774
        %1380 = vmatmul.mubr.bf16.gmra.mxu0 %v773
        %v1381 = vpop.f32.mrf.mxu0
        %v1382 = vadd.f32 0.0, %v1381
        %v1383 = vpop.f32.mrf.mxu0
        %v1384 = vpop.f32.mrf.mxu0
        %v1385 = vadd.f32 0.0, %v1384
        %v1386 = vpop.f32.mrf.mxu0
        %1387 = vmatprep.mubr.bf16.mxu0 %v783
        %1388 = vmatmul.mubr.bf16.gmra.mxu0 %v782
        %v1389 = vpop.f32.mrf.mxu0
        %v1390 = vadd.f32 0.0, %v1389
        %v1391 = vpop.f32.mrf.mxu0
        %v1392 = vpop.f32.mrf.mxu0
        %v1393 = vadd.f32 0.0, %v1392
        %v1394 = vpop.f32.mrf.mxu0
        %1395 = vmatprep.mubr.bf16.mxu0 %v792
        %1396 = vmatmul.mubr.bf16.gmra.mxu0 %v791
        %v1397 = vpop.f32.mrf.mxu0
        %v1398 = vadd.f32 0.0, %v1397
        %v1399 = vpop.f32.mrf.mxu0
        %v1400 = vpop.f32.mrf.mxu0
        %v1401 = vadd.f32 0.0, %v1400
        %v1402 = vpop.f32.mrf.mxu0
        %1403 = vmatprep.mubr.bf16.mxu0 %v801
        %1404 = vmatmul.mubr.bf16.gmra.mxu0 %v800
        %v1405 = vpop.f32.mrf.mxu0
        %v1406 = vadd.f32 0.0, %v1405
        %v1407 = vpop.f32.mrf.mxu0
        %v1408 = vpop.f32.mrf.mxu0
        %v1409 = vadd.f32 0.0, %v1408
        %v1410 = vpop.f32.mrf.mxu0
        %1411 = vmatprep.mubr.bf16.mxu0 %v810
        %1412 = vmatmul.mubr.bf16.gmra.mxu0 %v809
        %v1413 = vpop.f32.mrf.mxu0
        %v1414 = vadd.f32 0.0, %v1413
        %v1415 = vpop.f32.mrf.mxu0
        %v1416 = vpop.f32.mrf.mxu0
        %v1417 = vadd.f32 0.0, %v1416
        %v1418 = vpop.f32.mrf.mxu0
        %1419 = vmatprep.mubr.bf16.mxu0 %v819
        %1420 = vmatmul.mubr.bf16.gmra.mxu0 %v818
        %v1421 = vpop.f32.mrf.mxu0
        %v1422 = vadd.f32 0.0, %v1421
        %v1423 = vpop.f32.mrf.mxu0
        %v1424 = vpop.f32.mrf.mxu0
        %v1425 = vadd.f32 0.0, %v1424
        %v1426 = vpop.f32.mrf.mxu0
        %1427 = vdwg.mxu0
        %1428 = vmatprep.subr.bf16.mxu0 0
        %1429 = vmatpush1.bf16.msra.mxu0 %v1210
        %1430 = vmatprep.subr.bf16.mxu0 0
        %1431 = vmatpush1.bf16.msra.mxu0 %v1209
        %1432 = vmatprep.subr.bf16.mxu0 0
        %1433 = vmatpush1.bf16.msra.mxu0 %v1208
        %1434 = vmatprep.subr.bf16.mxu0 0
        %1435 = vmatpush1.bf16.msra.mxu0 %v1207
        %1436 = vmatprep.subr.bf16.mxu0 0
        %1437 = vmatpush1.bf16.msra.mxu0 %v1206
        %1438 = vmatprep.subr.bf16.mxu0 0
        %1439 = vmatpush1.bf16.msra.mxu0 %v1205
        %1440 = vmatprep.subr.bf16.mxu0 0
        %1441 = vmatpush1.bf16.msra.mxu0 %v1204
        %1442 = vmatprep.subr.bf16.mxu0 0
        %1443 = vmatpush1.bf16.msra.mxu0 %v1203
        %1444 = vmatprep.subr.bf16.mxu0 0
        %1445 = vmatpush2.bf16.msra.mxu0 %v1218
        %1446 = vmatprep.subr.bf16.mxu0 0
        %1447 = vmatpush2.bf16.msra.mxu0 %v1217
        %1448 = vmatprep.subr.bf16.mxu0 0
        %1449 = vmatpush2.bf16.msra.mxu0 %v1216
        %1450 = vmatprep.subr.bf16.mxu0 0
        %1451 = vmatpush2.bf16.msra.mxu0 %v1215
        %1452 = vmatprep.subr.bf16.mxu0 0
        %1453 = vmatpush2.bf16.msra.mxu0 %v1214
        %1454 = vmatprep.subr.bf16.mxu0 0
        %1455 = vmatpush2.bf16.msra.mxu0 %v1213
        %1456 = vmatprep.subr.bf16.mxu0 0
        %1457 = vmatpush2.bf16.msra.mxu0 %v1212
        %1458 = vmatprep.subr.bf16.mxu0 0
        %1459 = vmatpush2.bf16.msra.mxu0 %v1211
        %1460 = vmatprep.mubr.bf16.mxu0 %v758
        %1461 = vmatmul.mubr.bf16.gmra.mxu0 %v757
        %v1462 = vpop.f32.mrf.mxu0
        %v1463 = vadd.f32 %v1366, %v1462
        %v1464 = vpop.f32.mrf.mxu0
        %v1465 = vpop.f32.mrf.mxu0
        %v1466 = vadd.f32 %v1369, %v1465
        %v1467 = vpop.f32.mrf.mxu0
        %1468 = vmatprep.mubr.bf16.mxu0 %v767
        %1469 = vmatmul.mubr.bf16.gmra.mxu0 %v766
        %v1470 = vpop.f32.mrf.mxu0
        %v1471 = vadd.f32 %v1374, %v1470
        %v1472 = vpop.f32.mrf.mxu0
        %v1473 = vpop.f32.mrf.mxu0
        %v1474 = vadd.f32 %v1377, %v1473
        %v1475 = vpop.f32.mrf.mxu0
        %1476 = vmatprep.mubr.bf16.mxu0 %v776
        %1477 = vmatmul.mubr.bf16.gmra.mxu0 %v775
        %v1478 = vpop.f32.mrf.mxu0
        %v1479 = vadd.f32 %v1382, %v1478
        %v1480 = vpop.f32.mrf.mxu0
        %v1481 = vpop.f32.mrf.mxu0
        %v1482 = vadd.f32 %v1385, %v1481
        %v1483 = vpop.f32.mrf.mxu0
        %1484 = vmatprep.mubr.bf16.mxu0 %v785
        %1485 = vmatmul.mubr.bf16.gmra.mxu0 %v784
        %v1486 = vpop.f32.mrf.mxu0
        %v1487 = vadd.f32 %v1390, %v1486
        %v1488 = vpop.f32.mrf.mxu0
        %v1489 = vpop.f32.mrf.mxu0
        %v1490 = vadd.f32 %v1393, %v1489
        %v1491 = vpop.f32.mrf.mxu0
        %1492 = vmatprep.mubr.bf16.mxu0 %v794
        %1493 = vmatmul.mubr.bf16.gmra.mxu0 %v793
        %v1494 = vpop.f32.mrf.mxu0
        %v1495 = vadd.f32 %v1398, %v1494
        %v1496 = vpop.f32.mrf.mxu0
        %v1497 = vpop.f32.mrf.mxu0
        %v1498 = vadd.f32 %v1401, %v1497
        %v1499 = vpop.f32.mrf.mxu0
        %1500 = vmatprep.mubr.bf16.mxu0 %v803
        %1501 = vmatmul.mubr.bf16.gmra.mxu0 %v802
        %v1502 = vpop.f32.mrf.mxu0
        %v1503 = vadd.f32 %v1406, %v1502
        %v1504 = vpop.f32.mrf.mxu0
        %v1505 = vpop.f32.mrf.mxu0
        %v1506 = vadd.f32 %v1409, %v1505
        %v1507 = vpop.f32.mrf.mxu0
        %1508 = vmatprep.mubr.bf16.mxu0 %v812
        %1509 = vmatmul.mubr.bf16.gmra.mxu0 %v811
        %v1510 = vpop.f32.mrf.mxu0
        %v1511 = vadd.f32 %v1414, %v1510
        %v1512 = vpop.f32.mrf.mxu0
        %v1513 = vpop.f32.mrf.mxu0
        %v1514 = vadd.f32 %v1417, %v1513
        %v1515 = vpop.f32.mrf.mxu0
        %1516 = vmatprep.mubr.bf16.mxu0 %v821
        %1517 = vmatmul.mubr.bf16.gmra.mxu0 %v820
        %v1518 = vpop.f32.mrf.mxu0
        %v1519 = vadd.f32 %v1422, %v1518
        %v1520 = vpop.f32.mrf.mxu0
        %v1521 = vpop.f32.mrf.mxu0
        %v1522 = vadd.f32 %v1425, %v1521
        %v1523 = vpop.f32.mrf.mxu0
        %1524 = vdwg.mxu0
        %1525 = vmatprep.subr.bf16.mxu0 0
        %1526 = vmatpush1.bf16.msra.mxu0 %v1226
        %1527 = vmatprep.subr.bf16.mxu0 0
        %1528 = vmatpush1.bf16.msra.mxu0 %v1225
        %1529 = vmatprep.subr.bf16.mxu0 0
        %1530 = vmatpush1.bf16.msra.mxu0 %v1224
        %1531 = vmatprep.subr.bf16.mxu0 0
        %1532 = vmatpush1.bf16.msra.mxu0 %v1223
        %1533 = vmatprep.subr.bf16.mxu0 0
        %1534 = vmatpush1.bf16.msra.mxu0 %v1222
        %1535 = vmatprep.subr.bf16.mxu0 0
        %1536 = vmatpush1.bf16.msra.mxu0 %v1221
        %1537 = vmatprep.subr.bf16.mxu0 0
        %1538 = vmatpush1.bf16.msra.mxu0 %v1220
        %1539 = vmatprep.subr.bf16.mxu0 0
        %1540 = vmatpush1.bf16.msra.mxu0 %v1219
        %1541 = vmatprep.subr.bf16.mxu0 0
        %1542 = vmatpush2.bf16.msra.mxu0 %v1234
        %1543 = vmatprep.subr.bf16.mxu0 0
        %1544 = vmatpush2.bf16.msra.mxu0 %v1233
        %1545 = vmatprep.subr.bf16.mxu0 0
        %1546 = vmatpush2.bf16.msra.mxu0 %v1232
        %1547 = vmatprep.subr.bf16.mxu0 0
        %1548 = vmatpush2.bf16.msra.mxu0 %v1231
        %1549 = vmatprep.subr.bf16.mxu0 0
        %1550 = vmatpush2.bf16.msra.mxu0 %v1230
        %1551 = vmatprep.subr.bf16.mxu0 0
        %1552 = vmatpush2.bf16.msra.mxu0 %v1229
        %1553 = vmatprep.subr.bf16.mxu0 0
        %1554 = vmatpush2.bf16.msra.mxu0 %v1228
        %1555 = vmatprep.subr.bf16.mxu0 0
        %1556 = vmatpush2.bf16.msra.mxu0 %v1227
        %1557 = vmatprep.mubr.bf16.mxu0 %v760
        %1558 = vmatmul.mubr.bf16.gmra.mxu0 %v759
        %v1559 = vpop.f32.mrf.mxu0
        %v1560 = vadd.f32 %v1463, %v1559
        %v1561 = vpop.f32.mrf.mxu0
        %v1562 = vpop.f32.mrf.mxu0
        %v1563 = vadd.f32 %v1466, %v1562
        %v1564 = vpop.f32.mrf.mxu0
        %1565 = vmatprep.mubr.bf16.mxu0 %v769
        %1566 = vmatmul.mubr.bf16.gmra.mxu0 %v768
        %v1567 = vpop.f32.mrf.mxu0
        %v1568 = vadd.f32 %v1471, %v1567
        %v1569 = vpop.f32.mrf.mxu0
        %v1570 = vpop.f32.mrf.mxu0
        %v1571 = vadd.f32 %v1474, %v1570
        %v1572 = vpop.f32.mrf.mxu0
        %1573 = vmatprep.mubr.bf16.mxu0 %v778
        %1574 = vmatmul.mubr.bf16.gmra.mxu0 %v777
        %v1575 = vpop.f32.mrf.mxu0
        %v1576 = vadd.f32 %v1479, %v1575
        %v1577 = vpop.f32.mrf.mxu0
        %v1578 = vpop.f32.mrf.mxu0
        %v1579 = vadd.f32 %v1482, %v1578
        %v1580 = vpop.f32.mrf.mxu0
        %1581 = vmatprep.mubr.bf16.mxu0 %v787
        %1582 = vmatmul.mubr.bf16.gmra.mxu0 %v786
        %v1583 = vpop.f32.mrf.mxu0
        %v1584 = vadd.f32 %v1487, %v1583
        %v1585 = vpop.f32.mrf.mxu0
        %v1586 = vpop.f32.mrf.mxu0
        %v1587 = vadd.f32 %v1490, %v1586
        %v1588 = vpop.f32.mrf.mxu0
        %1589 = vmatprep.mubr.bf16.mxu0 %v796
        %1590 = vmatmul.mubr.bf16.gmra.mxu0 %v795
        %v1591 = vpop.f32.mrf.mxu0
        %v1592 = vadd.f32 %v1495, %v1591
        %v1593 = vpop.f32.mrf.mxu0
        %v1594 = vpop.f32.mrf.mxu0
        %v1595 = vadd.f32 %v1498, %v1594
        %v1596 = vpop.f32.mrf.mxu0
        %1597 = vmatprep.mubr.bf16.mxu0 %v805
        %1598 = vmatmul.mubr.bf16.gmra.mxu0 %v804
        %v1599 = vpop.f32.mrf.mxu0
        %v1600 = vadd.f32 %v1503, %v1599
        %v1601 = vpop.f32.mrf.mxu0
        %v1602 = vpop.f32.mrf.mxu0
        %v1603 = vadd.f32 %v1506, %v1602
        %v1604 = vpop.f32.mrf.mxu0
        %1605 = vmatprep.mubr.bf16.mxu0 %v814
        %1606 = vmatmul.mubr.bf16.gmra.mxu0 %v813
        %v1607 = vpop.f32.mrf.mxu0
        %v1608 = vadd.f32 %v1511, %v1607
        %v1609 = vpop.f32.mrf.mxu0
        %v1610 = vpop.f32.mrf.mxu0
        %v1611 = vadd.f32 %v1514, %v1610
        %v1612 = vpop.f32.mrf.mxu0
        %1613 = vmatprep.mubr.bf16.mxu0 %v823
        %1614 = vmatmul.mubr.bf16.gmra.mxu0 %v822
        %v1615 = vpop.f32.mrf.mxu0
        %v1616 = vadd.f32 %v1519, %v1615
        %v1617 = vpop.f32.mrf.mxu0
        %v1618 = vpop.f32.mrf.mxu0
        %v1619 = vadd.f32 %v1522, %v1618
        %v1620 = vpop.f32.mrf.mxu0
        %1621 = vdwg.mxu0
        %1622 = vmatprep.subr.bf16.mxu0 0
        %1623 = vmatpush1.bf16.msra.mxu0 %v1242
        %1624 = vmatprep.subr.bf16.mxu0 0
        %1625 = vmatpush1.bf16.msra.mxu0 %v1241
        %1626 = vmatprep.subr.bf16.mxu0 0
        %1627 = vmatpush1.bf16.msra.mxu0 %v1240
        %1628 = vmatprep.subr.bf16.mxu0 0
        %1629 = vmatpush1.bf16.msra.mxu0 %v1239
        %1630 = vmatprep.subr.bf16.mxu0 0
        %1631 = vmatpush1.bf16.msra.mxu0 %v1238
        %1632 = vmatprep.subr.bf16.mxu0 0
        %1633 = vmatpush1.bf16.msra.mxu0 %v1237
        %1634 = vmatprep.subr.bf16.mxu0 0
        %1635 = vmatpush1.bf16.msra.mxu0 %v1236
        %1636 = vmatprep.subr.bf16.mxu0 0
        %1637 = vmatpush1.bf16.msra.mxu0 %v1235
        %1638 = vmatprep.subr.bf16.mxu0 0
        %1639 = vmatpush2.bf16.msra.mxu0 %v1250
        %1640 = vmatprep.subr.bf16.mxu0 0
        %1641 = vmatpush2.bf16.msra.mxu0 %v1249
        %1642 = vmatprep.subr.bf16.mxu0 0
        %1643 = vmatpush2.bf16.msra.mxu0 %v1248
        %1644 = vmatprep.subr.bf16.mxu0 0
        %1645 = vmatpush2.bf16.msra.mxu0 %v1247
        %1646 = vmatprep.subr.bf16.mxu0 0
        %1647 = vmatpush2.bf16.msra.mxu0 %v1246
        %1648 = vmatprep.subr.bf16.mxu0 0
        %1649 = vmatpush2.bf16.msra.mxu0 %v1245
        %1650 = vmatprep.subr.bf16.mxu0 0
        %1651 = vmatpush2.bf16.msra.mxu0 %v1244
        %1652 = vmatprep.subr.bf16.mxu0 0
        %1653 = vmatpush2.bf16.msra.mxu0 %v1243
        %1654 = vmatprep.mubr.bf16.mxu0 %v762
        %1655 = vmatmul.mubr.bf16.gmra.mxu0 %v761
        %v1656 = vpop.f32.mrf.mxu0
        %v1657 = vadd.f32 %v1560, %v1656
        %v1658 = vpop.f32.mrf.mxu0
        %v1659 = vpop.f32.mrf.mxu0
        %v1660 = vadd.f32 %v1563, %v1659
        %v1661 = vpop.f32.mrf.mxu0
        %1662 = vmatprep.mubr.bf16.mxu0 %v771
        %1663 = vmatmul.mubr.bf16.gmra.mxu0 %v770
        %v1664 = vpop.f32.mrf.mxu0
        %v1665 = vadd.f32 %v1568, %v1664
        %v1666 = vpop.f32.mrf.mxu0
        %v1667 = vpop.f32.mrf.mxu0
        %v1668 = vadd.f32 %v1571, %v1667
        %v1669 = vpop.f32.mrf.mxu0
        %1670 = vmatprep.mubr.bf16.mxu0 %v780
        %1671 = vmatmul.mubr.bf16.gmra.mxu0 %v779
        %v1672 = vpop.f32.mrf.mxu0
        %v1673 = vadd.f32 %v1576, %v1672
        %v1674 = vpop.f32.mrf.mxu0
        %v1675 = vpop.f32.mrf.mxu0
        %v1676 = vadd.f32 %v1579, %v1675
        %v1677 = vpop.f32.mrf.mxu0
        %1678 = vmatprep.mubr.bf16.mxu0 %v789
        %1679 = vmatmul.mubr.bf16.gmra.mxu0 %v788
        %v1680 = vpop.f32.mrf.mxu0
        %v1681 = vadd.f32 %v1584, %v1680
        %v1682 = vpop.f32.mrf.mxu0
        %v1683 = vpop.f32.mrf.mxu0
        %v1684 = vadd.f32 %v1587, %v1683
        %v1685 = vpop.f32.mrf.mxu0
        %1686 = vmatprep.mubr.bf16.mxu0 %v798
        %1687 = vmatmul.mubr.bf16.gmra.mxu0 %v797
        %v1688 = vpop.f32.mrf.mxu0
        %v1689 = vadd.f32 %v1592, %v1688
        %v1690 = vpop.f32.mrf.mxu0
        %v1691 = vpop.f32.mrf.mxu0
        %v1692 = vadd.f32 %v1595, %v1691
        %v1693 = vpop.f32.mrf.mxu0
        %1694 = vmatprep.mubr.bf16.mxu0 %v807
        %1695 = vmatmul.mubr.bf16.gmra.mxu0 %v806
        %v1696 = vpop.f32.mrf.mxu0
        %v1697 = vadd.f32 %v1600, %v1696
        %v1698 = vpop.f32.mrf.mxu0
        %v1699 = vpop.f32.mrf.mxu0
        %v1700 = vadd.f32 %v1603, %v1699
        %v1701 = vpop.f32.mrf.mxu0
        %1702 = vmatprep.mubr.bf16.mxu0 %v816
        %1703 = vmatmul.mubr.bf16.gmra.mxu0 %v815
        %v1704 = vpop.f32.mrf.mxu0
        %v1705 = vadd.f32 %v1608, %v1704
        %v1706 = vpop.f32.mrf.mxu0
        %v1707 = vpop.f32.mrf.mxu0
        %v1708 = vadd.f32 %v1611, %v1707
        %v1709 = vpop.f32.mrf.mxu0
        %1710 = vmatprep.mubr.bf16.mxu0 %v825
        %1711 = vmatmul.mubr.bf16.gmra.mxu0 %v824
        %v1712 = vpop.f32.mrf.mxu0
        %v1713 = vadd.f32 %v1616, %v1712
        %v1714 = vpop.f32.mrf.mxu0
        %v1715 = vpop.f32.mrf.mxu0
        %v1716 = vadd.f32 %v1619, %v1715
        %v1717 = vpop.f32.mrf.mxu0
        %1718 = vdwg.mxu0
        %1719 = vmatprep.subr.bf16.mxu0 0
        %1720 = vmatpush1.bf16.msra.mxu0 %v1258
        %1721 = vmatprep.subr.bf16.mxu0 0
        %1722 = vmatpush1.bf16.msra.mxu0 %v1257
        %1723 = vmatprep.subr.bf16.mxu0 0
        %1724 = vmatpush1.bf16.msra.mxu0 %v1256
        %1725 = vmatprep.subr.bf16.mxu0 0
        %1726 = vmatpush1.bf16.msra.mxu0 %v1255
        %1727 = vmatprep.subr.bf16.mxu0 0
        %1728 = vmatpush1.bf16.msra.mxu0 %v1254
        %1729 = vmatprep.subr.bf16.mxu0 0
        %1730 = vmatpush1.bf16.msra.mxu0 %v1253
        %1731 = vmatprep.subr.bf16.mxu0 0
        %1732 = vmatpush1.bf16.msra.mxu0 %v1252
        %1733 = vmatprep.subr.bf16.mxu0 0
        %1734 = vmatpush1.bf16.msra.mxu0 %v1251
        %1735 = vmatprep.subr.bf16.mxu0 0
        %1736 = vmatpush2.bf16.msra.mxu0 0
        %1737 = vmatprep.subr.bf16.mxu0 0
        %1738 = vmatpush2.bf16.msra.mxu0 0
        %1739 = vmatprep.subr.bf16.mxu0 0
        %1740 = vmatpush2.bf16.msra.mxu0 0
        %1741 = vmatprep.subr.bf16.mxu0 0
        %1742 = vmatpush2.bf16.msra.mxu0 0
        %1743 = vmatprep.subr.bf16.mxu0 0
        %1744 = vmatpush2.bf16.msra.mxu0 0
        %1745 = vmatprep.subr.bf16.mxu0 0
        %1746 = vmatpush2.bf16.msra.mxu0 0
        %1747 = vmatprep.subr.bf16.mxu0 0
        %1748 = vmatpush2.bf16.msra.mxu0 0
        %1749 = vmatprep.subr.bf16.mxu0 0
        %1750 = vmatpush2.bf16.msra.mxu0 0
        %1751 = vmatprep.mubr.bf16.mxu0 0
        %1752 = vmatmul.mubr.bf16.gmra.mxu0 %v763
        %v1753 = vpop.f32.mrf.mxu0
        %v1754 = vadd.f32 %v1657, %v1753
        %v1755 = vpop.f32.mrf.mxu0
        %v1756 = vpop.f32.mrf.mxu0
        %v1757 = vadd.f32 %v1660, %v1756
        %v1758 = vpop.f32.mrf.mxu0
        %1759 = vmatprep.mubr.bf16.mxu0 0
        %1760 = vmatmul.mubr.bf16.gmra.mxu0 %v772
        %v1761 = vpop.f32.mrf.mxu0
        %v1762 = vadd.f32 %v1665, %v1761
        %v1763 = vpop.f32.mrf.mxu0
        %v1764 = vpop.f32.mrf.mxu0
        %v1765 = vadd.f32 %v1668, %v1764
        %v1766 = vpop.f32.mrf.mxu0
        %1767 = vmatprep.mubr.bf16.mxu0 0
        %1768 = vmatmul.mubr.bf16.gmra.mxu0 %v781
        %v1769 = vpop.f32.mrf.mxu0
        %v1770 = vadd.f32 %v1673, %v1769
        %v1771 = vpop.f32.mrf.mxu0
        %v1772 = vpop.f32.mrf.mxu0
        %v1773 = vadd.f32 %v1676, %v1772
        %v1774 = vpop.f32.mrf.mxu0
        %1775 = vmatprep.mubr.bf16.mxu0 0
        %1776 = vmatmul.mubr.bf16.gmra.mxu0 %v790
        %v1777 = vpop.f32.mrf.mxu0
        %v1778 = vadd.f32 %v1681, %v1777
        %v1779 = vpop.f32.mrf.mxu0
        %v1780 = vpop.f32.mrf.mxu0
        %v1781 = vadd.f32 %v1684, %v1780
        %v1782 = vpop.f32.mrf.mxu0
        %1783 = vmatprep.mubr.bf16.mxu0 0
        %1784 = vmatmul.mubr.bf16.gmra.mxu0 %v799
        %v1785 = vpop.f32.mrf.mxu0
        %v1786 = vadd.f32 %v1689, %v1785
        %v1787 = vpop.f32.mrf.mxu0
        %v1788 = vpop.f32.mrf.mxu0
        %v1789 = vadd.f32 %v1692, %v1788
        %v1790 = vpop.f32.mrf.mxu0
        %1791 = vmatprep.mubr.bf16.mxu0 0
        %1792 = vmatmul.mubr.bf16.gmra.mxu0 %v808
        %v1793 = vpop.f32.mrf.mxu0
        %v1794 = vadd.f32 %v1697, %v1793
        %v1795 = vpop.f32.mrf.mxu0
        %v1796 = vpop.f32.mrf.mxu0
        %v1797 = vadd.f32 %v1700, %v1796
        %v1798 = vpop.f32.mrf.mxu0
        %1799 = vmatprep.mubr.bf16.mxu0 0
        %1800 = vmatmul.mubr.bf16.gmra.mxu0 %v817
        %v1801 = vpop.f32.mrf.mxu0
        %v1802 = vadd.f32 %v1705, %v1801
        %v1803 = vpop.f32.mrf.mxu0
        %v1804 = vpop.f32.mrf.mxu0
        %v1805 = vadd.f32 %v1708, %v1804
        %v1806 = vpop.f32.mrf.mxu0
        %1807 = vmatprep.mubr.bf16.mxu0 0
        %1808 = vmatmul.mubr.bf16.gmra.mxu0 %v826
        %v1809 = vpop.f32.mrf.mxu0
        %v1810 = vadd.f32 %v1713, %v1809
        %v1811 = vpop.f32.mrf.mxu0
        %v1812 = vpop.f32.mrf.mxu0
        %v1813 = vadd.f32 %v1716, %v1812
        %v1814 = vpop.f32.mrf.mxu0
        %1815 = vdwg.mxu0
        %s1816 = scalar_lea.vmem [#allocation2], %s306
        %1817 = vst [vmem:[%s1816] sm:$0xff] %v1754
        %1818 = vst [vmem:[%s1816 + $0x8] sm:$0xff] %v1757
        %1819 = vst [vmem:[%s1816 + $0x10] sm:$0xff] %v1762
        %1820 = vst [vmem:[%s1816 + $0x18] sm:$0xff] %v1765
        %1821 = vst [vmem:[%s1816 + $0x20] sm:$0xff] %v1770
        %1822 = vst [vmem:[%s1816 + $0x28] sm:$0xff] %v1773
        %1823 = vst [vmem:[%s1816 + $0x30] sm:$0xff] %v1778
        %1824 = vst [vmem:[%s1816 + $0x38] sm:$0xff] %v1781
        %1825 = vst [vmem:[%s1816 + $0x40] sm:$0xff] %v1786
        %1826 = vst [vmem:[%s1816 + $0x48] sm:$0xff] %v1789
        %1827 = vst [vmem:[%s1816 + $0x50] sm:$0xff] %v1794
        %1828 = vst [vmem:[%s1816 + $0x58] sm:$0xff] %v1797
        %1829 = vst [vmem:[%s1816 + $0x60] sm:$0xff] %v1802
        %1830 = vst [vmem:[%s1816 + $0x68] sm:$0xff] %v1805
        %1831 = vst [vmem:[%s1816 + $0x70] sm:$0xff] %v1810
        %1832 = vst [vmem:[%s1816 + $0x78] sm:$0xff] %v1813
        %v1833 = vld [vmem:[%s1816] sm:$0xff]
        %v1834 = vld [vmem:[%s1816 + $0x8] sm:$0xff]
        %v1835 = vld [vmem:[%s1816 + $0x10] sm:$0xff]
        %v1836 = vld [vmem:[%s1816 + $0x18] sm:$0xff]
        %v1837 = vld [vmem:[%s1816 + $0x20] sm:$0xff]
        %v1838 = vld [vmem:[%s1816 + $0x28] sm:$0xff]
        %v1839 = vld [vmem:[%s1816 + $0x30] sm:$0xff]
        %v1840 = vld [vmem:[%s1816 + $0x38] sm:$0xff]
        %v1841 = vld [vmem:[%s1816 + $0x40] sm:$0xff]
        %v1842 = vld [vmem:[%s1816 + $0x48] sm:$0xff]
        %v1843 = vld [vmem:[%s1816 + $0x50] sm:$0xff]
        %v1844 = vld [vmem:[%s1816 + $0x58] sm:$0xff]
        %v1845 = vld [vmem:[%s1816 + $0x60] sm:$0xff]
        %v1846 = vld [vmem:[%s1816 + $0x68] sm:$0xff]
        %v1847 = vld [vmem:[%s1816 + $0x70] sm:$0xff]
        %v1848 = vld [vmem:[%s1816 + $0x78] sm:$0xff]
        %v1849 = vadd.f32 %v1833, %v1834
        %v1850 = vadd.f32 %v1849, %v1835
        %v1851 = vadd.f32 %v1850, %v1836
        %v1852 = vadd.f32 %v1851, %v1837
        %v1853 = vadd.f32 %v1852, %v1838
        %v1854 = vadd.f32 %v1853, %v1839
        %v1855 = vadd.f32 %v1854, %v1840
        %v1856 = vadd.f32 %v1855, %v1841
        %v1857 = vadd.f32 %v1856, %v1842
        %v1858 = vadd.f32 %v1857, %v1843
        %v1859 = vadd.f32 %v1858, %v1844
        %v1860 = vadd.f32 %v1859, %v1845
        %v1861 = vadd.f32 %v1860, %v1846
        %v1862 = vadd.f32 %v1861, %v1847
        %v1863 = vadd.f32 %v1862, %v1848
        %v1864 = vrot.slane %v1863, 4
        %v1865 = vadd.f32 %v1863, %v1864
        %v1866 = vrot.slane %v1865, 2
        %v1867 = vadd.f32 %v1865, %v1866
        %v1868 = vrot.slane %v1867, 1
        %v1869 = vadd.f32 %v1867, %v1868
        %v1870 = vadd.f32 %v1869, 0.0
        %v1871 = vmul.f32 %v1833, %v1833
        %v1872 = vmul.f32 %v1834, %v1834
        %v1873 = vmul.f32 %v1835, %v1835
        %v1874 = vmul.f32 %v1836, %v1836
        %v1875 = vmul.f32 %v1837, %v1837
        %v1876 = vmul.f32 %v1838, %v1838
        %v1877 = vmul.f32 %v1839, %v1839
        %v1878 = vmul.f32 %v1840, %v1840
        %v1879 = vmul.f32 %v1841, %v1841
        %v1880 = vmul.f32 %v1842, %v1842
        %v1881 = vmul.f32 %v1843, %v1843
        %v1882 = vmul.f32 %v1844, %v1844
        %v1883 = vmul.f32 %v1845, %v1845
        %v1884 = vmul.f32 %v1846, %v1846
        %v1885 = vmul.f32 %v1847, %v1847
        %v1886 = vmul.f32 %v1848, %v1848
        %v1887 = vadd.f32 %v1871, %v1872
        %v1888 = vadd.f32 %v1887, %v1873
        %v1889 = vadd.f32 %v1888, %v1874
        %v1890 = vadd.f32 %v1889, %v1875
        %v1891 = vadd.f32 %v1890, %v1876
        %v1892 = vadd.f32 %v1891, %v1877
        %v1893 = vadd.f32 %v1892, %v1878
        %v1894 = vadd.f32 %v1893, %v1879
        %v1895 = vadd.f32 %v1894, %v1880
        %v1896 = vadd.f32 %v1895, %v1881
        %v1897 = vadd.f32 %v1896, %v1882
        %v1898 = vadd.f32 %v1897, %v1883
        %v1899 = vadd.f32 %v1898, %v1884
        %v1900 = vadd.f32 %v1899, %v1885
        %v1901 = vadd.f32 %v1900, %v1886
        %v1902 = vrot.slane %v1901, 4
        %v1903 = vadd.f32 %v1901, %v1902
        %v1904 = vrot.slane %v1903, 2
        %v1905 = vadd.f32 %v1903, %v1904
        %v1906 = vrot.slane %v1905, 1
        %v1907 = vadd.f32 %v1905, %v1906
        %v1908 = vadd.f32 %v1907, 0.0
        %v1909 = vld [vmem:[#allocation3] sm:$0x1]
        %v1910 = vadd.f32 %v1909, %v1870
        %1911 = vst [vmem:[#allocation3] sm:$0x1] %v1910
        %v1912 = vld [vmem:[#allocation4] sm:$0x1]
        %v1913 = vadd.f32 %v1912, %v1908
        %1914 = vst [vmem:[#allocation4] sm:$0x1] %v1913
      $region40: #{bottleneck_forward.5} parent=35 // pred_fallthru
        _
      %p1915 = scmp.eq.s32.totalorder %s21, 1
      // Predicated region
      $region45: #{bottleneck_forward.5} parent=35 // pred_check
        %p1916 = pneg %p1915
      $region46: #{bottleneck_forward.5} parent=35 // pred_check_branch
        %1918 = sbr.rel (%p1916) target = $region48
      $region47: #{bottleneck_forward.5} parent=35 // pred_region
        %p1919 = scmp.eq.s32.totalorder %s22, 0
        // Predicated region
        $region49: #{bottleneck_forward.5} parent=47 // pred_check
          %p1920 = pneg %p1919
        $region50: #{bottleneck_forward.5} parent=47 // pred_check_branch
          %1922 = sbr.rel (%p1920) target = $region52
        $region51: #{bottleneck_forward.5} parent=47 // pred_region
          %v1923 = vld [vmem:[#allocation3] sm:$0x1]
          %v1924 = vmul.f32 %v1923, 0.0078125
          %v1925 = vld [vmem:[#allocation4] sm:$0x1]
          %v1926 = vmul.f32 %v1925, 0.0078125
          %v1927 = vmul.f32 %v1924, %v1924
          %v1928 = vsub.f32 %v1926, %v1927
          %v1929 = vmax.f32 %v1928, 0.0
          %v1930 = vld [vmem:[%s280] sm:$0x1]
          %v1931 = vadd.f32 %v1929, 1e-05
          %v1932 = vrsqrt.pop %v1931
          %v1933 = vmul.f32 %v1930, %v1932
          %1934 = vst [vmem:[#allocation5] sm:$0x1] %v1933
          %v1935 = vld [vmem:[%s283] sm:$0x1]
          %v1936 = vmul.f32 %v1924, %v1933
          %v1937 = vsub.f32 %v1935, %v1936
          %1938 = vst [vmem:[#allocation6] sm:$0x1] %v1937
        $region52: #{bottleneck_forward.5} parent=47 // pred_fallthru
          _
        %s1939 = smul.u32 %s22, 128
        %s1940 = scalar_lea.vmem [#allocation2], %s1939
        %v1941 = vld [vmem:[%s1940] sm:$0xff]
        %v1942 = vld [vmem:[%s1940 + $0x8] sm:$0xff]
        %v1943 = vld [vmem:[%s1940 + $0x10] sm:$0xff]
        %v1944 = vld [vmem:[%s1940 + $0x18] sm:$0xff]
        %v1945 = vld [vmem:[%s1940 + $0x20] sm:$0xff]
        %v1946 = vld [vmem:[%s1940 + $0x28] sm:$0xff]
        %v1947 = vld [vmem:[%s1940 + $0x30] sm:$0xff]
        %v1948 = vld [vmem:[%s1940 + $0x38] sm:$0xff]
        %v1949 = vld [vmem:[%s1940 + $0x40] sm:$0xff]
        %v1950 = vld [vmem:[%s1940 + $0x48] sm:$0xff]
        %v1951 = vld [vmem:[%s1940 + $0x50] sm:$0xff]
        %v1952 = vld [vmem:[%s1940 + $0x58] sm:$0xff]
        %v1953 = vld [vmem:[%s1940 + $0x60] sm:$0xff]
        %v1954 = vld [vmem:[%s1940 + $0x68] sm:$0xff]
        %v1955 = vld [vmem:[%s1940 + $0x70] sm:$0xff]
        %v1956 = vld [vmem:[%s1940 + $0x78] sm:$0xff]
        %v1957 = vld [vmem:[#allocation5] sm:$0x1]
        %v1959 = vlaneseq
        %v1960 = vshrl.u32 %v1959, 7
        %v1961 = vsub.s32 0, %v1960
        %v1962 = vrot.slane %v1957, %v1961
        %v1964 = vmul.f32 %v1941, %v1962
        %v1965 = vmul.f32 %v1942, %v1962
        %v1966 = vmul.f32 %v1943, %v1962
        %v1967 = vmul.f32 %v1944, %v1962
        %v1968 = vmul.f32 %v1945, %v1962
        %v1969 = vmul.f32 %v1946, %v1962
        %v1970 = vmul.f32 %v1947, %v1962
        %v1971 = vmul.f32 %v1948, %v1962
        %v1972 = vmul.f32 %v1949, %v1962
        %v1973 = vmul.f32 %v1950, %v1962
        %v1974 = vmul.f32 %v1951, %v1962
        %v1975 = vmul.f32 %v1952, %v1962
        %v1976 = vmul.f32 %v1953, %v1962
        %v1977 = vmul.f32 %v1954, %v1962
        %v1978 = vmul.f32 %v1955, %v1962
        %v1979 = vmul.f32 %v1956, %v1962
        %v1980 = vld [vmem:[#allocation6] sm:$0x1]
        %v1982 = vlaneseq
        %v1983 = vshrl.u32 %v1982, 7
        %v1984 = vsub.s32 0, %v1983
        %v1985 = vrot.slane %v1980, %v1984
        %v1987 = vadd.f32 %v1964, %v1985
        %v1988 = vadd.f32 %v1965, %v1985
        %v1989 = vadd.f32 %v1966, %v1985
        %v1990 = vadd.f32 %v1967, %v1985
        %v1991 = vadd.f32 %v1968, %v1985
        %v1992 = vadd.f32 %v1969, %v1985
        %v1993 = vadd.f32 %v1970, %v1985
        %v1994 = vadd.f32 %v1971, %v1985
        %v1995 = vadd.f32 %v1972, %v1985
        %v1996 = vadd.f32 %v1973, %v1985
        %v1997 = vadd.f32 %v1974, %v1985
        %v1998 = vadd.f32 %v1975, %v1985
        %v1999 = vadd.f32 %v1976, %v1985
        %v2000 = vadd.f32 %v1977, %v1985
        %v2001 = vadd.f32 %v1978, %v1985
        %v2002 = vadd.f32 %v1979, %v1985
        %v2003 = vmax.f32 %v1987, 0.0
        %v2004 = vmax.f32 %v1988, 0.0
        %v2005 = vmax.f32 %v1989, 0.0
        %v2006 = vmax.f32 %v1990, 0.0
        %v2007 = vmax.f32 %v1991, 0.0
        %v2008 = vmax.f32 %v1992, 0.0
        %v2009 = vmax.f32 %v1993, 0.0
        %v2010 = vmax.f32 %v1994, 0.0
        %v2011 = vmax.f32 %v1995, 0.0
        %v2012 = vmax.f32 %v1996, 0.0
        %v2013 = vmax.f32 %v1997, 0.0
        %v2014 = vmax.f32 %v1998, 0.0
        %v2015 = vmax.f32 %v1999, 0.0
        %v2016 = vmax.f32 %v2000, 0.0
        %v2017 = vmax.f32 %v2001, 0.0
        %v2018 = vmax.f32 %v2002, 0.0
        %v2019 = vpack.c.bf16 %v2004, %v2003
        %v2020 = vpack.c.bf16 %v2006, %v2005
        %v2021 = vpack.c.bf16 %v2008, %v2007
        %v2022 = vpack.c.bf16 %v2010, %v2009
        %v2023 = vpack.c.bf16 %v2012, %v2011
        %v2024 = vpack.c.bf16 %v2014, %v2013
        %v2025 = vpack.c.bf16 %v2016, %v2015
        %v2026 = vpack.c.bf16 %v2018, %v2017
        %v2035 = vunpack.c.l.b16 %v2019
        %v2036 = vunpack.c.h.b16 %v2019
        %v2037 = vunpack.c.l.b16 %v2020
        %v2038 = vunpack.c.h.b16 %v2020
        %v2039 = vunpack.c.l.b16 %v2021
        %v2040 = vunpack.c.h.b16 %v2021
        %v2041 = vunpack.c.l.b16 %v2022
        %v2042 = vunpack.c.h.b16 %v2022
        %v2043 = vunpack.c.l.b16 %v2023
        %v2044 = vunpack.c.h.b16 %v2023
        %v2045 = vunpack.c.l.b16 %v2024
        %v2046 = vunpack.c.h.b16 %v2024
        %v2047 = vunpack.c.l.b16 %v2025
        %v2048 = vunpack.c.h.b16 %v2025
        %v2049 = vunpack.c.l.b16 %v2026
        %v2050 = vunpack.c.h.b16 %v2026
        %v2051 = vpack.c.b16 %v2035, %v2035
        %v2052 = vpack.c.b16 %v2036, %v2036
        %v2053 = vpack.c.b16 %v2037, %v2037
        %v2054 = vpack.c.b16 %v2038, %v2038
        %v2055 = vpack.c.b16 %v2039, %v2039
        %v2056 = vpack.c.b16 %v2040, %v2040
        %v2057 = vpack.c.b16 %v2041, %v2041
        %v2058 = vpack.c.b16 %v2042, %v2042
        %v2059 = vpack.c.b16 %v2043, %v2043
        %v2060 = vpack.c.b16 %v2044, %v2044
        %v2061 = vpack.c.b16 %v2045, %v2045
        %v2062 = vpack.c.b16 %v2046, %v2046
        %v2063 = vpack.c.b16 %v2047, %v2047
        %v2064 = vpack.c.b16 %v2048, %v2048
        %v2065 = vpack.c.b16 %v2049, %v2049
        %v2066 = vpack.c.b16 %v2050, %v2050
        %2083 = vst [vmem:[%s292] sm:$0xf] %v2051
        %2084 = vst [vmem:[%s292 + $0x4] sm:$0xf] %v2052
        %2085 = vst [vmem:[%s292 + $0x8] sm:$0xf] %v2053
        %2086 = vst [vmem:[%s292 + $0xc] sm:$0xf] %v2054
        %2087 = vst [vmem:[%s292 + $0x10] sm:$0xf] %v2055
        %2088 = vst [vmem:[%s292 + $0x14] sm:$0xf] %v2056
        %2089 = vst [vmem:[%s292 + $0x18] sm:$0xf] %v2057
        %2090 = vst [vmem:[%s292 + $0x1c] sm:$0xf] %v2058
        %2091 = vst [vmem:[%s292 + $0x20] sm:$0xf] %v2059
        %2092 = vst [vmem:[%s292 + $0x24] sm:$0xf] %v2060
        %2093 = vst [vmem:[%s292 + $0x28] sm:$0xf] %v2061
        %2094 = vst [vmem:[%s292 + $0x2c] sm:$0xf] %v2062
        %2095 = vst [vmem:[%s292 + $0x30] sm:$0xf] %v2063
        %2096 = vst [vmem:[%s292 + $0x34] sm:$0xf] %v2064
        %2097 = vst [vmem:[%s292 + $0x38] sm:$0xf] %v2065
        %2098 = vst [vmem:[%s292 + $0x3c] sm:$0xf] %v2066
      $region48: #{bottleneck_forward.5} parent=35 // pred_fallthru
        _
      %s2099 = smul.u32 %s22, %s21
      %s2100 = smul.u32 16, %s2099
      %p2101 = scmp.lt.s32.totalorder %s2100, 15
      %s2102 = scalar_select %p2101, %s2100, 15
      %p2103 = scmp.lt.s32.totalorder %s20, 0
      %s2104 = scalar_select %p2103, %s20, 0
      %s2105 = sadd.s32 %s2104, %s2102
      %s2106 = smul.addr %s2105, 4
      %s2107 = scalar_lea.vmem %s4, %s2106
      // Predicated region
      $region53: #{bottleneck_forward.5} parent=35 // pred_check
        %p2108 = pneg %p164
      $region54: #{bottleneck_forward.5} parent=35 // pred_check_branch
        %2110 = sbr.rel (%p2108) target = $region56
      $region55: #{bottleneck_forward.5} parent=35 // pred_region
        %s2111 = smul.u32 %s22, %s21
        %s2112 = smul.u32 16, %s2111
      $region56: #{bottleneck_forward.5} parent=35 // pred_fallthru
        _
    $region36: #{bottleneck_forward.5} parent=5 // pred_fallthru
      _
    %p2113 = scmp.le.s32.totalorder 2, %s10
    // Predicated region
    $region57: #{bottleneck_forward.5} parent=5 // pred_check
      %p2114 = pneg %p2113
    $region58: #{bottleneck_forward.5} parent=5 // pred_check_branch
      %2116 = sbr.rel (%p2114) target = $region60
    $region59: #{bottleneck_forward.5} parent=5 // pred_region
      %s2117 = ssub.s32 %s10, 2
      // Predicated region
      $region61: #{bottleneck_forward.5} parent=59 // pred_check
        %p2118 = pneg %p170
      $region62: #{bottleneck_forward.5} parent=59 // pred_check_branch
        %2120 = sbr.rel (%p2118) target = $region64
      $region63: #{bottleneck_forward.5} parent=59 // pred_region
        %s2121 = smul.u32 %s25, %s24
        %s2122 = smul.u32 16, %s2121
        %p2123 = scmp.lt.s32.totalorder %s2122, 15
        %s2124 = scalar_select %p2123, %s2122, 15
        %p2125 = scmp.lt.s32.totalorder %s23, 0
        %s2126 = scalar_select %p2125, %s23, 0
        %s2127 = sadd.s32 %s2126, %s2124
        %s2128 = smul.addr %s2127, 4
        %s2129 = scalar_lea.vmem %s4, %s2128
      $region64: #{bottleneck_forward.5} parent=59 // pred_fallthru
        _
    $region60: #{bottleneck_forward.5} parent=5 // pred_fallthru
      _
  $region6: #{bottleneck_forward.5} parent=0 // loop_footer
    %s14 = sadd.s32 1, %s10
  $region7: #{bottleneck_forward.5} parent=0 // loop_footer_branch
    %9 = sbr.rel target = $region3
  $region8: #{bottleneck_forward.5} parent=0 // loop_exit
    _

</llo_original>
